<compile_context>
chip_gen: v7x
topology: tpu7x:2x2x1
jax: 0.10.0
libtpu: 0.0.40
codegen_flags: <defaults>
</compile_context>

<pallas_src>
import jax
import jax.numpy as jnp
from jax.experimental import pallas as pl
from jax.experimental.pallas import tpu as pltpu

PAD = 8  # left/right column padding of the phase-plane scratch: >=1 is needed for the
         # +/-1 column taps; 8 keeps the big interior stores sublane-aligned (the +/-1
         # reads become cheap shifted loads).


def _tap(p, a):
    """3x3-conv tap a (0..2) landing on output phase p (0/1) of a x2-upsampled grid
    reads source phase (p+a-1) % 2 at phase-plane offset (p+a-1) // 2 (in {-1,0,+1})."""
    q = p + a - 1
    return q % 2, q // 2


# The 9 spatial offsets a 3x3 conv needs in the phase domain; k = (oh+1)*3 + (ow+1).
_OFFS = tuple((oh, ow) for oh in (-1, 0, 1) for ow in (-1, 0, 1))


def make_up4_kernel(NB, H, W, mxu_dtype):
    HW = H * W
    M = NB * HW
    f32 = jnp.float32

    def kernel(x_ref, w1_ref, b1_ref, w2_ref, b2_ref, w4_ref, b4_ref,
               o_ref, y1p, y2p):
        # ---- zero ONLY the halo cells the shifted reads touch (the interior is fully
        #      overwritten every grid step, so no full-scratch zeroing). ----
        zcol = jnp.zeros((NB, H + 2, 1, 64), f32)
        zrow = jnp.zeros((NB, 1, W, 64), f32)
        for ref in (y1p, y2p):
            ref[:, :, PAD - 1:PAD, :] = zcol             # left halo column
            ref[:, :, PAD + W:PAD + W + 1, :] = zcol     # right halo column
            ref[:, 0:1, PAD:PAD + W, :] = zrow           # top halo row
            ref[:, H + 1:H + 2, PAD:PAD + W, :] = zrow   # bottom halo row

        # ---- stage 1: ConvTranspose2d(16,16,k=2,s=2) == ONE (M,16)x(16,64) matmul
        #      with the 4 deconv phases packed on the lane axis (lane = t*16 + cout). ----
        x2d = x_ref[...].reshape(M, 16).astype(mxu_dtype)
        y1 = jnp.dot(x2d, w1_ref[...], preferred_element_type=f32) + b1_ref[0]
        y1p[:, 1:1 + H, PAD:PAD + W, :] = y1.reshape(NB, H, W, 64)

        # ---- stage 2: Conv2d(16,16,3x3,p=1) + ReLU on the upsampled grid:
        #      9 accumulated (M,64)x(64,64) phase-packed matmuls (no im2col concat). ----
        acc = None
        for k, (oh, ow) in enumerate(_OFFS):
            v = y1p[:, 1 + oh:1 + oh + H, PAD + ow:PAD + ow + W, :]
            v = v.reshape(M, 64).astype(mxu_dtype)
            term = jnp.dot(v, w2_ref[k], preferred_element_type=f32)
            acc = term if acc is None else acc + term
        y2 = jnp.maximum(acc + b2_ref[0], 0.0)
        y2p[:, 1:1 + H, PAD:PAD + W, :] = y2.reshape(NB, H, W, 64)

        # ---- stage 3: Conv2d(16,1,3x3,p=1) + ReLU on the VPU over the 64-wide packed
        #      layout (4x denser VALU than per-phase 16-lane maths), one lane reduce per
        #      output phase; output rows stored lane-dense (HW lanes). ----
        b4 = b4_ref[0, 0]
        acc3 = [None, None, None, None]
        for k, (oh, ow) in enumerate(_OFFS):
            v = y2p[:, 1 + oh:1 + oh + H, PAD + ow:PAD + ow + W, :].reshape(M, 64)
            for t in range(4):
                term = v * w4_ref[t, k]
                acc3[t] = term if acc3[t] is None else acc3[t] + term
        for t in range(4):
            out2d = jnp.sum(acc3[t].reshape(NB, HW, 64), axis=-1) + b4
            o_ref[:, t, :] = jnp.maximum(out2d, 0.0)

    return kernel


def pack_up4_params(params, mxu_dtype=jnp.float32):
    """Pack PyTorch-layout Up4 parameters into phase-packed kernel operands."""
    w1, b1, w2, b2, w4, b4 = params
    f32 = jnp.float32

    # Deconv: (cin, cout, ki, kj) -> (cin, (ki*2+kj)*16 + cout).
    w1p = jnp.transpose(w1, (0, 2, 3, 1)).reshape(16, 64).astype(mxu_dtype)
    b1t = jnp.tile(b1, 4).reshape(1, 64).astype(f32)

    # 3x3 convs as per-spatial-offset block weights mapping packed source phase/channel
    # lanes to packed output phase/channel lanes (zero blocks where the tap does not hit).
    w2big = jnp.zeros((9, 64, 64), f32)
    w4vec = jnp.zeros((4, 9, 64), f32)
    for pr in (0, 1):
        for ps in (0, 1):
            dst = pr * 2 + ps
            for a in range(3):
                ph, oh = _tap(pr, a)
                for b in range(3):
                    pw, ow = _tap(ps, b)
                    src = ph * 2 + pw
                    k = (oh + 1) * 3 + (ow + 1)
                    w2big = w2big.at[k, src * 16:src * 16 + 16,
                                     dst * 16:dst * 16 + 16].set(
                        jnp.transpose(w2[:, :, a, b]))          # (cin, cout)
                    w4vec = w4vec.at[dst, k, src * 16:src * 16 + 16].set(
                        w4[0, :, a, b])
    b2t = jnp.tile(b2, 4).reshape(1, 64).astype(f32)
    b4m = b4.reshape(1, 1).astype(f32)
    return w1p, b1t, w2big.astype(mxu_dtype), b2t, w4vec, b4m


def up4_forward(x_nchw, params, *, images_per_block=None, mxu_dtype=jnp.float32):
    """Fused Up4 forward: (N, 16, H, W) -> (N, 1, 2H, 2W)."""
    N, C, H, W = x_nchw.shape
    assert C == 16, x_nchw.shape
    HW = H * W
    NB = N if images_per_block is None else images_per_block
    assert N % NB == 0, (N, NB)
    WP = W + 2 * PAD

    w1p, b1t, w2big, b2t, w4vec, b4m = pack_up4_params(params, mxu_dtype)

    # NCHW -> (N, H*W, 16): channels on the lane axis for the stage-1 matmul.
    x_flat = jnp.transpose(x_nchw, (0, 2, 3, 1)).reshape(N, HW, 16)

    # TODO(synk): for production resolutions add a row-band grid axis (1-row phase-plane
    # halo) and size bands so scratch + double-buffered I/O stays under the scoped VMEM
    # budget (halve the band on v7x's 64 MiB VMEM); full-image blocks are fine here.
    out_ph = pl.pallas_call(
        make_up4_kernel(NB, H, W, mxu_dtype),
        out_shape=jax.ShapeDtypeStruct((N, 4, HW), jnp.float32),
        grid=(N // NB,),
        in_specs=[
            pl.BlockSpec((NB, HW, 16), lambda g: (g, 0, 0)),
            pl.BlockSpec((16, 64), lambda g: (0, 0)),
            pl.BlockSpec((1, 64), lambda g: (0, 0)),
            pl.BlockSpec((9, 64, 64), lambda g: (0, 0, 0)),
            pl.BlockSpec((1, 64), lambda g: (0, 0)),
            pl.BlockSpec((4, 9, 64), lambda g: (0, 0, 0)),
            pl.BlockSpec((1, 1), lambda g: (0, 0)),
        ],
        out_specs=pl.BlockSpec((NB, 4, HW), lambda g: (g, 0, 0)),
        scratch_shapes=[
            pltpu.VMEM((NB, H + 2, WP, 64), jnp.float32),  # deconv phase planes
            pltpu.VMEM((NB, H + 2, WP, 64), jnp.float32),  # conv2+ReLU phase planes
        ],
        compiler_params=pltpu.CompilerParams(
            dimension_semantics=("parallel",)),
    )(x_flat, w1p, b1t, w2big, b2t, w4vec, b4m)

    # Interleave the 2x2 output phases of the C=1 result (smallest tensor, one cheap
    # XLA pass) and emit NCHW directly.
    out = out_ph.reshape(N, 2, 2, H, W)
    out = jnp.transpose(out, (0, 3, 1, 4, 2)).reshape(N, 1, 2 * H, 2 * W)
    return out


# ---------------------------------------------------------------------------
# Pure-JAX reference (lax convolutions) for correctness check
# ---------------------------------------------------------------------------
def up4_reference(x_nchw, params):
    w1, b1, w2, b2, w4, b4 = params
    dn = ('NCHW', 'OIHW', 'NCHW')
    # ConvTranspose2d(k=2, s=2, p=0) == conv with lhs_dilation=2, flipped kernel,
    # padding k-1 = 1, weight (Cin,Cout,kh,kw) -> (Cout,Cin,kh,kw).
    rhs = jnp.transpose(w1, (1, 0, 2, 3))[:, :, ::-1, ::-1]
    y = jax.lax.conv_general_dilated(
        x_nchw, rhs, window_strides=(1, 1), padding=((1, 1), (1, 1)),
        lhs_dilation=(2, 2), dimension_numbers=dn)
    y = y + b1[None, :, None, None]
    y = jax.lax.conv_general_dilated(
        y, w2, (1, 1), ((1, 1), (1, 1)), dimension_numbers=dn)
    y = jnp.maximum(y + b2[None, :, None, None], 0.0)
    y = jax.lax.conv_general_dilated(
        y, w4, (1, 1), ((1, 1), (1, 1)), dimension_numbers=dn)
    y = jnp.maximum(y + b4[None, :, None, None], 0.0)
    return y


if __name__ == "__main__":
    key = jax.random.PRNGKey(0)
    ks = jax.random.split(key, 7)

    # Deterministic synthetic parameters (PyTorch layouts).
    w1 = 0.1 * jax.random.normal(ks[0], (16, 16, 2, 2), jnp.float32)  # ConvTranspose2d
    b1 = 0.1 * jax.random.normal(ks[1], (16,), jnp.float32)
    w2 = 0.1 * jax.random.normal(ks[2], (16, 16, 3, 3), jnp.float32)  # Conv2d 16->16
    b2 = 0.1 * jax.random.normal(ks[3], (16,), jnp.float32)
    w4 = 0.1 * jax.random.normal(ks[4], (1, 16, 3, 3), jnp.float32)   # Conv2d 16->1
    b4 = 0.1 * jax.random.normal(ks[5], (1,), jnp.float32)
    params = (w1, b1, w2, b2, w4, b4)

    # Small NCHW input: batch=2, channels=16 (required by l1), spatial 8x8.
    x = jax.random.normal(ks[6], (2, 16, 8, 8), jnp.float32)

    # Validation build stays f32; on v6e/v7x pass mxu_dtype=jnp.bfloat16 (and relax the
    # tolerance) for native-rate MXU matmuls.
    out = jax.block_until_ready(up4_forward(x, params))
    ref = jax.block_until_ready(up4_reference(x, params))

    assert out.shape == (2, 1, 16, 16), out.shape
    assert jnp.allclose(out, ref, rtol=1e-4, atol=1e-4), \
        float(jnp.max(jnp.abs(out - ref)))

    print("KERNEL_OK")
</pallas_src>

<mosaic_0001>
module attributes {stable_mosaic.version = 11 : i64} {
  func.func @kernel(%arg0: i32, %arg1: memref<2x64x16xf32, #tpu.memory_space<vmem>>, %arg2: memref<16x64xf32, #tpu.memory_space<vmem>>, %arg3: memref<1x64xf32, #tpu.memory_space<vmem>>, %arg4: memref<9x64x64xf32, #tpu.memory_space<vmem>>, %arg5: memref<1x64xf32, #tpu.memory_space<vmem>>, %arg6: memref<4x9x64xf32, #tpu.memory_space<vmem>>, %arg7: memref<1x1xf32, #tpu.memory_space<vmem>>, %arg8: memref<2x4x64xf32, #tpu.memory_space<vmem>>, %arg9: memref<2x10x24x64xf32, #tpu.memory_space<vmem>>, %arg10: memref<2x10x24x64xf32, #tpu.memory_space<vmem>>) attributes {dimension_semantics = [#tpu.dimension_semantics<parallel>], iteration_bounds = array<i64: 1>, scalar_prefetch = 0 : i64, scratch_operands = 2 : i64, tpu.core_type = #tpu.core_type<tc>, window_params = [{transform_indices = @transform_0, window_bounds = array<i64: 2, 64, 16>}, {pipeline_mode = #tpu.pipeline_mode<synchronous>, transform_indices = @transform_1, window_bounds = array<i64: 16, 64>}, {pipeline_mode = #tpu.pipeline_mode<synchronous>, transform_indices = @transform_2, window_bounds = array<i64: 1, 64>}, {pipeline_mode = #tpu.pipeline_mode<synchronous>, transform_indices = @transform_3, window_bounds = array<i64: 9, 64, 64>}, {pipeline_mode = #tpu.pipeline_mode<synchronous>, transform_indices = @transform_4, window_bounds = array<i64: 1, 64>}, {pipeline_mode = #tpu.pipeline_mode<synchronous>, transform_indices = @transform_5, window_bounds = array<i64: 4, 9, 64>}, {pipeline_mode = #tpu.pipeline_mode<synchronous>, transform_indices = @transform_6, window_bounds = array<i64: 1, 1>}, {transform_indices = @transform_7, window_bounds = array<i64: 2, 4, 64>}]} {
    %cst = arith.constant 0.000000e+00 : f32
    %0 = vector.broadcast %cst : f32 to vector<2x10x1x64xf32>
    %cst_0 = arith.constant 0.000000e+00 : f32
    %1 = vector.broadcast %cst_0 : f32 to vector<2x1x8x64xf32>
    %c0 = arith.constant 0 : index
    %c0_1 = arith.constant 0 : index
    %c7 = arith.constant 7 : index
    %c0_2 = arith.constant 0 : index
    %2 = vector.load %arg9[%c0, %c0_1, %c7, %c0_2] : memref<2x10x24x64xf32, #tpu.memory_space<vmem>>, vector<2x10x1x64xf32>
    tpu.vector_store %arg9[%c0, %c0_1, %c7, %c0_2], %0 {strides = array<i32>} : memref<2x10x24x64xf32, #tpu.memory_space<vmem>>, vector<2x10x1x64xf32>,
    %c0_3 = arith.constant 0 : index
    %c0_4 = arith.constant 0 : index
    %c16 = arith.constant 16 : index
    %c0_5 = arith.constant 0 : index
    %3 = vector.load %arg9[%c0_3, %c0_4, %c16, %c0_5] : memref<2x10x24x64xf32, #tpu.memory_space<vmem>>, vector<2x10x1x64xf32>
    tpu.vector_store %arg9[%c0_3, %c0_4, %c16, %c0_5], %0 {strides = array<i32>} : memref<2x10x24x64xf32, #tpu.memory_space<vmem>>, vector<2x10x1x64xf32>,
    %c0_6 = arith.constant 0 : index
    %c0_7 = arith.constant 0 : index
    %c8 = arith.constant 8 : index
    %c0_8 = arith.constant 0 : index
    %4 = vector.load %arg9[%c0_6, %c0_7, %c8, %c0_8] : memref<2x10x24x64xf32, #tpu.memory_space<vmem>>, vector<2x1x8x64xf32>
    tpu.vector_store %arg9[%c0_6, %c0_7, %c8, %c0_8], %1 {strides = array<i32>} : memref<2x10x24x64xf32, #tpu.memory_space<vmem>>, vector<2x1x8x64xf32>,
    %c0_9 = arith.constant 0 : index
    %c9 = arith.constant 9 : index
    %c8_10 = arith.constant 8 : index
    %c0_11 = arith.constant 0 : index
    %5 = vector.load %arg9[%c0_9, %c9, %c8_10, %c0_11] : memref<2x10x24x64xf32, #tpu.memory_space<vmem>>, vector<2x1x8x64xf32>
    tpu.vector_store %arg9[%c0_9, %c9, %c8_10, %c0_11], %1 {strides = array<i32>} : memref<2x10x24x64xf32, #tpu.memory_space<vmem>>, vector<2x1x8x64xf32>,
    %c0_12 = arith.constant 0 : index
    %c0_13 = arith.constant 0 : index
    %c7_14 = arith.constant 7 : index
    %c0_15 = arith.constant 0 : index
    %6 = vector.load %arg10[%c0_12, %c0_13, %c7_14, %c0_15] : memref<2x10x24x64xf32, #tpu.memory_space<vmem>>, vector<2x10x1x64xf32>
    tpu.vector_store %arg10[%c0_12, %c0_13, %c7_14, %c0_15], %0 {strides = array<i32>} : memref<2x10x24x64xf32, #tpu.memory_space<vmem>>, vector<2x10x1x64xf32>,
    %c0_16 = arith.constant 0 : index
    %c0_17 = arith.constant 0 : index
    %c16_18 = arith.constant 16 : index
    %c0_19 = arith.constant 0 : index
    %7 = vector.load %arg10[%c0_16, %c0_17, %c16_18, %c0_19] : memref<2x10x24x64xf32, #tpu.memory_space<vmem>>, vector<2x10x1x64xf32>
    tpu.vector_store %arg10[%c0_16, %c0_17, %c16_18, %c0_19], %0 {strides = array<i32>} : memref<2x10x24x64xf32, #tpu.memory_space<vmem>>, vector<2x10x1x64xf32>,
    %c0_20 = arith.constant 0 : index
    %c0_21 = arith.constant 0 : index
    %c8_22 = arith.constant 8 : index
    %c0_23 = arith.constant 0 : index
    %8 = vector.load %arg10[%c0_20, %c0_21, %c8_22, %c0_23] : memref<2x10x24x64xf32, #tpu.memory_space<vmem>>, vector<2x1x8x64xf32>
    tpu.vector_store %arg10[%c0_20, %c0_21, %c8_22, %c0_23], %1 {strides = array<i32>} : memref<2x10x24x64xf32, #tpu.memory_space<vmem>>, vector<2x1x8x64xf32>,
    %c0_24 = arith.constant 0 : index
    %c9_25 = arith.constant 9 : index
    %c8_26 = arith.constant 8 : index
    %c0_27 = arith.constant 0 : index
    %9 = vector.load %arg10[%c0_24, %c9_25, %c8_26, %c0_27] : memref<2x10x24x64xf32, #tpu.memory_space<vmem>>, vector<2x1x8x64xf32>
    tpu.vector_store %arg10[%c0_24, %c9_25, %c8_26, %c0_27], %1 {strides = array<i32>} : memref<2x10x24x64xf32, #tpu.memory_space<vmem>>, vector<2x1x8x64xf32>,
    %c0_28 = arith.constant 0 : index
    %c0_29 = arith.constant 0 : index
    %c0_30 = arith.constant 0 : index
    %10 = vector.load %arg1[%c0_28, %c0_29, %c0_30] : memref<2x64x16xf32, #tpu.memory_space<vmem>>, vector<2x64x16xf32>
    %11 = vector.shape_cast %10 : vector<2x64x16xf32> to vector<128x16xf32>
    %c0_31 = arith.constant 0 : index
    %c0_32 = arith.constant 0 : index
    %12 = vector.load %arg2[%c0_31, %c0_32] : memref<16x64xf32, #tpu.memory_space<vmem>>, vector<16x64xf32>
    %cst_33 = arith.constant dense<0.000000e+00> : vector<128x64xf32>
    %13 = tpu.matmul %11, %12, %cst_33 {dimension_numbers = #tpu.dot_dimension_numbers<[1], [0], [0], [1], [0, 0, 1, 1], [], []>} : vector<128x16xf32>, vector<16x64xf32>, vector<128x64xf32> -> vector<128x64xf32>
    %c0_34 = arith.constant 0 : index
    %c0_35 = arith.constant 0 : index
    %14 = vector.load %arg3[%c0_34, %c0_35] : memref<1x64xf32, #tpu.memory_space<vmem>>, vector<1x64xf32>
    %15 = vector.shape_cast %14 : vector<1x64xf32> to vector<64xf32>
    %16 = vector.shape_cast %15 : vector<64xf32> to vector<1x64xf32>
    %17 = vector.broadcast %16 : vector<1x64xf32> to vector<128x64xf32>
    %18 = arith.addf %13, %17 : vector<128x64xf32>
    %19 = vector.shape_cast %18 : vector<128x64xf32> to vector<2x8x8x64xf32>
    %c0_36 = arith.constant 0 : index
    %c1 = arith.constant 1 : index
    %c8_37 = arith.constant 8 : index
    %c0_38 = arith.constant 0 : index
    %20 = vector.load %arg9[%c0_36, %c1, %c8_37, %c0_38] : memref<2x10x24x64xf32, #tpu.memory_space<vmem>>, vector<2x8x8x64xf32>
    tpu.vector_store %arg9[%c0_36, %c1, %c8_37, %c0_38], %19 {strides = array<i32>} : memref<2x10x24x64xf32, #tpu.memory_space<vmem>>, vector<2x8x8x64xf32>,
    %c0_39 = arith.constant 0 : index
    %c0_40 = arith.constant 0 : index
    %c7_41 = arith.constant 7 : index
    %c0_42 = arith.constant 0 : index
    %21 = vector.load %arg9[%c0_39, %c0_40, %c7_41, %c0_42] : memref<2x10x24x64xf32, #tpu.memory_space<vmem>>, vector<2x8x8x64xf32>
    %22 = vector.shape_cast %21 : vector<2x8x8x64xf32> to vector<128x64xf32>
    %c0_43 = arith.constant 0 : index
    %c0_44 = arith.constant 0 : index
    %c0_45 = arith.constant 0 : index
    %23 = vector.load %arg4[%c0_43, %c0_44, %c0_45] : memref<9x64x64xf32, #tpu.memory_space<vmem>>, vector<1x64x64xf32>
    %24 = vector.shape_cast %23 : vector<1x64x64xf32> to vector<64x64xf32>
    %cst_46 = arith.constant dense<0.000000e+00> : vector<128x64xf32>
    %25 = tpu.matmul %22, %24, %cst_46 {dimension_numbers = #tpu.dot_dimension_numbers<[1], [0], [0], [1], [0, 0, 1, 1], [], []>} : vector<128x64xf32>, vector<64x64xf32>, vector<128x64xf32> -> vector<128x64xf32>
    %c0_47 = arith.constant 0 : index
    %c0_48 = arith.constant 0 : index
    %c8_49 = arith.constant 8 : index
    %c0_50 = arith.constant 0 : index
    %26 = vector.load %arg9[%c0_47, %c0_48, %c8_49, %c0_50] : memref<2x10x24x64xf32, #tpu.memory_space<vmem>>, vector<2x8x8x64xf32>
    %27 = vector.shape_cast %26 : vector<2x8x8x64xf32> to vector<128x64xf32>
    %c1_51 = arith.constant 1 : index
    %c0_52 = arith.constant 0 : index
    %c0_53 = arith.constant 0 : index
    %28 = vector.load %arg4[%c1_51, %c0_52, %c0_53] : memref<9x64x64xf32, #tpu.memory_space<vmem>>, vector<1x64x64xf32>
    %29 = vector.shape_cast %28 : vector<1x64x64xf32> to vector<64x64xf32>
    %cst_54 = arith.constant dense<0.000000e+00> : vector<128x64xf32>
    %30 = tpu.matmul %27, %29, %cst_54 {dimension_numbers = #tpu.dot_dimension_numbers<[1], [0], [0], [1], [0, 0, 1, 1], [], []>} : vector<128x64xf32>, vector<64x64xf32>, vector<128x64xf32> -> vector<128x64xf32>
    %31 = arith.addf %25, %30 : vector<128x64xf32>
    %c0_55 = arith.constant 0 : index
    %c0_56 = arith.constant 0 : index
    %c9_57 = arith.constant 9 : index
    %c0_58 = arith.constant 0 : index
    %32 = vector.load %arg9[%c0_55, %c0_56, %c9_57, %c0_58] : memref<2x10x24x64xf32, #tpu.memory_space<vmem>>, vector<2x8x8x64xf32>
    %33 = vector.shape_cast %32 : vector<2x8x8x64xf32> to vector<128x64xf32>
    %c2 = arith.constant 2 : index
    %c0_59 = arith.constant 0 : index
    %c0_60 = arith.constant 0 : index
    %34 = vector.load %arg4[%c2, %c0_59, %c0_60] : memref<9x64x64xf32, #tpu.memory_space<vmem>>, vector<1x64x64xf32>
    %35 = vector.shape_cast %34 : vector<1x64x64xf32> to vector<64x64xf32>
    %cst_61 = arith.constant dense<0.000000e+00> : vector<128x64xf32>
    %36 = tpu.matmul %33, %35, %cst_61 {dimension_numbers = #tpu.dot_dimension_numbers<[1], [0], [0], [1], [0, 0, 1, 1], [], []>} : vector<128x64xf32>, vector<64x64xf32>, vector<128x64xf32> -> vector<128x64xf32>
    %37 = arith.addf %31, %36 : vector<128x64xf32>
    %c0_62 = arith.constant 0 : index
    %c1_63 = arith.constant 1 : index
    %c7_64 = arith.constant 7 : index
    %c0_65 = arith.constant 0 : index
    %38 = vector.load %arg9[%c0_62, %c1_63, %c7_64, %c0_65] : memref<2x10x24x64xf32, #tpu.memory_space<vmem>>, vector<2x8x8x64xf32>
    %39 = vector.shape_cast %38 : vector<2x8x8x64xf32> to vector<128x64xf32>
    %c3 = arith.constant 3 : index
    %c0_66 = arith.constant 0 : index
    %c0_67 = arith.constant 0 : index
    %40 = vector.load %arg4[%c3, %c0_66, %c0_67] : memref<9x64x64xf32, #tpu.memory_space<vmem>>, vector<1x64x64xf32>
    %41 = vector.shape_cast %40 : vector<1x64x64xf32> to vector<64x64xf32>
    %cst_68 = arith.constant dense<0.000000e+00> : vector<128x64xf32>
    %42 = tpu.matmul %39, %41, %cst_68 {dimension_numbers = #tpu.dot_dimension_numbers<[1], [0], [0], [1], [0, 0, 1, 1], [], []>} : vector<128x64xf32>, vector<64x64xf32>, vector<128x64xf32> -> vector<128x64xf32>
    %43 = arith.addf %37, %42 : vector<128x64xf32>
    %c0_69 = arith.constant 0 : index
    %c1_70 = arith.constant 1 : index
    %c8_71 = arith.constant 8 : index
    %c0_72 = arith.constant 0 : index
    %44 = vector.load %arg9[%c0_69, %c1_70, %c8_71, %c0_72] : memref<2x10x24x64xf32, #tpu.memory_space<vmem>>, vector<2x8x8x64xf32>
    %45 = vector.shape_cast %44 : vector<2x8x8x64xf32> to vector<128x64xf32>
    %c4 = arith.constant 4 : index
    %c0_73 = arith.constant 0 : index
    %c0_74 = arith.constant 0 : index
    %46 = vector.load %arg4[%c4, %c0_73, %c0_74] : memref<9x64x64xf32, #tpu.memory_space<vmem>>, vector<1x64x64xf32>
    %47 = vector.shape_cast %46 : vector<1x64x64xf32> to vector<64x64xf32>
    %cst_75 = arith.constant dense<0.000000e+00> : vector<128x64xf32>
    %48 = tpu.matmul %45, %47, %cst_75 {dimension_numbers = #tpu.dot_dimension_numbers<[1], [0], [0], [1], [0, 0, 1, 1], [], []>} : vector<128x64xf32>, vector<64x64xf32>, vector<128x64xf32> -> vector<128x64xf32>
    %49 = arith.addf %43, %48 : vector<128x64xf32>
    %c0_76 = arith.constant 0 : index
    %c1_77 = arith.constant 1 : index
    %c9_78 = arith.constant 9 : index
    %c0_79 = arith.constant 0 : index
    %50 = vector.load %arg9[%c0_76, %c1_77, %c9_78, %c0_79] : memref<2x10x24x64xf32, #tpu.memory_space<vmem>>, vector<2x8x8x64xf32>
    %51 = vector.shape_cast %50 : vector<2x8x8x64xf32> to vector<128x64xf32>
    %c5 = arith.constant 5 : index
    %c0_80 = arith.constant 0 : index
    %c0_81 = arith.constant 0 : index
    %52 = vector.load %arg4[%c5, %c0_80, %c0_81] : memref<9x64x64xf32, #tpu.memory_space<vmem>>, vector<1x64x64xf32>
    %53 = vector.shape_cast %52 : vector<1x64x64xf32> to vector<64x64xf32>
    %cst_82 = arith.constant dense<0.000000e+00> : vector<128x64xf32>
    %54 = tpu.matmul %51, %53, %cst_82 {dimension_numbers = #tpu.dot_dimension_numbers<[1], [0], [0], [1], [0, 0, 1, 1], [], []>} : vector<128x64xf32>, vector<64x64xf32>, vector<128x64xf32> -> vector<128x64xf32>
    %55 = arith.addf %49, %54 : vector<128x64xf32>
    %c0_83 = arith.constant 0 : index
    %c2_84 = arith.constant 2 : index
    %c7_85 = arith.constant 7 : index
    %c0_86 = arith.constant 0 : index
    %56 = vector.load %arg9[%c0_83, %c2_84, %c7_85, %c0_86] : memref<2x10x24x64xf32, #tpu.memory_space<vmem>>, vector<2x8x8x64xf32>
    %57 = vector.shape_cast %56 : vector<2x8x8x64xf32> to vector<128x64xf32>
    %c6 = arith.constant 6 : index
    %c0_87 = arith.constant 0 : index
    %c0_88 = arith.constant 0 : index
    %58 = vector.load %arg4[%c6, %c0_87, %c0_88] : memref<9x64x64xf32, #tpu.memory_space<vmem>>, vector<1x64x64xf32>
    %59 = vector.shape_cast %58 : vector<1x64x64xf32> to vector<64x64xf32>
    %cst_89 = arith.constant dense<0.000000e+00> : vector<128x64xf32>
    %60 = tpu.matmul %57, %59, %cst_89 {dimension_numbers = #tpu.dot_dimension_numbers<[1], [0], [0], [1], [0, 0, 1, 1], [], []>} : vector<128x64xf32>, vector<64x64xf32>, vector<128x64xf32> -> vector<128x64xf32>
    %61 = arith.addf %55, %60 : vector<128x64xf32>
    %c0_90 = arith.constant 0 : index
    %c2_91 = arith.constant 2 : index
    %c8_92 = arith.constant 8 : index
    %c0_93 = arith.constant 0 : index
    %62 = vector.load %arg9[%c0_90, %c2_91, %c8_92, %c0_93] : memref<2x10x24x64xf32, #tpu.memory_space<vmem>>, vector<2x8x8x64xf32>
    %63 = vector.shape_cast %62 : vector<2x8x8x64xf32> to vector<128x64xf32>
    %c7_94 = arith.constant 7 : index
    %c0_95 = arith.constant 0 : index
    %c0_96 = arith.constant 0 : index
    %64 = vector.load %arg4[%c7_94, %c0_95, %c0_96] : memref<9x64x64xf32, #tpu.memory_space<vmem>>, vector<1x64x64xf32>
    %65 = vector.shape_cast %64 : vector<1x64x64xf32> to vector<64x64xf32>
    %cst_97 = arith.constant dense<0.000000e+00> : vector<128x64xf32>
    %66 = tpu.matmul %63, %65, %cst_97 {dimension_numbers = #tpu.dot_dimension_numbers<[1], [0], [0], [1], [0, 0, 1, 1], [], []>} : vector<128x64xf32>, vector<64x64xf32>, vector<128x64xf32> -> vector<128x64xf32>
    %67 = arith.addf %61, %66 : vector<128x64xf32>
    %c0_98 = arith.constant 0 : index
    %c2_99 = arith.constant 2 : index
    %c9_100 = arith.constant 9 : index
    %c0_101 = arith.constant 0 : index
    %68 = vector.load %arg9[%c0_98, %c2_99, %c9_100, %c0_101] : memref<2x10x24x64xf32, #tpu.memory_space<vmem>>, vector<2x8x8x64xf32>
    %69 = vector.shape_cast %68 : vector<2x8x8x64xf32> to vector<128x64xf32>
    %c8_102 = arith.constant 8 : index
    %c0_103 = arith.constant 0 : index
    %c0_104 = arith.constant 0 : index
    %70 = vector.load %arg4[%c8_102, %c0_103, %c0_104] : memref<9x64x64xf32, #tpu.memory_space<vmem>>, vector<1x64x64xf32>
    %71 = vector.shape_cast %70 : vector<1x64x64xf32> to vector<64x64xf32>
    %cst_105 = arith.constant dense<0.000000e+00> : vector<128x64xf32>
    %72 = tpu.matmul %69, %71, %cst_105 {dimension_numbers = #tpu.dot_dimension_numbers<[1], [0], [0], [1], [0, 0, 1, 1], [], []>} : vector<128x64xf32>, vector<64x64xf32>, vector<128x64xf32> -> vector<128x64xf32>
    %73 = arith.addf %67, %72 : vector<128x64xf32>
    %c0_106 = arith.constant 0 : index
    %c0_107 = arith.constant 0 : index
    %74 = vector.load %arg5[%c0_106, %c0_107] : memref<1x64xf32, #tpu.memory_space<vmem>>, vector<1x64xf32>
    %75 = vector.shape_cast %74 : vector<1x64xf32> to vector<64xf32>
    %76 = vector.shape_cast %75 : vector<64xf32> to vector<1x64xf32>
    %77 = vector.broadcast %76 : vector<1x64xf32> to vector<128x64xf32>
    %78 = arith.addf %73, %77 : vector<128x64xf32>
    %cst_108 = arith.constant 0.000000e+00 : f32
    %79 = vector.broadcast %cst_108 : f32 to vector<128x64xf32>
    %80 = arith.maximumf %78, %79 : vector<128x64xf32>
    %81 = vector.shape_cast %80 : vector<128x64xf32> to vector<2x8x8x64xf32>
    %c0_109 = arith.constant 0 : index
    %c1_110 = arith.constant 1 : index
    %c8_111 = arith.constant 8 : index
    %c0_112 = arith.constant 0 : index
    %82 = vector.load %arg10[%c0_109, %c1_110, %c8_111, %c0_112] : memref<2x10x24x64xf32, #tpu.memory_space<vmem>>, vector<2x8x8x64xf32>
    tpu.vector_store %arg10[%c0_109, %c1_110, %c8_111, %c0_112], %81 {strides = array<i32>} : memref<2x10x24x64xf32, #tpu.memory_space<vmem>>, vector<2x8x8x64xf32>,
    %c0_113 = arith.constant 0 : index
    %c0_114 = arith.constant 0 : index
    %83 = vector.load %arg7[%c0_113, %c0_114] : memref<1x1xf32, #tpu.memory_space<vmem>>, vector<1x1xf32>
    %84 = vector.extract %83[0, 0] : f32 from vector<1x1xf32>
    %c0_115 = arith.constant 0 : index
    %c0_116 = arith.constant 0 : index
    %c7_117 = arith.constant 7 : index
    %c0_118 = arith.constant 0 : index
    %85 = vector.load %arg10[%c0_115, %c0_116, %c7_117, %c0_118] : memref<2x10x24x64xf32, #tpu.memory_space<vmem>>, vector<2x8x8x64xf32>
    %86 = vector.shape_cast %85 : vector<2x8x8x64xf32> to vector<128x64xf32>
    %c0_119 = arith.constant 0 : index
    %c0_120 = arith.constant 0 : index
    %c0_121 = arith.constant 0 : index
    %87 = vector.load %arg6[%c0_119, %c0_120, %c0_121] : memref<4x9x64xf32, #tpu.memory_space<vmem>>, vector<1x1x64xf32>
    %88 = vector.shape_cast %87 : vector<1x1x64xf32> to vector<64xf32>
    %89 = vector.shape_cast %88 : vector<64xf32> to vector<1x64xf32>
    %90 = vector.broadcast %89 : vector<1x64xf32> to vector<128x64xf32>
    %91 = arith.mulf %86, %90 : vector<128x64xf32>
    %c1_122 = arith.constant 1 : index
    %c0_123 = arith.constant 0 : index
    %c0_124 = arith.constant 0 : index
    %92 = vector.load %arg6[%c1_122, %c0_123, %c0_124] : memref<4x9x64xf32, #tpu.memory_space<vmem>>, vector<1x1x64xf32>
    %93 = vector.shape_cast %92 : vector<1x1x64xf32> to vector<64xf32>
    %94 = vector.shape_cast %93 : vector<64xf32> to vector<1x64xf32>
    %95 = vector.broadcast %94 : vector<1x64xf32> to vector<128x64xf32>
    %96 = arith.mulf %86, %95 : vector<128x64xf32>
    %c2_125 = arith.constant 2 : index
    %c0_126 = arith.constant 0 : index
    %c0_127 = arith.constant 0 : index
    %97 = vector.load %arg6[%c2_125, %c0_126, %c0_127] : memref<4x9x64xf32, #tpu.memory_space<vmem>>, vector<1x1x64xf32>
    %98 = vector.shape_cast %97 : vector<1x1x64xf32> to vector<64xf32>
    %99 = vector.shape_cast %98 : vector<64xf32> to vector<1x64xf32>
    %100 = vector.broadcast %99 : vector<1x64xf32> to vector<128x64xf32>
    %101 = arith.mulf %86, %100 : vector<128x64xf32>
    %c3_128 = arith.constant 3 : index
    %c0_129 = arith.constant 0 : index
    %c0_130 = arith.constant 0 : index
    %102 = vector.load %arg6[%c3_128, %c0_129, %c0_130] : memref<4x9x64xf32, #tpu.memory_space<vmem>>, vector<1x1x64xf32>
    %103 = vector.shape_cast %102 : vector<1x1x64xf32> to vector<64xf32>
    %104 = vector.shape_cast %103 : vector<64xf32> to vector<1x64xf32>
    %105 = vector.broadcast %104 : vector<1x64xf32> to vector<128x64xf32>
    %106 = arith.mulf %86, %105 : vector<128x64xf32>
    %c0_131 = arith.constant 0 : index
    %c0_132 = arith.constant 0 : index
    %c8_133 = arith.constant 8 : index
    %c0_134 = arith.constant 0 : index
    %107 = vector.load %arg10[%c0_131, %c0_132, %c8_133, %c0_134] : memref<2x10x24x64xf32, #tpu.memory_space<vmem>>, vector<2x8x8x64xf32>
    %108 = vector.shape_cast %107 : vector<2x8x8x64xf32> to vector<128x64xf32>
    %c0_135 = arith.constant 0 : index
    %c1_136 = arith.constant 1 : index
    %c0_137 = arith.constant 0 : index
    %109 = vector.load %arg6[%c0_135, %c1_136, %c0_137] : memref<4x9x64xf32, #tpu.memory_space<vmem>>, vector<1x1x64xf32>
    %110 = vector.shape_cast %109 : vector<1x1x64xf32> to vector<64xf32>
    %111 = vector.shape_cast %110 : vector<64xf32> to vector<1x64xf32>
    %112 = vector.broadcast %111 : vector<1x64xf32> to vector<128x64xf32>
    %113 = arith.mulf %108, %112 : vector<128x64xf32>
    %114 = arith.addf %91, %113 : vector<128x64xf32>
    %c1_138 = arith.constant 1 : index
    %c1_139 = arith.constant 1 : index
    %c0_140 = arith.constant 0 : index
    %115 = vector.load %arg6[%c1_138, %c1_139, %c0_140] : memref<4x9x64xf32, #tpu.memory_space<vmem>>, vector<1x1x64xf32>
    %116 = vector.shape_cast %115 : vector<1x1x64xf32> to vector<64xf32>
    %117 = vector.shape_cast %116 : vector<64xf32> to vector<1x64xf32>
    %118 = vector.broadcast %117 : vector<1x64xf32> to vector<128x64xf32>
    %119 = arith.mulf %108, %118 : vector<128x64xf32>
    %120 = arith.addf %96, %119 : vector<128x64xf32>
    %c2_141 = arith.constant 2 : index
    %c1_142 = arith.constant 1 : index
    %c0_143 = arith.constant 0 : index
    %121 = vector.load %arg6[%c2_141, %c1_142, %c0_143] : memref<4x9x64xf32, #tpu.memory_space<vmem>>, vector<1x1x64xf32>
    %122 = vector.shape_cast %121 : vector<1x1x64xf32> to vector<64xf32>
    %123 = vector.shape_cast %122 : vector<64xf32> to vector<1x64xf32>
    %124 = vector.broadcast %123 : vector<1x64xf32> to vector<128x64xf32>
    %125 = arith.mulf %108, %124 : vector<128x64xf32>
    %126 = arith.addf %101, %125 : vector<128x64xf32>
    %c3_144 = arith.constant 3 : index
    %c1_145 = arith.constant 1 : index
    %c0_146 = arith.constant 0 : index
    %127 = vector.load %arg6[%c3_144, %c1_145, %c0_146] : memref<4x9x64xf32, #tpu.memory_space<vmem>>, vector<1x1x64xf32>
    %128 = vector.shape_cast %127 : vector<1x1x64xf32> to vector<64xf32>
    %129 = vector.shape_cast %128 : vector<64xf32> to vector<1x64xf32>
    %130 = vector.broadcast %129 : vector<1x64xf32> to vector<128x64xf32>
    %131 = arith.mulf %108, %130 : vector<128x64xf32>
    %132 = arith.addf %106, %131 : vector<128x64xf32>
    %c0_147 = arith.constant 0 : index
    %c0_148 = arith.constant 0 : index
    %c9_149 = arith.constant 9 : index
    %c0_150 = arith.constant 0 : index
    %133 = vector.load %arg10[%c0_147, %c0_148, %c9_149, %c0_150] : memref<2x10x24x64xf32, #tpu.memory_space<vmem>>, vector<2x8x8x64xf32>
    %134 = vector.shape_cast %133 : vector<2x8x8x64xf32> to vector<128x64xf32>
    %c0_151 = arith.constant 0 : index
    %c2_152 = arith.constant 2 : index
    %c0_153 = arith.constant 0 : index
    %135 = vector.load %arg6[%c0_151, %c2_152, %c0_153] : memref<4x9x64xf32, #tpu.memory_space<vmem>>, vector<1x1x64xf32>
    %136 = vector.shape_cast %135 : vector<1x1x64xf32> to vector<64xf32>
    %137 = vector.shape_cast %136 : vector<64xf32> to vector<1x64xf32>
    %138 = vector.broadcast %137 : vector<1x64xf32> to vector<128x64xf32>
    %139 = arith.mulf %134, %138 : vector<128x64xf32>
    %140 = arith.addf %114, %139 : vector<128x64xf32>
    %c1_154 = arith.constant 1 : index
    %c2_155 = arith.constant 2 : index
    %c0_156 = arith.constant 0 : index
    %141 = vector.load %arg6[%c1_154, %c2_155, %c0_156] : memref<4x9x64xf32, #tpu.memory_space<vmem>>, vector<1x1x64xf32>
    %142 = vector.shape_cast %141 : vector<1x1x64xf32> to vector<64xf32>
    %143 = vector.shape_cast %142 : vector<64xf32> to vector<1x64xf32>
    %144 = vector.broadcast %143 : vector<1x64xf32> to vector<128x64xf32>
    %145 = arith.mulf %134, %144 : vector<128x64xf32>
    %146 = arith.addf %120, %145 : vector<128x64xf32>
    %c2_157 = arith.constant 2 : index
    %c2_158 = arith.constant 2 : index
    %c0_159 = arith.constant 0 : index
    %147 = vector.load %arg6[%c2_157, %c2_158, %c0_159] : memref<4x9x64xf32, #tpu.memory_space<vmem>>, vector<1x1x64xf32>
    %148 = vector.shape_cast %147 : vector<1x1x64xf32> to vector<64xf32>
    %149 = vector.shape_cast %148 : vector<64xf32> to vector<1x64xf32>
    %150 = vector.broadcast %149 : vector<1x64xf32> to vector<128x64xf32>
    %151 = arith.mulf %134, %150 : vector<128x64xf32>
    %152 = arith.addf %126, %151 : vector<128x64xf32>
    %c3_160 = arith.constant 3 : index
    %c2_161 = arith.constant 2 : index
    %c0_162 = arith.constant 0 : index
    %153 = vector.load %arg6[%c3_160, %c2_161, %c0_162] : memref<4x9x64xf32, #tpu.memory_space<vmem>>, vector<1x1x64xf32>
    %154 = vector.shape_cast %153 : vector<1x1x64xf32> to vector<64xf32>
    %155 = vector.shape_cast %154 : vector<64xf32> to vector<1x64xf32>
    %156 = vector.broadcast %155 : vector<1x64xf32> to vector<128x64xf32>
    %157 = arith.mulf %134, %156 : vector<128x64xf32>
    %158 = arith.addf %132, %157 : vector<128x64xf32>
    %c0_163 = arith.constant 0 : index
    %c1_164 = arith.constant 1 : index
    %c7_165 = arith.constant 7 : index
    %c0_166 = arith.constant 0 : index
    %159 = vector.load %arg10[%c0_163, %c1_164, %c7_165, %c0_166] : memref<2x10x24x64xf32, #tpu.memory_space<vmem>>, vector<2x8x8x64xf32>
    %160 = vector.shape_cast %159 : vector<2x8x8x64xf32> to vector<128x64xf32>
    %c0_167 = arith.constant 0 : index
    %c3_168 = arith.constant 3 : index
    %c0_169 = arith.constant 0 : index
    %161 = vector.load %arg6[%c0_167, %c3_168, %c0_169] : memref<4x9x64xf32, #tpu.memory_space<vmem>>, vector<1x1x64xf32>
    %162 = vector.shape_cast %161 : vector<1x1x64xf32> to vector<64xf32>
    %163 = vector.shape_cast %162 : vector<64xf32> to vector<1x64xf32>
    %164 = vector.broadcast %163 : vector<1x64xf32> to vector<128x64xf32>
    %165 = arith.mulf %160, %164 : vector<128x64xf32>
    %166 = arith.addf %140, %165 : vector<128x64xf32>
    %c1_170 = arith.constant 1 : index
    %c3_171 = arith.constant 3 : index
    %c0_172 = arith.constant 0 : index
    %167 = vector.load %arg6[%c1_170, %c3_171, %c0_172] : memref<4x9x64xf32, #tpu.memory_space<vmem>>, vector<1x1x64xf32>
    %168 = vector.shape_cast %167 : vector<1x1x64xf32> to vector<64xf32>
    %169 = vector.shape_cast %168 : vector<64xf32> to vector<1x64xf32>
    %170 = vector.broadcast %169 : vector<1x64xf32> to vector<128x64xf32>
    %171 = arith.mulf %160, %170 : vector<128x64xf32>
    %172 = arith.addf %146, %171 : vector<128x64xf32>
    %c2_173 = arith.constant 2 : index
    %c3_174 = arith.constant 3 : index
    %c0_175 = arith.constant 0 : index
    %173 = vector.load %arg6[%c2_173, %c3_174, %c0_175] : memref<4x9x64xf32, #tpu.memory_space<vmem>>, vector<1x1x64xf32>
    %174 = vector.shape_cast %173 : vector<1x1x64xf32> to vector<64xf32>
    %175 = vector.shape_cast %174 : vector<64xf32> to vector<1x64xf32>
    %176 = vector.broadcast %175 : vector<1x64xf32> to vector<128x64xf32>
    %177 = arith.mulf %160, %176 : vector<128x64xf32>
    %178 = arith.addf %152, %177 : vector<128x64xf32>
    %c3_176 = arith.constant 3 : index
    %c3_177 = arith.constant 3 : index
    %c0_178 = arith.constant 0 : index
    %179 = vector.load %arg6[%c3_176, %c3_177, %c0_178] : memref<4x9x64xf32, #tpu.memory_space<vmem>>, vector<1x1x64xf32>
    %180 = vector.shape_cast %179 : vector<1x1x64xf32> to vector<64xf32>
    %181 = vector.shape_cast %180 : vector<64xf32> to vector<1x64xf32>
    %182 = vector.broadcast %181 : vector<1x64xf32> to vector<128x64xf32>
    %183 = arith.mulf %160, %182 : vector<128x64xf32>
    %184 = arith.addf %158, %183 : vector<128x64xf32>
    %c0_179 = arith.constant 0 : index
    %c1_180 = arith.constant 1 : index
    %c8_181 = arith.constant 8 : index
    %c0_182 = arith.constant 0 : index
    %185 = vector.load %arg10[%c0_179, %c1_180, %c8_181, %c0_182] : memref<2x10x24x64xf32, #tpu.memory_space<vmem>>, vector<2x8x8x64xf32>
    %186 = vector.shape_cast %185 : vector<2x8x8x64xf32> to vector<128x64xf32>
    %c0_183 = arith.constant 0 : index
    %c4_184 = arith.constant 4 : index
    %c0_185 = arith.constant 0 : index
    %187 = vector.load %arg6[%c0_183, %c4_184, %c0_185] : memref<4x9x64xf32, #tpu.memory_space<vmem>>, vector<1x1x64xf32>
    %188 = vector.shape_cast %187 : vector<1x1x64xf32> to vector<64xf32>
    %189 = vector.shape_cast %188 : vector<64xf32> to vector<1x64xf32>
    %190 = vector.broadcast %189 : vector<1x64xf32> to vector<128x64xf32>
    %191 = arith.mulf %186, %190 : vector<128x64xf32>
    %192 = arith.addf %166, %191 : vector<128x64xf32>
    %c1_186 = arith.constant 1 : index
    %c4_187 = arith.constant 4 : index
    %c0_188 = arith.constant 0 : index
    %193 = vector.load %arg6[%c1_186, %c4_187, %c0_188] : memref<4x9x64xf32, #tpu.memory_space<vmem>>, vector<1x1x64xf32>
    %194 = vector.shape_cast %193 : vector<1x1x64xf32> to vector<64xf32>
    %195 = vector.shape_cast %194 : vector<64xf32> to vector<1x64xf32>
    %196 = vector.broadcast %195 : vector<1x64xf32> to vector<128x64xf32>
    %197 = arith.mulf %186, %196 : vector<128x64xf32>
    %198 = arith.addf %172, %197 : vector<128x64xf32>
    %c2_189 = arith.constant 2 : index
    %c4_190 = arith.constant 4 : index
    %c0_191 = arith.constant 0 : index
    %199 = vector.load %arg6[%c2_189, %c4_190, %c0_191] : memref<4x9x64xf32, #tpu.memory_space<vmem>>, vector<1x1x64xf32>
    %200 = vector.shape_cast %199 : vector<1x1x64xf32> to vector<64xf32>
    %201 = vector.shape_cast %200 : vector<64xf32> to vector<1x64xf32>
    %202 = vector.broadcast %201 : vector<1x64xf32> to vector<128x64xf32>
    %203 = arith.mulf %186, %202 : vector<128x64xf32>
    %204 = arith.addf %178, %203 : vector<128x64xf32>
    %c3_192 = arith.constant 3 : index
    %c4_193 = arith.constant 4 : index
    %c0_194 = arith.constant 0 : index
    %205 = vector.load %arg6[%c3_192, %c4_193, %c0_194] : memref<4x9x64xf32, #tpu.memory_space<vmem>>, vector<1x1x64xf32>
    %206 = vector.shape_cast %205 : vector<1x1x64xf32> to vector<64xf32>
    %207 = vector.shape_cast %206 : vector<64xf32> to vector<1x64xf32>
    %208 = vector.broadcast %207 : vector<1x64xf32> to vector<128x64xf32>
    %209 = arith.mulf %186, %208 : vector<128x64xf32>
    %210 = arith.addf %184, %209 : vector<128x64xf32>
    %c0_195 = arith.constant 0 : index
    %c1_196 = arith.constant 1 : index
    %c9_197 = arith.constant 9 : index
    %c0_198 = arith.constant 0 : index
    %211 = vector.load %arg10[%c0_195, %c1_196, %c9_197, %c0_198] : memref<2x10x24x64xf32, #tpu.memory_space<vmem>>, vector<2x8x8x64xf32>
    %212 = vector.shape_cast %211 : vector<2x8x8x64xf32> to vector<128x64xf32>
    %c0_199 = arith.constant 0 : index
    %c5_200 = arith.constant 5 : index
    %c0_201 = arith.constant 0 : index
    %213 = vector.load %arg6[%c0_199, %c5_200, %c0_201] : memref<4x9x64xf32, #tpu.memory_space<vmem>>, vector<1x1x64xf32>
    %214 = vector.shape_cast %213 : vector<1x1x64xf32> to vector<64xf32>
    %215 = vector.shape_cast %214 : vector<64xf32> to vector<1x64xf32>
    %216 = vector.broadcast %215 : vector<1x64xf32> to vector<128x64xf32>
    %217 = arith.mulf %212, %216 : vector<128x64xf32>
    %218 = arith.addf %192, %217 : vector<128x64xf32>
    %c1_202 = arith.constant 1 : index
    %c5_203 = arith.constant 5 : index
    %c0_204 = arith.constant 0 : index
    %219 = vector.load %arg6[%c1_202, %c5_203, %c0_204] : memref<4x9x64xf32, #tpu.memory_space<vmem>>, vector<1x1x64xf32>
    %220 = vector.shape_cast %219 : vector<1x1x64xf32> to vector<64xf32>
    %221 = vector.shape_cast %220 : vector<64xf32> to vector<1x64xf32>
    %222 = vector.broadcast %221 : vector<1x64xf32> to vector<128x64xf32>
    %223 = arith.mulf %212, %222 : vector<128x64xf32>
    %224 = arith.addf %198, %223 : vector<128x64xf32>
    %c2_205 = arith.constant 2 : index
    %c5_206 = arith.constant 5 : index
    %c0_207 = arith.constant 0 : index
    %225 = vector.load %arg6[%c2_205, %c5_206, %c0_207] : memref<4x9x64xf32, #tpu.memory_space<vmem>>, vector<1x1x64xf32>
    %226 = vector.shape_cast %225 : vector<1x1x64xf32> to vector<64xf32>
    %227 = vector.shape_cast %226 : vector<64xf32> to vector<1x64xf32>
    %228 = vector.broadcast %227 : vector<1x64xf32> to vector<128x64xf32>
    %229 = arith.mulf %212, %228 : vector<128x64xf32>
    %230 = arith.addf %204, %229 : vector<128x64xf32>
    %c3_208 = arith.constant 3 : index
    %c5_209 = arith.constant 5 : index
    %c0_210 = arith.constant 0 : index
    %231 = vector.load %arg6[%c3_208, %c5_209, %c0_210] : memref<4x9x64xf32, #tpu.memory_space<vmem>>, vector<1x1x64xf32>
    %232 = vector.shape_cast %231 : vector<1x1x64xf32> to vector<64xf32>
    %233 = vector.shape_cast %232 : vector<64xf32> to vector<1x64xf32>
    %234 = vector.broadcast %233 : vector<1x64xf32> to vector<128x64xf32>
    %235 = arith.mulf %212, %234 : vector<128x64xf32>
    %236 = arith.addf %210, %235 : vector<128x64xf32>
    %c0_211 = arith.constant 0 : index
    %c2_212 = arith.constant 2 : index
    %c7_213 = arith.constant 7 : index
    %c0_214 = arith.constant 0 : index
    %237 = vector.load %arg10[%c0_211, %c2_212, %c7_213, %c0_214] : memref<2x10x24x64xf32, #tpu.memory_space<vmem>>, vector<2x8x8x64xf32>
    %238 = vector.shape_cast %237 : vector<2x8x8x64xf32> to vector<128x64xf32>
    %c0_215 = arith.constant 0 : index
    %c6_216 = arith.constant 6 : index
    %c0_217 = arith.constant 0 : index
    %239 = vector.load %arg6[%c0_215, %c6_216, %c0_217] : memref<4x9x64xf32, #tpu.memory_space<vmem>>, vector<1x1x64xf32>
    %240 = vector.shape_cast %239 : vector<1x1x64xf32> to vector<64xf32>
    %241 = vector.shape_cast %240 : vector<64xf32> to vector<1x64xf32>
    %242 = vector.broadcast %241 : vector<1x64xf32> to vector<128x64xf32>
    %243 = arith.mulf %238, %242 : vector<128x64xf32>
    %244 = arith.addf %218, %243 : vector<128x64xf32>
    %c1_218 = arith.constant 1 : index
    %c6_219 = arith.constant 6 : index
    %c0_220 = arith.constant 0 : index
    %245 = vector.load %arg6[%c1_218, %c6_219, %c0_220] : memref<4x9x64xf32, #tpu.memory_space<vmem>>, vector<1x1x64xf32>
    %246 = vector.shape_cast %245 : vector<1x1x64xf32> to vector<64xf32>
    %247 = vector.shape_cast %246 : vector<64xf32> to vector<1x64xf32>
    %248 = vector.broadcast %247 : vector<1x64xf32> to vector<128x64xf32>
    %249 = arith.mulf %238, %248 : vector<128x64xf32>
    %250 = arith.addf %224, %249 : vector<128x64xf32>
    %c2_221 = arith.constant 2 : index
    %c6_222 = arith.constant 6 : index
    %c0_223 = arith.constant 0 : index
    %251 = vector.load %arg6[%c2_221, %c6_222, %c0_223] : memref<4x9x64xf32, #tpu.memory_space<vmem>>, vector<1x1x64xf32>
    %252 = vector.shape_cast %251 : vector<1x1x64xf32> to vector<64xf32>
    %253 = vector.shape_cast %252 : vector<64xf32> to vector<1x64xf32>
    %254 = vector.broadcast %253 : vector<1x64xf32> to vector<128x64xf32>
    %255 = arith.mulf %238, %254 : vector<128x64xf32>
    %256 = arith.addf %230, %255 : vector<128x64xf32>
    %c3_224 = arith.constant 3 : index
    %c6_225 = arith.constant 6 : index
    %c0_226 = arith.constant 0 : index
    %257 = vector.load %arg6[%c3_224, %c6_225, %c0_226] : memref<4x9x64xf32, #tpu.memory_space<vmem>>, vector<1x1x64xf32>
    %258 = vector.shape_cast %257 : vector<1x1x64xf32> to vector<64xf32>
    %259 = vector.shape_cast %258 : vector<64xf32> to vector<1x64xf32>
    %260 = vector.broadcast %259 : vector<1x64xf32> to vector<128x64xf32>
    %261 = arith.mulf %238, %260 : vector<128x64xf32>
    %262 = arith.addf %236, %261 : vector<128x64xf32>
    %c0_227 = arith.constant 0 : index
    %c2_228 = arith.constant 2 : index
    %c8_229 = arith.constant 8 : index
    %c0_230 = arith.constant 0 : index
    %263 = vector.load %arg10[%c0_227, %c2_228, %c8_229, %c0_230] : memref<2x10x24x64xf32, #tpu.memory_space<vmem>>, vector<2x8x8x64xf32>
    %264 = vector.shape_cast %263 : vector<2x8x8x64xf32> to vector<128x64xf32>
    %c0_231 = arith.constant 0 : index
    %c7_232 = arith.constant 7 : index
    %c0_233 = arith.constant 0 : index
    %265 = vector.load %arg6[%c0_231, %c7_232, %c0_233] : memref<4x9x64xf32, #tpu.memory_space<vmem>>, vector<1x1x64xf32>
    %266 = vector.shape_cast %265 : vector<1x1x64xf32> to vector<64xf32>
    %267 = vector.shape_cast %266 : vector<64xf32> to vector<1x64xf32>
    %268 = vector.broadcast %267 : vector<1x64xf32> to vector<128x64xf32>
    %269 = arith.mulf %264, %268 : vector<128x64xf32>
    %270 = arith.addf %244, %269 : vector<128x64xf32>
    %c1_234 = arith.constant 1 : index
    %c7_235 = arith.constant 7 : index
    %c0_236 = arith.constant 0 : index
    %271 = vector.load %arg6[%c1_234, %c7_235, %c0_236] : memref<4x9x64xf32, #tpu.memory_space<vmem>>, vector<1x1x64xf32>
    %272 = vector.shape_cast %271 : vector<1x1x64xf32> to vector<64xf32>
    %273 = vector.shape_cast %272 : vector<64xf32> to vector<1x64xf32>
    %274 = vector.broadcast %273 : vector<1x64xf32> to vector<128x64xf32>
    %275 = arith.mulf %264, %274 : vector<128x64xf32>
    %276 = arith.addf %250, %275 : vector<128x64xf32>
    %c2_237 = arith.constant 2 : index
    %c7_238 = arith.constant 7 : index
    %c0_239 = arith.constant 0 : index
    %277 = vector.load %arg6[%c2_237, %c7_238, %c0_239] : memref<4x9x64xf32, #tpu.memory_space<vmem>>, vector<1x1x64xf32>
    %278 = vector.shape_cast %277 : vector<1x1x64xf32> to vector<64xf32>
    %279 = vector.shape_cast %278 : vector<64xf32> to vector<1x64xf32>
    %280 = vector.broadcast %279 : vector<1x64xf32> to vector<128x64xf32>
    %281 = arith.mulf %264, %280 : vector<128x64xf32>
    %282 = arith.addf %256, %281 : vector<128x64xf32>
    %c3_240 = arith.constant 3 : index
    %c7_241 = arith.constant 7 : index
    %c0_242 = arith.constant 0 : index
    %283 = vector.load %arg6[%c3_240, %c7_241, %c0_242] : memref<4x9x64xf32, #tpu.memory_space<vmem>>, vector<1x1x64xf32>
    %284 = vector.shape_cast %283 : vector<1x1x64xf32> to vector<64xf32>
    %285 = vector.shape_cast %284 : vector<64xf32> to vector<1x64xf32>
    %286 = vector.broadcast %285 : vector<1x64xf32> to vector<128x64xf32>
    %287 = arith.mulf %264, %286 : vector<128x64xf32>
    %288 = arith.addf %262, %287 : vector<128x64xf32>
    %c0_243 = arith.constant 0 : index
    %c2_244 = arith.constant 2 : index
    %c9_245 = arith.constant 9 : index
    %c0_246 = arith.constant 0 : index
    %289 = vector.load %arg10[%c0_243, %c2_244, %c9_245, %c0_246] : memref<2x10x24x64xf32, #tpu.memory_space<vmem>>, vector<2x8x8x64xf32>
    %290 = vector.shape_cast %289 : vector<2x8x8x64xf32> to vector<128x64xf32>
    %c0_247 = arith.constant 0 : index
    %c8_248 = arith.constant 8 : index
    %c0_249 = arith.constant 0 : index
    %291 = vector.load %arg6[%c0_247, %c8_248, %c0_249] : memref<4x9x64xf32, #tpu.memory_space<vmem>>, vector<1x1x64xf32>
    %292 = vector.shape_cast %291 : vector<1x1x64xf32> to vector<64xf32>
    %293 = vector.shape_cast %292 : vector<64xf32> to vector<1x64xf32>
    %294 = vector.broadcast %293 : vector<1x64xf32> to vector<128x64xf32>
    %295 = arith.mulf %290, %294 : vector<128x64xf32>
    %296 = arith.addf %270, %295 : vector<128x64xf32>
    %c1_250 = arith.constant 1 : index
    %c8_251 = arith.constant 8 : index
    %c0_252 = arith.constant 0 : index
    %297 = vector.load %arg6[%c1_250, %c8_251, %c0_252] : memref<4x9x64xf32, #tpu.memory_space<vmem>>, vector<1x1x64xf32>
    %298 = vector.shape_cast %297 : vector<1x1x64xf32> to vector<64xf32>
    %299 = vector.shape_cast %298 : vector<64xf32> to vector<1x64xf32>
    %300 = vector.broadcast %299 : vector<1x64xf32> to vector<128x64xf32>
    %301 = arith.mulf %290, %300 : vector<128x64xf32>
    %302 = arith.addf %276, %301 : vector<128x64xf32>
    %c2_253 = arith.constant 2 : index
    %c8_254 = arith.constant 8 : index
    %c0_255 = arith.constant 0 : index
    %303 = vector.load %arg6[%c2_253, %c8_254, %c0_255] : memref<4x9x64xf32, #tpu.memory_space<vmem>>, vector<1x1x64xf32>
    %304 = vector.shape_cast %303 : vector<1x1x64xf32> to vector<64xf32>
    %305 = vector.shape_cast %304 : vector<64xf32> to vector<1x64xf32>
    %306 = vector.broadcast %305 : vector<1x64xf32> to vector<128x64xf32>
    %307 = arith.mulf %290, %306 : vector<128x64xf32>
    %308 = arith.addf %282, %307 : vector<128x64xf32>
    %c3_256 = arith.constant 3 : index
    %c8_257 = arith.constant 8 : index
    %c0_258 = arith.constant 0 : index
    %309 = vector.load %arg6[%c3_256, %c8_257, %c0_258] : memref<4x9x64xf32, #tpu.memory_space<vmem>>, vector<1x1x64xf32>
    %310 = vector.shape_cast %309 : vector<1x1x64xf32> to vector<64xf32>
    %311 = vector.shape_cast %310 : vector<64xf32> to vector<1x64xf32>
    %312 = vector.broadcast %311 : vector<1x64xf32> to vector<128x64xf32>
    %313 = arith.mulf %290, %312 : vector<128x64xf32>
    %314 = arith.addf %288, %313 : vector<128x64xf32>
    %315 = vector.shape_cast %296 : vector<128x64xf32> to vector<2x64x64xf32>
    %cst_259 = arith.constant dense<0.000000e+00> : vector<2x64xf32>
    %316 = vector.multi_reduction <add>, %315, %cst_259 [2] : vector<2x64x64xf32> to vector<2x64xf32>
    %317 = vector.broadcast %84 : f32 to vector<2x64xf32>
    %318 = arith.addf %316, %317 : vector<2x64xf32>
    %cst_260 = arith.constant 0.000000e+00 : f32
    %319 = vector.broadcast %cst_260 : f32 to vector<2x64xf32>
    %320 = arith.maximumf %318, %319 : vector<2x64xf32>
    %c0_261 = arith.constant 0 : index
    %c0_262 = arith.constant 0 : index
    %c0_263 = arith.constant 0 : index
    %321 = vector.load %arg8[%c0_261, %c0_262, %c0_263] : memref<2x4x64xf32, #tpu.memory_space<vmem>>, vector<2x1x64xf32>
    %322 = vector.shape_cast %321 : vector<2x1x64xf32> to vector<2x64xf32>
    %323 = vector.shape_cast %320 : vector<2x64xf32> to vector<2x1x64xf32>
    tpu.vector_store %arg8[%c0_261, %c0_262, %c0_263], %323 {strides = array<i32>} : memref<2x4x64xf32, #tpu.memory_space<vmem>>, vector<2x1x64xf32>,
    %324 = vector.shape_cast %302 : vector<128x64xf32> to vector<2x64x64xf32>
    %cst_264 = arith.constant dense<0.000000e+00> : vector<2x64xf32>
    %325 = vector.multi_reduction <add>, %324, %cst_264 [2] : vector<2x64x64xf32> to vector<2x64xf32>
    %326 = vector.broadcast %84 : f32 to vector<2x64xf32>
    %327 = arith.addf %325, %326 : vector<2x64xf32>
    %cst_265 = arith.constant 0.000000e+00 : f32
    %328 = vector.broadcast %cst_265 : f32 to vector<2x64xf32>
    %329 = arith.maximumf %327, %328 : vector<2x64xf32>
    %c0_266 = arith.constant 0 : index
    %c1_267 = arith.constant 1 : index
    %c0_268 = arith.constant 0 : index
    %330 = vector.load %arg8[%c0_266, %c1_267, %c0_268] : memref<2x4x64xf32, #tpu.memory_space<vmem>>, vector<2x1x64xf32>
    %331 = vector.shape_cast %330 : vector<2x1x64xf32> to vector<2x64xf32>
    %332 = vector.shape_cast %329 : vector<2x64xf32> to vector<2x1x64xf32>
    tpu.vector_store %arg8[%c0_266, %c1_267, %c0_268], %332 {strides = array<i32>} : memref<2x4x64xf32, #tpu.memory_space<vmem>>, vector<2x1x64xf32>,
    %333 = vector.shape_cast %308 : vector<128x64xf32> to vector<2x64x64xf32>
    %cst_269 = arith.constant dense<0.000000e+00> : vector<2x64xf32>
    %334 = vector.multi_reduction <add>, %333, %cst_269 [2] : vector<2x64x64xf32> to vector<2x64xf32>
    %335 = vector.broadcast %84 : f32 to vector<2x64xf32>
    %336 = arith.addf %334, %335 : vector<2x64xf32>
    %cst_270 = arith.constant 0.000000e+00 : f32
    %337 = vector.broadcast %cst_270 : f32 to vector<2x64xf32>
    %338 = arith.maximumf %336, %337 : vector<2x64xf32>
    %c0_271 = arith.constant 0 : index
    %c2_272 = arith.constant 2 : index
    %c0_273 = arith.constant 0 : index
    %339 = vector.load %arg8[%c0_271, %c2_272, %c0_273] : memref<2x4x64xf32, #tpu.memory_space<vmem>>, vector<2x1x64xf32>
    %340 = vector.shape_cast %339 : vector<2x1x64xf32> to vector<2x64xf32>
    %341 = vector.shape_cast %338 : vector<2x64xf32> to vector<2x1x64xf32>
    tpu.vector_store %arg8[%c0_271, %c2_272, %c0_273], %341 {strides = array<i32>} : memref<2x4x64xf32, #tpu.memory_space<vmem>>, vector<2x1x64xf32>,
    %342 = vector.shape_cast %314 : vector<128x64xf32> to vector<2x64x64xf32>
    %cst_274 = arith.constant dense<0.000000e+00> : vector<2x64xf32>
    %343 = vector.multi_reduction <add>, %342, %cst_274 [2] : vector<2x64x64xf32> to vector<2x64xf32>
    %344 = vector.broadcast %84 : f32 to vector<2x64xf32>
    %345 = arith.addf %343, %344 : vector<2x64xf32>
    %cst_275 = arith.constant 0.000000e+00 : f32
    %346 = vector.broadcast %cst_275 : f32 to vector<2x64xf32>
    %347 = arith.maximumf %345, %346 : vector<2x64xf32>
    %c0_276 = arith.constant 0 : index
    %c3_277 = arith.constant 3 : index
    %c0_278 = arith.constant 0 : index
    %348 = vector.load %arg8[%c0_276, %c3_277, %c0_278] : memref<2x4x64xf32, #tpu.memory_space<vmem>>, vector<2x1x64xf32>
    %349 = vector.shape_cast %348 : vector<2x1x64xf32> to vector<2x64xf32>
    %350 = vector.shape_cast %347 : vector<2x64xf32> to vector<2x1x64xf32>
    tpu.vector_store %arg8[%c0_276, %c3_277, %c0_278], %350 {strides = array<i32>} : memref<2x4x64xf32, #tpu.memory_space<vmem>>, vector<2x1x64xf32>,
    return
  }
  func.func @transform_0(%arg0: i32) -> (i32, i32, i32) {
    %c0_i32 = arith.constant 0 : i32
    %c0_i32_0 = arith.constant 0 : i32
    %c0_i32_1 = arith.constant 0 : i32
    return %arg0, %c0_i32, %c0_i32_0 : i32, i32, i32
  }
  func.func @transform_1(%arg0: i32) -> (i32, i32) {
    %c0_i32 = arith.constant 0 : i32
    %c0_i32_0 = arith.constant 0 : i32
    %c0_i32_1 = arith.constant 0 : i32
    return %c0_i32, %c0_i32_0 : i32, i32
  }
  func.func @transform_2(%arg0: i32) -> (i32, i32) {
    %c0_i32 = arith.constant 0 : i32
    %c0_i32_0 = arith.constant 0 : i32
    %c0_i32_1 = arith.constant 0 : i32
    return %c0_i32, %c0_i32_0 : i32, i32
  }
  func.func @transform_3(%arg0: i32) -> (i32, i32, i32) {
    %c0_i32 = arith.constant 0 : i32
    %c0_i32_0 = arith.constant 0 : i32
    %c0_i32_1 = arith.constant 0 : i32
    %c0_i32_2 = arith.constant 0 : i32
    return %c0_i32, %c0_i32_0, %c0_i32_1 : i32, i32, i32
  }
  func.func @transform_4(%arg0: i32) -> (i32, i32) {
    %c0_i32 = arith.constant 0 : i32
    %c0_i32_0 = arith.constant 0 : i32
    %c0_i32_1 = arith.constant 0 : i32
    return %c0_i32, %c0_i32_0 : i32, i32
  }
  func.func @transform_5(%arg0: i32) -> (i32, i32, i32) {
    %c0_i32 = arith.constant 0 : i32
    %c0_i32_0 = arith.constant 0 : i32
    %c0_i32_1 = arith.constant 0 : i32
    %c0_i32_2 = arith.constant 0 : i32
    return %c0_i32, %c0_i32_0, %c0_i32_1 : i32, i32, i32
  }
  func.func @transform_6(%arg0: i32) -> (i32, i32) {
    %c0_i32 = arith.constant 0 : i32
    %c0_i32_0 = arith.constant 0 : i32
    %c0_i32_1 = arith.constant 0 : i32
    return %c0_i32, %c0_i32_0 : i32, i32
  }
  func.func @transform_7(%arg0: i32) -> (i32, i32, i32) {
    %c0_i32 = arith.constant 0 : i32
    %c0_i32_0 = arith.constant 0 : i32
    %c0_i32_1 = arith.constant 0 : i32
    return %arg0, %c0_i32, %c0_i32_0 : i32, i32, i32
  }
}

</mosaic_0001>

<llo_original>
// kernel: tpu_custom_call.1
$region0: #{tpu_custom_call.1}
  #allocation0 [shape = 'u32[]', space=smem, size = 0x4, offset = 0x4, fixed_abs, tag = 'smem constant byte address 0x4 - core index']
  #allocation1 [shape = 'u32[144,128]{1,0:T(1,128)}', space=vmem, size = 0x12000, scoped, tag = 'internal scratch']
  #allocation2 [shape = 'f32[2,10,24,64]{3,2,1,0:T(8,128)}', space=vmem, size = 0x3c000, scoped, tag = 'scratch operand']
  #allocation3 [shape = 'f32[2,10,24,64]{3,2,1,0:T(8,128)}', space=vmem, size = 0x3c000, scoped, tag = 'scratch operand']
  #allocation4 [shape = 'f32[1,1]{1,0:T(1,128)S(1)}', space=vmem, size = 0x200, scoped, tag = 'scoped memory for tpu_custom_call.1']
  %s0 = inlined_call_operand.vmem [shape: f32[2,64,16], index: 0, kind: input, shape index: {}]
  %s1 = inlined_call_operand.vmem [shape: f32[16,64], index: 1, kind: input, shape index: {}]
  %s2 = inlined_call_operand.vmem [shape: f32[1,64], index: 2, kind: input, shape index: {}]
  %s3 = inlined_call_operand.hbm [shape: f32[9,64,64], index: 3, kind: input, shape index: {}]
  %s4 = inlined_call_operand.vmem [shape: f32[1,64], index: 4, kind: input, shape index: {}]
  %s5 = inlined_call_operand.vmem [shape: f32[4,9,64], index: 5, kind: input, shape index: {}]
  %s6 = inlined_call_operand.<no memory space> [shape: f32[1,1], index: 6, kind: input, shape index: {}]
  %s7 = inlined_call_operand.hbm [shape: f32[2,4,64], index: 7, kind: output, shape index: {}]
  %s8 = sld [smem:[#allocation0]]
  $region42: #{tpu_custom_call.1} parent=0
    _
  %s10 = ssub.s32 1, %s8
  %s11 = scalar_select 0, %s10, %s8
  %v12 = vstv %s6
  %13 = vst [vmem:[#allocation4] sm:$0x1] %v12
  $region1: #{tpu_custom_call.1} parent=0
    #allocation5 [shape = 'u8[294912]{0}', space=vmem, size = 0x48000, scoped, tag = 'input window, operand 3, single buffered']
    #allocation6 [shape = 's32[1]{0}', space=sflag, size = 0x4, scoped, tag = 'scoped memory for tpu_custom_call.1']
    #allocation7 [shape = 's32[1]{0}', space=sflag, size = 0x4, scoped, tag = 'scoped memory for tpu_custom_call.1']
    #allocation8 [shape = 'u8[4096]{0}', space=vmem, size = 0x1000, scoped, tag = 'output window, operand 0, single buffered']
    %14 = vsyncpa [#allocation6], 0
    %15 = vsyncpa [#allocation7], 0
    // Predicated region
    $region2: #{tpu_custom_call.1} parent=1 // pred_check
      _
    $region3: #{tpu_custom_call.1} parent=1 // pred_check_branch
      %17 = sbr.rel (0) target = $region5
    $region4: #{tpu_custom_call.1} parent=1 // pred_region
      _
    $region5: #{tpu_custom_call.1} parent=1 // pred_fallthru
      _
    // Predicated region
    $region6: #{tpu_custom_call.1} parent=1 // pred_check
      _
    $region7: #{tpu_custom_call.1} parent=1 // pred_check_branch
      %19 = sbr.rel (0) target = $region9
    $region8: #{tpu_custom_call.1} parent=1 // pred_region
      _
    $region9: #{tpu_custom_call.1} parent=1 // pred_fallthru
      _
    // Predicated region
    $region10: #{tpu_custom_call.1} parent=1 // pred_check
      _
    $region11: #{tpu_custom_call.1} parent=1 // pred_check_branch
      %21 = sbr.rel (0) target = $region13
    $region12: #{tpu_custom_call.1} parent=1 // pred_region
      _
    $region13: #{tpu_custom_call.1} parent=1 // pred_fallthru
      _
    // Predicated region
    $region14: #{tpu_custom_call.1} parent=1 // pred_check
      _
    $region15: #{tpu_custom_call.1} parent=1 // pred_check_branch
      %23 = sbr.rel (0) target = $region17
    $region16: #{tpu_custom_call.1} parent=1 // pred_region
      %s25 = ssub.s32 9216, 9216
      %26 = vsyncadd [#allocation6], %s25
      %s27 = sshll.u32 [#allocation5], 4
      %s28 = int_to_ptr.vmem [resolvable:$true] %s27
      %33 = dma.hbm_to_vmem [thread:$0]  %s3, 9216, %s28, [#allocation6], 128, 128, 8
    $region17: #{tpu_custom_call.1} parent=1 // pred_fallthru
      _
    // Predicated region
    $region18: #{tpu_custom_call.1} parent=1 // pred_check
      _
    $region19: #{tpu_custom_call.1} parent=1 // pred_check_branch
      %35 = sbr.rel (0) target = $region21
    $region20: #{tpu_custom_call.1} parent=1 // pred_region
      _
    $region21: #{tpu_custom_call.1} parent=1 // pred_fallthru
      _
    // Predicated region
    $region22: #{tpu_custom_call.1} parent=1 // pred_check
      _
    $region23: #{tpu_custom_call.1} parent=1 // pred_check_branch
      %37 = sbr.rel (0) target = $region25
    $region24: #{tpu_custom_call.1} parent=1 // pred_region
      _
    $region25: #{tpu_custom_call.1} parent=1 // pred_fallthru
      _
    // Predicated region
    $region26: #{tpu_custom_call.1} parent=1 // pred_check
      _
    $region27: #{tpu_custom_call.1} parent=1 // pred_check_branch
      %39 = sbr.rel (0) target = $region29
    $region28: #{tpu_custom_call.1} parent=1 // pred_region
      _
    $region29: #{tpu_custom_call.1} parent=1 // pred_fallthru
      _
    // Predicated region
    $region30: #{tpu_custom_call.1} parent=1 // pred_check
      _
    $region31: #{tpu_custom_call.1} parent=1 // pred_check_branch
      %41 = sbr.rel (0) target = $region33
    $region32: #{tpu_custom_call.1} parent=1 // pred_region
      %42 = dma.done [#allocation6], 9216
    $region33: #{tpu_custom_call.1} parent=1 // pred_fallthru
      _
    %vm43 = vcmask 516096
    %44 = vst.msk [vmem:[#allocation2 + $0x7] sm:$0x1] %vm43, 0.0
    %45 = vst.msk [vmem:[#allocation2 + $0x1f] sm:$0x1] %vm43, 0.0
    %46 = vst.msk [vmem:[#allocation2 + $0x37] sm:$0x1] %vm43, 0.0
    %47 = vst.msk [vmem:[#allocation2 + $0x4f] sm:$0x1] %vm43, 0.0
    %48 = vst.msk [vmem:[#allocation2 + $0x67] sm:$0x1] %vm43, 0.0
    %49 = vst.msk [vmem:[#allocation2 + $0x7f] sm:$0x1] %vm43, 0.0
    %50 = vst.msk [vmem:[#allocation2 + $0x97] sm:$0x1] %vm43, 0.0
    %51 = vst.msk [vmem:[#allocation2 + $0xaf] sm:$0x1] %vm43, 0.0
    %52 = vst.msk [vmem:[#allocation2 + $0xc7] sm:$0x1] %vm43, 0.0
    %53 = vst.msk [vmem:[#allocation2 + $0xdf] sm:$0x1] %vm43, 0.0
    %54 = vst.msk [vmem:[#allocation2 + $0xf7] sm:$0x1] %vm43, 0.0
    %55 = vst.msk [vmem:[#allocation2 + $0x10f] sm:$0x1] %vm43, 0.0
    %56 = vst.msk [vmem:[#allocation2 + $0x127] sm:$0x1] %vm43, 0.0
    %57 = vst.msk [vmem:[#allocation2 + $0x13f] sm:$0x1] %vm43, 0.0
    %58 = vst.msk [vmem:[#allocation2 + $0x157] sm:$0x1] %vm43, 0.0
    %59 = vst.msk [vmem:[#allocation2 + $0x16f] sm:$0x1] %vm43, 0.0
    %60 = vst.msk [vmem:[#allocation2 + $0x187] sm:$0x1] %vm43, 0.0
    %61 = vst.msk [vmem:[#allocation2 + $0x19f] sm:$0x1] %vm43, 0.0
    %62 = vst.msk [vmem:[#allocation2 + $0x1b7] sm:$0x1] %vm43, 0.0
    %63 = vst.msk [vmem:[#allocation2 + $0x1cf] sm:$0x1] %vm43, 0.0
    %64 = vst.msk [vmem:[#allocation2 + $0x10] sm:$0x1] %vm43, 0.0
    %65 = vst.msk [vmem:[#allocation2 + $0x28] sm:$0x1] %vm43, 0.0
    %66 = vst.msk [vmem:[#allocation2 + $0x40] sm:$0x1] %vm43, 0.0
    %67 = vst.msk [vmem:[#allocation2 + $0x58] sm:$0x1] %vm43, 0.0
    %68 = vst.msk [vmem:[#allocation2 + $0x70] sm:$0x1] %vm43, 0.0
    %69 = vst.msk [vmem:[#allocation2 + $0x88] sm:$0x1] %vm43, 0.0
    %70 = vst.msk [vmem:[#allocation2 + $0xa0] sm:$0x1] %vm43, 0.0
    %71 = vst.msk [vmem:[#allocation2 + $0xb8] sm:$0x1] %vm43, 0.0
    %72 = vst.msk [vmem:[#allocation2 + $0xd0] sm:$0x1] %vm43, 0.0
    %73 = vst.msk [vmem:[#allocation2 + $0xe8] sm:$0x1] %vm43, 0.0
    %74 = vst.msk [vmem:[#allocation2 + $0x100] sm:$0x1] %vm43, 0.0
    %75 = vst.msk [vmem:[#allocation2 + $0x118] sm:$0x1] %vm43, 0.0
    %76 = vst.msk [vmem:[#allocation2 + $0x130] sm:$0x1] %vm43, 0.0
    %77 = vst.msk [vmem:[#allocation2 + $0x148] sm:$0x1] %vm43, 0.0
    %78 = vst.msk [vmem:[#allocation2 + $0x160] sm:$0x1] %vm43, 0.0
    %79 = vst.msk [vmem:[#allocation2 + $0x178] sm:$0x1] %vm43, 0.0
    %80 = vst.msk [vmem:[#allocation2 + $0x190] sm:$0x1] %vm43, 0.0
    %81 = vst.msk [vmem:[#allocation2 + $0x1a8] sm:$0x1] %vm43, 0.0
    %82 = vst.msk [vmem:[#allocation2 + $0x1c0] sm:$0x1] %vm43, 0.0
    %83 = vst.msk [vmem:[#allocation2 + $0x1d8] sm:$0x1] %vm43, 0.0
    %vm84 = vcmask 523264
    %85 = vst.msk [vmem:[#allocation2 + $0x8] sm:$0xff] %vm84, 0.0
    %86 = vst.msk [vmem:[#allocation2 + $0xf8] sm:$0xff] %vm84, 0.0
    %s87 = scalar_lea.vmem [#allocation2], 216
    %88 = vst.msk [vmem:[%s87 + $0x8] sm:$0xff] %vm84, 0.0
    %89 = vst.msk [vmem:[%s87 + $0xf8] sm:$0xff] %vm84, 0.0
    %90 = vst.msk [vmem:[#allocation3 + $0x7] sm:$0x1] %vm43, 0.0
    %91 = vst.msk [vmem:[#allocation3 + $0x1f] sm:$0x1] %vm43, 0.0
    %92 = vst.msk [vmem:[#allocation3 + $0x37] sm:$0x1] %vm43, 0.0
    %93 = vst.msk [vmem:[#allocation3 + $0x4f] sm:$0x1] %vm43, 0.0
    %94 = vst.msk [vmem:[#allocation3 + $0x67] sm:$0x1] %vm43, 0.0
    %95 = vst.msk [vmem:[#allocation3 + $0x7f] sm:$0x1] %vm43, 0.0
    %96 = vst.msk [vmem:[#allocation3 + $0x97] sm:$0x1] %vm43, 0.0
    %97 = vst.msk [vmem:[#allocation3 + $0xaf] sm:$0x1] %vm43, 0.0
    %98 = vst.msk [vmem:[#allocation3 + $0xc7] sm:$0x1] %vm43, 0.0
    %99 = vst.msk [vmem:[#allocation3 + $0xdf] sm:$0x1] %vm43, 0.0
    %100 = vst.msk [vmem:[#allocation3 + $0xf7] sm:$0x1] %vm43, 0.0
    %101 = vst.msk [vmem:[#allocation3 + $0x10f] sm:$0x1] %vm43, 0.0
    %102 = vst.msk [vmem:[#allocation3 + $0x127] sm:$0x1] %vm43, 0.0
    %103 = vst.msk [vmem:[#allocation3 + $0x13f] sm:$0x1] %vm43, 0.0
    %104 = vst.msk [vmem:[#allocation3 + $0x157] sm:$0x1] %vm43, 0.0
    %105 = vst.msk [vmem:[#allocation3 + $0x16f] sm:$0x1] %vm43, 0.0
    %106 = vst.msk [vmem:[#allocation3 + $0x187] sm:$0x1] %vm43, 0.0
    %107 = vst.msk [vmem:[#allocation3 + $0x19f] sm:$0x1] %vm43, 0.0
    %108 = vst.msk [vmem:[#allocation3 + $0x1b7] sm:$0x1] %vm43, 0.0
    %109 = vst.msk [vmem:[#allocation3 + $0x1cf] sm:$0x1] %vm43, 0.0
    %110 = vst.msk [vmem:[#allocation3 + $0x10] sm:$0x1] %vm43, 0.0
    %111 = vst.msk [vmem:[#allocation3 + $0x28] sm:$0x1] %vm43, 0.0
    %112 = vst.msk [vmem:[#allocation3 + $0x40] sm:$0x1] %vm43, 0.0
    %113 = vst.msk [vmem:[#allocation3 + $0x58] sm:$0x1] %vm43, 0.0
    %114 = vst.msk [vmem:[#allocation3 + $0x70] sm:$0x1] %vm43, 0.0
    %115 = vst.msk [vmem:[#allocation3 + $0x88] sm:$0x1] %vm43, 0.0
    %116 = vst.msk [vmem:[#allocation3 + $0xa0] sm:$0x1] %vm43, 0.0
    %117 = vst.msk [vmem:[#allocation3 + $0xb8] sm:$0x1] %vm43, 0.0
    %118 = vst.msk [vmem:[#allocation3 + $0xd0] sm:$0x1] %vm43, 0.0
    %119 = vst.msk [vmem:[#allocation3 + $0xe8] sm:$0x1] %vm43, 0.0
    %120 = vst.msk [vmem:[#allocation3 + $0x100] sm:$0x1] %vm43, 0.0
    %121 = vst.msk [vmem:[#allocation3 + $0x118] sm:$0x1] %vm43, 0.0
    %122 = vst.msk [vmem:[#allocation3 + $0x130] sm:$0x1] %vm43, 0.0
    %123 = vst.msk [vmem:[#allocation3 + $0x148] sm:$0x1] %vm43, 0.0
    %124 = vst.msk [vmem:[#allocation3 + $0x160] sm:$0x1] %vm43, 0.0
    %125 = vst.msk [vmem:[#allocation3 + $0x178] sm:$0x1] %vm43, 0.0
    %126 = vst.msk [vmem:[#allocation3 + $0x190] sm:$0x1] %vm43, 0.0
    %127 = vst.msk [vmem:[#allocation3 + $0x1a8] sm:$0x1] %vm43, 0.0
    %128 = vst.msk [vmem:[#allocation3 + $0x1c0] sm:$0x1] %vm43, 0.0
    %129 = vst.msk [vmem:[#allocation3 + $0x1d8] sm:$0x1] %vm43, 0.0
    %130 = vst.msk [vmem:[#allocation3 + $0x8] sm:$0xff] %vm84, 0.0
    %131 = vst.msk [vmem:[#allocation3 + $0xf8] sm:$0xff] %vm84, 0.0
    %s132 = scalar_lea.vmem [#allocation3], 216
    %133 = vst.msk [vmem:[%s132 + $0x8] sm:$0xff] %vm84, 0.0
    %134 = vst.msk [vmem:[%s132 + $0xf8] sm:$0xff] %vm84, 0.0
    %v135 = vld [vmem:[%s0] sm:$0xff]
    %v136 = vld [vmem:[%s0 + $0x8] sm:$0xff]
    %v137 = vld [vmem:[%s0 + $0x10] sm:$0xff]
    %v138 = vld [vmem:[%s0 + $0x18] sm:$0xff]
    %v139 = vld [vmem:[%s0 + $0x20] sm:$0xff]
    %v140 = vld [vmem:[%s0 + $0x28] sm:$0xff]
    %v141 = vld [vmem:[%s0 + $0x30] sm:$0xff]
    %v142 = vld [vmem:[%s0 + $0x38] sm:$0xff]
    %v143 = vld [vmem:[%s0 + $0x40] sm:$0xff]
    %v144 = vld [vmem:[%s0 + $0x48] sm:$0xff]
    %v145 = vld [vmem:[%s0 + $0x50] sm:$0xff]
    %v146 = vld [vmem:[%s0 + $0x58] sm:$0xff]
    %v147 = vld [vmem:[%s0 + $0x60] sm:$0xff]
    %v148 = vld [vmem:[%s0 + $0x68] sm:$0xff]
    %v149 = vld [vmem:[%s0 + $0x70] sm:$0xff]
    %v150 = vld [vmem:[%s0 + $0x78] sm:$0xff]
    %v151 = vld [vmem:[%s1] sm:$0xff]
    %v152 = vld [vmem:[%s1 + $0x8] sm:$0xff]
    %v153 = vld [vmem:[%s2] sm:$0x1]
    %v155 = vlaneseq
    %v156 = vshrl.u32 %v155, 7
    %v157 = vsub.s32 0, %v156
    %v158 = vrot.slane %v153, %v157
    %vm160 = vcmask 130048
    %v162 = vsel %vm160, %v135, 0
    %v165 = vsel %vm160, %v136, 0
    %v168 = vsel %vm160, %v137, 0
    %v171 = vsel %vm160, %v138, 0
    %v174 = vsel %vm160, %v139, 0
    %v177 = vsel %vm160, %v140, 0
    %v180 = vsel %vm160, %v141, 0
    %v183 = vsel %vm160, %v142, 0
    %v186 = vsel %vm160, %v143, 0
    %v189 = vsel %vm160, %v144, 0
    %v192 = vsel %vm160, %v145, 0
    %v195 = vsel %vm160, %v146, 0
    %v198 = vsel %vm160, %v147, 0
    %v201 = vsel %vm160, %v148, 0
    %v204 = vsel %vm160, %v149, 0
    %v207 = vsel %vm160, %v150, 0
    %209 = vmatprep.subr.mxu0 0.0
    %210 = vmatpush1.msra.mxu0 %v151
    %211 = vmatprep.subr.mxu0 0.0
    %212 = vmatpush1.msra.mxu0 %v152
    %213 = vmatprep.subr.mxu0 0.0
    %214 = vmatpush1.msra.mxu0 0.0
    %215 = vmatprep.subr.mxu0 0.0
    %216 = vmatpush1.msra.mxu0 0.0
    %217 = vmatprep.subr.mxu0 0.0
    %218 = vmatpush1.msra.mxu0 0.0
    %219 = vmatprep.subr.mxu0 0.0
    %220 = vmatpush1.msra.mxu0 0.0
    %221 = vmatprep.subr.mxu0 0.0
    %222 = vmatpush1.msra.mxu0 0.0
    %223 = vmatprep.subr.mxu0 0.0
    %224 = vmatpush1.msra.mxu0 0.0
    %225 = vmatprep.subr.mxu0 0.0
    %226 = vmatpush1.msra.mxu0 0.0
    %227 = vmatprep.subr.mxu0 0.0
    %228 = vmatpush1.msra.mxu0 0.0
    %229 = vmatprep.subr.mxu0 0.0
    %230 = vmatpush1.msra.mxu0 0.0
    %231 = vmatprep.subr.mxu0 0.0
    %232 = vmatpush1.msra.mxu0 0.0
    %233 = vmatprep.subr.mxu0 0.0
    %234 = vmatpush1.msra.mxu0 0.0
    %235 = vmatprep.subr.mxu0 0.0
    %236 = vmatpush1.msra.mxu0 0.0
    %237 = vmatprep.subr.mxu0 0.0
    %238 = vmatpush1.msra.mxu0 0.0
    %239 = vmatprep.subr.mxu0 0.0
    %240 = vmatpush1.msra.mxu0 0.0
    %241 = vmatprep.subr.mxu0 0.0
    %242 = vmatpush1.msra.mxu0 0.0
    %243 = vmatprep.subr.mxu0 0.0
    %244 = vmatpush1.msra.mxu0 0.0
    %245 = vmatprep.subr.mxu0 0.0
    %246 = vmatpush1.msra.mxu0 0.0
    %247 = vmatprep.subr.mxu0 0.0
    %248 = vmatpush1.msra.mxu0 0.0
    %249 = vmatprep.subr.mxu0 0.0
    %250 = vmatpush1.msra.mxu0 0.0
    %251 = vmatprep.subr.mxu0 0.0
    %252 = vmatpush1.msra.mxu0 0.0
    %253 = vmatprep.subr.mxu0 0.0
    %254 = vmatpush1.msra.mxu0 0.0
    %255 = vmatprep.subr.mxu0 0.0
    %256 = vmatpush1.msra.mxu0 0.0
    %257 = vmatprep.subr.mxu0 0.0
    %258 = vmatpush1.msra.mxu0 0.0
    %259 = vmatprep.subr.mxu0 0.0
    %260 = vmatpush1.msra.mxu0 0.0
    %261 = vmatprep.subr.mxu0 0.0
    %262 = vmatpush1.msra.mxu0 0.0
    %263 = vmatprep.subr.mxu0 0.0
    %264 = vmatpush1.msra.mxu0 0.0
    %265 = vmatprep.subr.mxu0 0.0
    %266 = vmatpush1.msra.mxu0 0.0
    %267 = vmatprep.subr.mxu0 0.0
    %268 = vmatpush1.msra.mxu0 0.0
    %269 = vmatprep.subr.mxu0 0.0
    %270 = vmatpush1.msra.mxu0 0.0
    %271 = vmatprep.subr.mxu0 0.0
    %272 = vmatpush1.msra.mxu0 0.0
    %273 = vmatprep.mubr.f32.mxu0 0.0
    %274 = vmatmul.mubr.f32.gmra.mrb[0].mxu0 %v162
    %v275 = vpop.f32.mrb[0].mxu0
    %v276 = vadd.f32 %v158, %v275
    %v277 = vpop.f32.mrb[0].mxu0
    %278 = vmatprep.mubr.f32.mxu0 0.0
    %279 = vmatmul.mubr.f32.gmra.mrb[0].mxu0 %v165
    %v280 = vpop.f32.mrb[0].mxu0
    %v281 = vadd.f32 %v158, %v280
    %v282 = vpop.f32.mrb[0].mxu0
    %283 = vmatprep.mubr.f32.mxu0 0.0
    %284 = vmatmul.mubr.f32.gmra.mrb[0].mxu0 %v168
    %v285 = vpop.f32.mrb[0].mxu0
    %v286 = vadd.f32 %v158, %v285
    %v287 = vpop.f32.mrb[0].mxu0
    %288 = vmatprep.mubr.f32.mxu0 0.0
    %289 = vmatmul.mubr.f32.gmra.mrb[0].mxu0 %v171
    %v290 = vpop.f32.mrb[0].mxu0
    %v291 = vadd.f32 %v158, %v290
    %v292 = vpop.f32.mrb[0].mxu0
    %293 = vmatprep.mubr.f32.mxu0 0.0
    %294 = vmatmul.mubr.f32.gmra.mrb[0].mxu0 %v174
    %v295 = vpop.f32.mrb[0].mxu0
    %v296 = vadd.f32 %v158, %v295
    %v297 = vpop.f32.mrb[0].mxu0
    %298 = vmatprep.mubr.f32.mxu0 0.0
    %299 = vmatmul.mubr.f32.gmra.mrb[0].mxu0 %v177
    %v300 = vpop.f32.mrb[0].mxu0
    %v301 = vadd.f32 %v158, %v300
    %v302 = vpop.f32.mrb[0].mxu0
    %303 = vmatprep.mubr.f32.mxu0 0.0
    %304 = vmatmul.mubr.f32.gmra.mrb[0].mxu0 %v180
    %v305 = vpop.f32.mrb[0].mxu0
    %v306 = vadd.f32 %v158, %v305
    %v307 = vpop.f32.mrb[0].mxu0
    %308 = vmatprep.mubr.f32.mxu0 0.0
    %309 = vmatmul.mubr.f32.gmra.mrb[0].mxu0 %v183
    %v310 = vpop.f32.mrb[0].mxu0
    %v311 = vadd.f32 %v158, %v310
    %v312 = vpop.f32.mrb[0].mxu0
    %313 = vmatprep.mubr.f32.mxu0 0.0
    %314 = vmatmul.mubr.f32.gmra.mrb[0].mxu0 %v186
    %v315 = vpop.f32.mrb[0].mxu0
    %v316 = vadd.f32 %v158, %v315
    %v317 = vpop.f32.mrb[0].mxu0
    %318 = vmatprep.mubr.f32.mxu0 0.0
    %319 = vmatmul.mubr.f32.gmra.mrb[0].mxu0 %v189
    %v320 = vpop.f32.mrb[0].mxu0
    %v321 = vadd.f32 %v158, %v320
    %v322 = vpop.f32.mrb[0].mxu0
    %323 = vmatprep.mubr.f32.mxu0 0.0
    %324 = vmatmul.mubr.f32.gmra.mrb[0].mxu0 %v192
    %v325 = vpop.f32.mrb[0].mxu0
    %v326 = vadd.f32 %v158, %v325
    %v327 = vpop.f32.mrb[0].mxu0
    %328 = vmatprep.mubr.f32.mxu0 0.0
    %329 = vmatmul.mubr.f32.gmra.mrb[0].mxu0 %v195
    %v330 = vpop.f32.mrb[0].mxu0
    %v331 = vadd.f32 %v158, %v330
    %v332 = vpop.f32.mrb[0].mxu0
    %333 = vmatprep.mubr.f32.mxu0 0.0
    %334 = vmatmul.mubr.f32.gmra.mrb[0].mxu0 %v198
    %v335 = vpop.f32.mrb[0].mxu0
    %v336 = vadd.f32 %v158, %v335
    %v337 = vpop.f32.mrb[0].mxu0
    %338 = vmatprep.mubr.f32.mxu0 0.0
    %339 = vmatmul.mubr.f32.gmra.mrb[0].mxu0 %v201
    %v340 = vpop.f32.mrb[0].mxu0
    %v341 = vadd.f32 %v158, %v340
    %v342 = vpop.f32.mrb[0].mxu0
    %343 = vmatprep.mubr.f32.mxu0 0.0
    %344 = vmatmul.mubr.f32.gmra.mrb[0].mxu0 %v204
    %v345 = vpop.f32.mrb[0].mxu0
    %v346 = vadd.f32 %v158, %v345
    %v347 = vpop.f32.mrb[0].mxu0
    %348 = vmatprep.mubr.f32.mxu0 0.0
    %349 = vmatmul.mubr.f32.gmra.mrb[0].mxu0 %v207
    %v350 = vpop.f32.mrb[0].mxu0
    %v351 = vadd.f32 %v158, %v350
    %v352 = vpop.f32.mrb[0].mxu0
    %353 = vdwg.mxu0
    %s354 = scalar_lea.vmem [#allocation2], 24
    %355 = vst.msk [vmem:[%s354 + $0x8] sm:$0xff] %vm84, %v276
    %356 = vst.msk [vmem:[%s354 + $0x20] sm:$0xff] %vm84, %v281
    %357 = vst.msk [vmem:[%s354 + $0x38] sm:$0xff] %vm84, %v286
    %358 = vst.msk [vmem:[%s354 + $0x50] sm:$0xff] %vm84, %v291
    %359 = vst.msk [vmem:[%s354 + $0x68] sm:$0xff] %vm84, %v296
    %360 = vst.msk [vmem:[%s354 + $0x80] sm:$0xff] %vm84, %v301
    %361 = vst.msk [vmem:[%s354 + $0x98] sm:$0xff] %vm84, %v306
    %362 = vst.msk [vmem:[%s354 + $0xb0] sm:$0xff] %vm84, %v311
    %363 = vst.msk [vmem:[%s354 + $0xf8] sm:$0xff] %vm84, %v316
    %364 = vst.msk [vmem:[%s354 + $0x110] sm:$0xff] %vm84, %v321
    %365 = vst.msk [vmem:[%s354 + $0x128] sm:$0xff] %vm84, %v326
    %366 = vst.msk [vmem:[%s354 + $0x140] sm:$0xff] %vm84, %v331
    %367 = vst.msk [vmem:[%s354 + $0x158] sm:$0xff] %vm84, %v336
    %368 = vst.msk [vmem:[%s354 + $0x170] sm:$0xff] %vm84, %v341
    %369 = vst.msk [vmem:[%s354 + $0x188] sm:$0xff] %vm84, %v346
    %370 = vst.msk [vmem:[%s354 + $0x1a0] sm:$0xff] %vm84, %v351
    %v371 = vld [vmem:[#allocation2 + $0x7] sm:$0xff]
    %v372 = vld [vmem:[#allocation2 + $0x1f] sm:$0xff]
    %v373 = vld [vmem:[#allocation2 + $0x37] sm:$0xff]
    %v374 = vld [vmem:[#allocation2 + $0x4f] sm:$0xff]
    %v375 = vld [vmem:[#allocation2 + $0x67] sm:$0xff]
    %v376 = vld [vmem:[#allocation2 + $0x7f] sm:$0xff]
    %v377 = vld [vmem:[#allocation2 + $0x97] sm:$0xff]
    %v378 = vld [vmem:[#allocation2 + $0xaf] sm:$0xff]
    %v379 = vld [vmem:[#allocation2 + $0xf7] sm:$0xff]
    %v380 = vld [vmem:[#allocation2 + $0x10f] sm:$0xff]
    %v381 = vld [vmem:[#allocation2 + $0x127] sm:$0xff]
    %v382 = vld [vmem:[#allocation2 + $0x13f] sm:$0xff]
    %v383 = vld [vmem:[#allocation2 + $0x157] sm:$0xff]
    %v384 = vld [vmem:[#allocation2 + $0x16f] sm:$0xff]
    %v385 = vld [vmem:[#allocation2 + $0x187] sm:$0xff]
    %v386 = vld [vmem:[#allocation2 + $0x19f] sm:$0xff]
    %v387 = vld [vmem:[#allocation5] sm:$0xff]
    %v388 = vld [vmem:[#allocation5 + $0x8] sm:$0xff]
    %v389 = vld [vmem:[#allocation5 + $0x10] sm:$0xff]
    %v390 = vld [vmem:[#allocation5 + $0x18] sm:$0xff]
    %v391 = vld [vmem:[#allocation5 + $0x20] sm:$0xff]
    %v392 = vld [vmem:[#allocation5 + $0x28] sm:$0xff]
    %v393 = vld [vmem:[#allocation5 + $0x30] sm:$0xff]
    %v394 = vld [vmem:[#allocation5 + $0x38] sm:$0xff]
    %v395 = vld [vmem:[#allocation2 + $0x8] sm:$0xff]
    %v396 = vld [vmem:[#allocation2 + $0x20] sm:$0xff]
    %v397 = vld [vmem:[#allocation2 + $0x38] sm:$0xff]
    %v398 = vld [vmem:[#allocation2 + $0x50] sm:$0xff]
    %v399 = vld [vmem:[#allocation2 + $0x68] sm:$0xff]
    %v400 = vld [vmem:[#allocation2 + $0x80] sm:$0xff]
    %v401 = vld [vmem:[#allocation2 + $0x98] sm:$0xff]
    %v402 = vld [vmem:[#allocation2 + $0xb0] sm:$0xff]
    %v403 = vld [vmem:[#allocation2 + $0xf8] sm:$0xff]
    %v404 = vld [vmem:[#allocation2 + $0x110] sm:$0xff]
    %v405 = vld [vmem:[#allocation2 + $0x128] sm:$0xff]
    %v406 = vld [vmem:[#allocation2 + $0x140] sm:$0xff]
    %v407 = vld [vmem:[#allocation2 + $0x158] sm:$0xff]
    %v408 = vld [vmem:[#allocation2 + $0x170] sm:$0xff]
    %v409 = vld [vmem:[#allocation2 + $0x188] sm:$0xff]
    %v410 = vld [vmem:[#allocation2 + $0x1a0] sm:$0xff]
    %s411 = scalar_lea.vmem [#allocation5], 64
    %v412 = vld [vmem:[%s411] sm:$0xff]
    %v413 = vld [vmem:[%s411 + $0x8] sm:$0xff]
    %v414 = vld [vmem:[%s411 + $0x10] sm:$0xff]
    %v415 = vld [vmem:[%s411 + $0x18] sm:$0xff]
    %v416 = vld [vmem:[%s411 + $0x20] sm:$0xff]
    %v417 = vld [vmem:[%s411 + $0x28] sm:$0xff]
    %v418 = vld [vmem:[%s411 + $0x30] sm:$0xff]
    %v419 = vld [vmem:[%s411 + $0x38] sm:$0xff]
    %v421 = vsel %vm84, %v395, 0
    %v424 = vsel %vm84, %v396, 0
    %v427 = vsel %vm84, %v397, 0
    %v430 = vsel %vm84, %v398, 0
    %v433 = vsel %vm84, %v399, 0
    %v436 = vsel %vm84, %v400, 0
    %v439 = vsel %vm84, %v401, 0
    %v442 = vsel %vm84, %v402, 0
    %v445 = vsel %vm84, %v403, 0
    %v448 = vsel %vm84, %v404, 0
    %v451 = vsel %vm84, %v405, 0
    %v454 = vsel %vm84, %v406, 0
    %v457 = vsel %vm84, %v407, 0
    %v460 = vsel %vm84, %v408, 0
    %v463 = vsel %vm84, %v409, 0
    %v466 = vsel %vm84, %v410, 0
    %468 = vmatprep.subr.mxu0 0.0
    %469 = vmatpush1.msra.mxu0 %v412
    %470 = vmatprep.subr.mxu0 0.0
    %471 = vmatpush1.msra.mxu0 %v413
    %472 = vmatprep.subr.mxu0 0.0
    %473 = vmatpush1.msra.mxu0 %v414
    %474 = vmatprep.subr.mxu0 0.0
    %475 = vmatpush1.msra.mxu0 %v415
    %476 = vmatprep.subr.mxu0 0.0
    %477 = vmatpush1.msra.mxu0 %v416
    %478 = vmatprep.subr.mxu0 0.0
    %479 = vmatpush1.msra.mxu0 %v417
    %480 = vmatprep.subr.mxu0 0.0
    %481 = vmatpush1.msra.mxu0 %v418
    %482 = vmatprep.subr.mxu0 0.0
    %483 = vmatpush1.msra.mxu0 %v419
    %484 = vmatprep.subr.mxu0 0.0
    %485 = vmatpush1.msra.mxu0 0.0
    %486 = vmatprep.subr.mxu0 0.0
    %487 = vmatpush1.msra.mxu0 0.0
    %488 = vmatprep.subr.mxu0 0.0
    %489 = vmatpush1.msra.mxu0 0.0
    %490 = vmatprep.subr.mxu0 0.0
    %491 = vmatpush1.msra.mxu0 0.0
    %492 = vmatprep.subr.mxu0 0.0
    %493 = vmatpush1.msra.mxu0 0.0
    %494 = vmatprep.subr.mxu0 0.0
    %495 = vmatpush1.msra.mxu0 0.0
    %496 = vmatprep.subr.mxu0 0.0
    %497 = vmatpush1.msra.mxu0 0.0
    %498 = vmatprep.subr.mxu0 0.0
    %499 = vmatpush1.msra.mxu0 0.0
    %500 = vmatprep.subr.mxu0 0.0
    %501 = vmatpush1.msra.mxu0 0.0
    %502 = vmatprep.subr.mxu0 0.0
    %503 = vmatpush1.msra.mxu0 0.0
    %504 = vmatprep.subr.mxu0 0.0
    %505 = vmatpush1.msra.mxu0 0.0
    %506 = vmatprep.subr.mxu0 0.0
    %507 = vmatpush1.msra.mxu0 0.0
    %508 = vmatprep.subr.mxu0 0.0
    %509 = vmatpush1.msra.mxu0 0.0
    %510 = vmatprep.subr.mxu0 0.0
    %511 = vmatpush1.msra.mxu0 0.0
    %512 = vmatprep.subr.mxu0 0.0
    %513 = vmatpush1.msra.mxu0 0.0
    %514 = vmatprep.subr.mxu0 0.0
    %515 = vmatpush1.msra.mxu0 0.0
    %516 = vmatprep.subr.mxu0 0.0
    %517 = vmatpush1.msra.mxu0 0.0
    %518 = vmatprep.subr.mxu0 0.0
    %519 = vmatpush1.msra.mxu0 0.0
    %520 = vmatprep.subr.mxu0 0.0
    %521 = vmatpush1.msra.mxu0 0.0
    %522 = vmatprep.subr.mxu0 0.0
    %523 = vmatpush1.msra.mxu0 0.0
    %524 = vmatprep.subr.mxu0 0.0
    %525 = vmatpush1.msra.mxu0 0.0
    %526 = vmatprep.subr.mxu0 0.0
    %527 = vmatpush1.msra.mxu0 0.0
    %528 = vmatprep.subr.mxu0 0.0
    %529 = vmatpush1.msra.mxu0 0.0
    %530 = vmatprep.subr.mxu0 0.0
    %531 = vmatpush1.msra.mxu0 0.0
    %532 = vmatprep.mubr.f32.mxu0 0.0
    %533 = vmatmul.mubr.f32.gmra.mrb[0].mxu0 %v421
    %v534 = vpop.f32.mrb[0].mxu0
    %v535 = vadd.f32 0.0, %v534
    %v536 = vpop.f32.mrb[0].mxu0
    %537 = vmatprep.mubr.f32.mxu0 0.0
    %538 = vmatmul.mubr.f32.gmra.mrb[0].mxu0 %v424
    %v539 = vpop.f32.mrb[0].mxu0
    %v540 = vadd.f32 0.0, %v539
    %v541 = vpop.f32.mrb[0].mxu0
    %542 = vmatprep.mubr.f32.mxu0 0.0
    %543 = vmatmul.mubr.f32.gmra.mrb[0].mxu0 %v427
    %v544 = vpop.f32.mrb[0].mxu0
    %v545 = vadd.f32 0.0, %v544
    %v546 = vpop.f32.mrb[0].mxu0
    %547 = vmatprep.mubr.f32.mxu0 0.0
    %548 = vmatmul.mubr.f32.gmra.mrb[0].mxu0 %v430
    %v549 = vpop.f32.mrb[0].mxu0
    %v550 = vadd.f32 0.0, %v549
    %v551 = vpop.f32.mrb[0].mxu0
    %552 = vmatprep.mubr.f32.mxu0 0.0
    %553 = vmatmul.mubr.f32.gmra.mrb[0].mxu0 %v433
    %v554 = vpop.f32.mrb[0].mxu0
    %v555 = vadd.f32 0.0, %v554
    %v556 = vpop.f32.mrb[0].mxu0
    %557 = vmatprep.mubr.f32.mxu0 0.0
    %558 = vmatmul.mubr.f32.gmra.mrb[0].mxu0 %v436
    %v559 = vpop.f32.mrb[0].mxu0
    %v560 = vadd.f32 0.0, %v559
    %v561 = vpop.f32.mrb[0].mxu0
    %562 = vmatprep.mubr.f32.mxu0 0.0
    %563 = vmatmul.mubr.f32.gmra.mrb[0].mxu0 %v439
    %v564 = vpop.f32.mrb[0].mxu0
    %v565 = vadd.f32 0.0, %v564
    %v566 = vpop.f32.mrb[0].mxu0
    %567 = vmatprep.mubr.f32.mxu0 0.0
    %568 = vmatmul.mubr.f32.gmra.mrb[0].mxu0 %v442
    %v569 = vpop.f32.mrb[0].mxu0
    %v570 = vadd.f32 0.0, %v569
    %v571 = vpop.f32.mrb[0].mxu0
    %572 = vmatprep.mubr.f32.mxu0 0.0
    %573 = vmatmul.mubr.f32.gmra.mrb[0].mxu0 %v445
    %v574 = vpop.f32.mrb[0].mxu0
    %v575 = vadd.f32 0.0, %v574
    %v576 = vpop.f32.mrb[0].mxu0
    %577 = vmatprep.mubr.f32.mxu0 0.0
    %578 = vmatmul.mubr.f32.gmra.mrb[0].mxu0 %v448
    %v579 = vpop.f32.mrb[0].mxu0
    %v580 = vadd.f32 0.0, %v579
    %v581 = vpop.f32.mrb[0].mxu0
    %582 = vmatprep.mubr.f32.mxu0 0.0
    %583 = vmatmul.mubr.f32.gmra.mrb[0].mxu0 %v451
    %v584 = vpop.f32.mrb[0].mxu0
    %v585 = vadd.f32 0.0, %v584
    %v586 = vpop.f32.mrb[0].mxu0
    %587 = vmatprep.mubr.f32.mxu0 0.0
    %588 = vmatmul.mubr.f32.gmra.mrb[0].mxu0 %v454
    %v589 = vpop.f32.mrb[0].mxu0
    %v590 = vadd.f32 0.0, %v589
    %v591 = vpop.f32.mrb[0].mxu0
    %592 = vmatprep.mubr.f32.mxu0 0.0
    %593 = vmatmul.mubr.f32.gmra.mrb[0].mxu0 %v457
    %v594 = vpop.f32.mrb[0].mxu0
    %v595 = vadd.f32 0.0, %v594
    %v596 = vpop.f32.mrb[0].mxu0
    %597 = vmatprep.mubr.f32.mxu0 0.0
    %598 = vmatmul.mubr.f32.gmra.mrb[0].mxu0 %v460
    %v599 = vpop.f32.mrb[0].mxu0
    %v600 = vadd.f32 0.0, %v599
    %v601 = vpop.f32.mrb[0].mxu0
    %602 = vmatprep.mubr.f32.mxu0 0.0
    %603 = vmatmul.mubr.f32.gmra.mrb[0].mxu0 %v463
    %v604 = vpop.f32.mrb[0].mxu0
    %v605 = vadd.f32 0.0, %v604
    %v606 = vpop.f32.mrb[0].mxu0
    %607 = vmatprep.mubr.f32.mxu0 0.0
    %608 = vmatmul.mubr.f32.gmra.mrb[0].mxu0 %v466
    %v609 = vpop.f32.mrb[0].mxu0
    %v610 = vadd.f32 0.0, %v609
    %v611 = vpop.f32.mrb[0].mxu0
    %612 = vdwg.mxu0
    %v614 = vsel %vm84, %v371, 0
    %v617 = vsel %vm84, %v372, 0
    %v620 = vsel %vm84, %v373, 0
    %v623 = vsel %vm84, %v374, 0
    %v626 = vsel %vm84, %v375, 0
    %v629 = vsel %vm84, %v376, 0
    %v632 = vsel %vm84, %v377, 0
    %v635 = vsel %vm84, %v378, 0
    %v638 = vsel %vm84, %v379, 0
    %v641 = vsel %vm84, %v380, 0
    %v644 = vsel %vm84, %v381, 0
    %v647 = vsel %vm84, %v382, 0
    %v650 = vsel %vm84, %v383, 0
    %v653 = vsel %vm84, %v384, 0
    %v656 = vsel %vm84, %v385, 0
    %v659 = vsel %vm84, %v386, 0
    %661 = vmatprep.subr.mxu0 0.0
    %662 = vmatpush1.msra.mxu0 %v387
    %663 = vmatprep.subr.mxu0 0.0
    %664 = vmatpush1.msra.mxu0 %v388
    %665 = vmatprep.subr.mxu0 0.0
    %666 = vmatpush1.msra.mxu0 %v389
    %667 = vmatprep.subr.mxu0 0.0
    %668 = vmatpush1.msra.mxu0 %v390
    %669 = vmatprep.subr.mxu0 0.0
    %670 = vmatpush1.msra.mxu0 %v391
    %671 = vmatprep.subr.mxu0 0.0
    %672 = vmatpush1.msra.mxu0 %v392
    %673 = vmatprep.subr.mxu0 0.0
    %674 = vmatpush1.msra.mxu0 %v393
    %675 = vmatprep.subr.mxu0 0.0
    %676 = vmatpush1.msra.mxu0 %v394
    %677 = vmatprep.subr.mxu0 0.0
    %678 = vmatpush1.msra.mxu0 0.0
    %679 = vmatprep.subr.mxu0 0.0
    %680 = vmatpush1.msra.mxu0 0.0
    %681 = vmatprep.subr.mxu0 0.0
    %682 = vmatpush1.msra.mxu0 0.0
    %683 = vmatprep.subr.mxu0 0.0
    %684 = vmatpush1.msra.mxu0 0.0
    %685 = vmatprep.subr.mxu0 0.0
    %686 = vmatpush1.msra.mxu0 0.0
    %687 = vmatprep.subr.mxu0 0.0
    %688 = vmatpush1.msra.mxu0 0.0
    %689 = vmatprep.subr.mxu0 0.0
    %690 = vmatpush1.msra.mxu0 0.0
    %691 = vmatprep.subr.mxu0 0.0
    %692 = vmatpush1.msra.mxu0 0.0
    %693 = vmatprep.subr.mxu0 0.0
    %694 = vmatpush1.msra.mxu0 0.0
    %695 = vmatprep.subr.mxu0 0.0
    %696 = vmatpush1.msra.mxu0 0.0
    %697 = vmatprep.subr.mxu0 0.0
    %698 = vmatpush1.msra.mxu0 0.0
    %699 = vmatprep.subr.mxu0 0.0
    %700 = vmatpush1.msra.mxu0 0.0
    %701 = vmatprep.subr.mxu0 0.0
    %702 = vmatpush1.msra.mxu0 0.0
    %703 = vmatprep.subr.mxu0 0.0
    %704 = vmatpush1.msra.mxu0 0.0
    %705 = vmatprep.subr.mxu0 0.0
    %706 = vmatpush1.msra.mxu0 0.0
    %707 = vmatprep.subr.mxu0 0.0
    %708 = vmatpush1.msra.mxu0 0.0
    %709 = vmatprep.subr.mxu0 0.0
    %710 = vmatpush1.msra.mxu0 0.0
    %711 = vmatprep.subr.mxu0 0.0
    %712 = vmatpush1.msra.mxu0 0.0
    %713 = vmatprep.subr.mxu0 0.0
    %714 = vmatpush1.msra.mxu0 0.0
    %715 = vmatprep.subr.mxu0 0.0
    %716 = vmatpush1.msra.mxu0 0.0
    %717 = vmatprep.subr.mxu0 0.0
    %718 = vmatpush1.msra.mxu0 0.0
    %719 = vmatprep.subr.mxu0 0.0
    %720 = vmatpush1.msra.mxu0 0.0
    %721 = vmatprep.subr.mxu0 0.0
    %722 = vmatpush1.msra.mxu0 0.0
    %723 = vmatprep.subr.mxu0 0.0
    %724 = vmatpush1.msra.mxu0 0.0
    %725 = vmatprep.mubr.f32.mxu0 0.0
    %726 = vmatmul.mubr.f32.gmra.mrb[0].mxu0 %v614
    %v727 = vpop.f32.mrb[0].mxu0
    %v728 = vadd.f32 %v535, %v727
    %v729 = vpop.f32.mrb[0].mxu0
    %730 = vmatprep.mubr.f32.mxu0 0.0
    %731 = vmatmul.mubr.f32.gmra.mrb[0].mxu0 %v617
    %v732 = vpop.f32.mrb[0].mxu0
    %v733 = vadd.f32 %v540, %v732
    %v734 = vpop.f32.mrb[0].mxu0
    %735 = vmatprep.mubr.f32.mxu0 0.0
    %736 = vmatmul.mubr.f32.gmra.mrb[0].mxu0 %v620
    %v737 = vpop.f32.mrb[0].mxu0
    %v738 = vadd.f32 %v545, %v737
    %v739 = vpop.f32.mrb[0].mxu0
    %740 = vmatprep.mubr.f32.mxu0 0.0
    %741 = vmatmul.mubr.f32.gmra.mrb[0].mxu0 %v623
    %v742 = vpop.f32.mrb[0].mxu0
    %v743 = vadd.f32 %v550, %v742
    %v744 = vpop.f32.mrb[0].mxu0
    %745 = vmatprep.mubr.f32.mxu0 0.0
    %746 = vmatmul.mubr.f32.gmra.mrb[0].mxu0 %v626
    %v747 = vpop.f32.mrb[0].mxu0
    %v748 = vadd.f32 %v555, %v747
    %v749 = vpop.f32.mrb[0].mxu0
    %750 = vmatprep.mubr.f32.mxu0 0.0
    %751 = vmatmul.mubr.f32.gmra.mrb[0].mxu0 %v629
    %v752 = vpop.f32.mrb[0].mxu0
    %v753 = vadd.f32 %v560, %v752
    %v754 = vpop.f32.mrb[0].mxu0
    %755 = vmatprep.mubr.f32.mxu0 0.0
    %756 = vmatmul.mubr.f32.gmra.mrb[0].mxu0 %v632
    %v757 = vpop.f32.mrb[0].mxu0
    %v758 = vadd.f32 %v565, %v757
    %v759 = vpop.f32.mrb[0].mxu0
    %760 = vmatprep.mubr.f32.mxu0 0.0
    %761 = vmatmul.mubr.f32.gmra.mrb[0].mxu0 %v635
    %v762 = vpop.f32.mrb[0].mxu0
    %v763 = vadd.f32 %v570, %v762
    %v764 = vpop.f32.mrb[0].mxu0
    %765 = vmatprep.mubr.f32.mxu0 0.0
    %766 = vmatmul.mubr.f32.gmra.mrb[0].mxu0 %v638
    %v767 = vpop.f32.mrb[0].mxu0
    %v768 = vadd.f32 %v575, %v767
    %v769 = vpop.f32.mrb[0].mxu0
    %770 = vmatprep.mubr.f32.mxu0 0.0
    %771 = vmatmul.mubr.f32.gmra.mrb[0].mxu0 %v641
    %v772 = vpop.f32.mrb[0].mxu0
    %v773 = vadd.f32 %v580, %v772
    %v774 = vpop.f32.mrb[0].mxu0
    %775 = vmatprep.mubr.f32.mxu0 0.0
    %776 = vmatmul.mubr.f32.gmra.mrb[0].mxu0 %v644
    %v777 = vpop.f32.mrb[0].mxu0
    %v778 = vadd.f32 %v585, %v777
    %v779 = vpop.f32.mrb[0].mxu0
    %780 = vmatprep.mubr.f32.mxu0 0.0
    %781 = vmatmul.mubr.f32.gmra.mrb[0].mxu0 %v647
    %v782 = vpop.f32.mrb[0].mxu0
    %v783 = vadd.f32 %v590, %v782
    %v784 = vpop.f32.mrb[0].mxu0
    %785 = vmatprep.mubr.f32.mxu0 0.0
    %786 = vmatmul.mubr.f32.gmra.mrb[0].mxu0 %v650
    %v787 = vpop.f32.mrb[0].mxu0
    %v788 = vadd.f32 %v595, %v787
    %v789 = vpop.f32.mrb[0].mxu0
    %790 = vmatprep.mubr.f32.mxu0 0.0
    %791 = vmatmul.mubr.f32.gmra.mrb[0].mxu0 %v653
    %v792 = vpop.f32.mrb[0].mxu0
    %v793 = vadd.f32 %v600, %v792
    %v794 = vpop.f32.mrb[0].mxu0
    %795 = vmatprep.mubr.f32.mxu0 0.0
    %796 = vmatmul.mubr.f32.gmra.mrb[0].mxu0 %v656
    %v797 = vpop.f32.mrb[0].mxu0
    %v798 = vadd.f32 %v605, %v797
    %v799 = vpop.f32.mrb[0].mxu0
    %800 = vmatprep.mubr.f32.mxu0 0.0
    %801 = vmatmul.mubr.f32.gmra.mrb[0].mxu0 %v659
    %v802 = vpop.f32.mrb[0].mxu0
    %v803 = vadd.f32 %v610, %v802
    %v804 = vpop.f32.mrb[0].mxu0
    %805 = vdwg.mxu0
    %v806 = vld [vmem:[#allocation2 + $0x9] sm:$0xff]
    %v807 = vld [vmem:[#allocation2 + $0x21] sm:$0xff]
    %v808 = vld [vmem:[#allocation2 + $0x39] sm:$0xff]
    %v809 = vld [vmem:[#allocation2 + $0x51] sm:$0xff]
    %v810 = vld [vmem:[#allocation2 + $0x69] sm:$0xff]
    %v811 = vld [vmem:[#allocation2 + $0x81] sm:$0xff]
    %v812 = vld [vmem:[#allocation2 + $0x99] sm:$0xff]
    %v813 = vld [vmem:[#allocation2 + $0xb1] sm:$0xff]
    %v814 = vld [vmem:[#allocation2 + $0xf9] sm:$0xff]
    %v815 = vld [vmem:[#allocation2 + $0x111] sm:$0xff]
    %v816 = vld [vmem:[#allocation2 + $0x129] sm:$0xff]
    %v817 = vld [vmem:[#allocation2 + $0x141] sm:$0xff]
    %v818 = vld [vmem:[#allocation2 + $0x159] sm:$0xff]
    %v819 = vld [vmem:[#allocation2 + $0x171] sm:$0xff]
    %v820 = vld [vmem:[#allocation2 + $0x189] sm:$0xff]
    %v821 = vld [vmem:[#allocation2 + $0x1a1] sm:$0xff]
    %s822 = scalar_lea.vmem [#allocation5], 128
    %v823 = vld [vmem:[%s822] sm:$0xff]
    %v824 = vld [vmem:[%s822 + $0x8] sm:$0xff]
    %v825 = vld [vmem:[%s822 + $0x10] sm:$0xff]
    %v826 = vld [vmem:[%s822 + $0x18] sm:$0xff]
    %v827 = vld [vmem:[%s822 + $0x20] sm:$0xff]
    %v828 = vld [vmem:[%s822 + $0x28] sm:$0xff]
    %v829 = vld [vmem:[%s822 + $0x30] sm:$0xff]
    %v830 = vld [vmem:[%s822 + $0x38] sm:$0xff]
    %v832 = vsel %vm84, %v806, 0
    %v835 = vsel %vm84, %v807, 0
    %v838 = vsel %vm84, %v808, 0
    %v841 = vsel %vm84, %v809, 0
    %v844 = vsel %vm84, %v810, 0
    %v847 = vsel %vm84, %v811, 0
    %v850 = vsel %vm84, %v812, 0
    %v853 = vsel %vm84, %v813, 0
    %v856 = vsel %vm84, %v814, 0
    %v859 = vsel %vm84, %v815, 0
    %v862 = vsel %vm84, %v816, 0
    %v865 = vsel %vm84, %v817, 0
    %v868 = vsel %vm84, %v818, 0
    %v871 = vsel %vm84, %v819, 0
    %v874 = vsel %vm84, %v820, 0
    %v877 = vsel %vm84, %v821, 0
    %879 = vmatprep.subr.mxu0 0.0
    %880 = vmatpush1.msra.mxu0 %v823
    %881 = vmatprep.subr.mxu0 0.0
    %882 = vmatpush1.msra.mxu0 %v824
    %883 = vmatprep.subr.mxu0 0.0
    %884 = vmatpush1.msra.mxu0 %v825
    %885 = vmatprep.subr.mxu0 0.0
    %886 = vmatpush1.msra.mxu0 %v826
    %887 = vmatprep.subr.mxu0 0.0
    %888 = vmatpush1.msra.mxu0 %v827
    %889 = vmatprep.subr.mxu0 0.0
    %890 = vmatpush1.msra.mxu0 %v828
    %891 = vmatprep.subr.mxu0 0.0
    %892 = vmatpush1.msra.mxu0 %v829
    %893 = vmatprep.subr.mxu0 0.0
    %894 = vmatpush1.msra.mxu0 %v830
    %895 = vmatprep.subr.mxu0 0.0
    %896 = vmatpush1.msra.mxu0 0.0
    %897 = vmatprep.subr.mxu0 0.0
    %898 = vmatpush1.msra.mxu0 0.0
    %899 = vmatprep.subr.mxu0 0.0
    %900 = vmatpush1.msra.mxu0 0.0
    %901 = vmatprep.subr.mxu0 0.0
    %902 = vmatpush1.msra.mxu0 0.0
    %903 = vmatprep.subr.mxu0 0.0
    %904 = vmatpush1.msra.mxu0 0.0
    %905 = vmatprep.subr.mxu0 0.0
    %906 = vmatpush1.msra.mxu0 0.0
    %907 = vmatprep.subr.mxu0 0.0
    %908 = vmatpush1.msra.mxu0 0.0
    %909 = vmatprep.subr.mxu0 0.0
    %910 = vmatpush1.msra.mxu0 0.0
    %911 = vmatprep.subr.mxu0 0.0
    %912 = vmatpush1.msra.mxu0 0.0
    %913 = vmatprep.subr.mxu0 0.0
    %914 = vmatpush1.msra.mxu0 0.0
    %915 = vmatprep.subr.mxu0 0.0
    %916 = vmatpush1.msra.mxu0 0.0
    %917 = vmatprep.subr.mxu0 0.0
    %918 = vmatpush1.msra.mxu0 0.0
    %919 = vmatprep.subr.mxu0 0.0
    %920 = vmatpush1.msra.mxu0 0.0
    %921 = vmatprep.subr.mxu0 0.0
    %922 = vmatpush1.msra.mxu0 0.0
    %923 = vmatprep.subr.mxu0 0.0
    %924 = vmatpush1.msra.mxu0 0.0
    %925 = vmatprep.subr.mxu0 0.0
    %926 = vmatpush1.msra.mxu0 0.0
    %927 = vmatprep.subr.mxu0 0.0
    %928 = vmatpush1.msra.mxu0 0.0
    %929 = vmatprep.subr.mxu0 0.0
    %930 = vmatpush1.msra.mxu0 0.0
    %931 = vmatprep.subr.mxu0 0.0
    %932 = vmatpush1.msra.mxu0 0.0
    %933 = vmatprep.subr.mxu0 0.0
    %934 = vmatpush1.msra.mxu0 0.0
    %935 = vmatprep.subr.mxu0 0.0
    %936 = vmatpush1.msra.mxu0 0.0
    %937 = vmatprep.subr.mxu0 0.0
    %938 = vmatpush1.msra.mxu0 0.0
    %939 = vmatprep.subr.mxu0 0.0
    %940 = vmatpush1.msra.mxu0 0.0
    %941 = vmatprep.subr.mxu0 0.0
    %942 = vmatpush1.msra.mxu0 0.0
    %943 = vmatprep.mubr.f32.mxu0 0.0
    %944 = vmatmul.mubr.f32.gmra.mrb[0].mxu0 %v832
    %v945 = vpop.f32.mrb[0].mxu0
    %v946 = vadd.f32 0.0, %v945
    %v947 = vpop.f32.mrb[0].mxu0
    %948 = vmatprep.mubr.f32.mxu0 0.0
    %949 = vmatmul.mubr.f32.gmra.mrb[0].mxu0 %v835
    %v950 = vpop.f32.mrb[0].mxu0
    %v951 = vadd.f32 0.0, %v950
    %v952 = vpop.f32.mrb[0].mxu0
    %953 = vmatprep.mubr.f32.mxu0 0.0
    %954 = vmatmul.mubr.f32.gmra.mrb[0].mxu0 %v838
    %v955 = vpop.f32.mrb[0].mxu0
    %v956 = vadd.f32 0.0, %v955
    %v957 = vpop.f32.mrb[0].mxu0
    %958 = vmatprep.mubr.f32.mxu0 0.0
    %959 = vmatmul.mubr.f32.gmra.mrb[0].mxu0 %v841
    %v960 = vpop.f32.mrb[0].mxu0
    %v961 = vadd.f32 0.0, %v960
    %v962 = vpop.f32.mrb[0].mxu0
    %963 = vmatprep.mubr.f32.mxu0 0.0
    %964 = vmatmul.mubr.f32.gmra.mrb[0].mxu0 %v844
    %v965 = vpop.f32.mrb[0].mxu0
    %v966 = vadd.f32 0.0, %v965
    %v967 = vpop.f32.mrb[0].mxu0
    %968 = vmatprep.mubr.f32.mxu0 0.0
    %969 = vmatmul.mubr.f32.gmra.mrb[0].mxu0 %v847
    %v970 = vpop.f32.mrb[0].mxu0
    %v971 = vadd.f32 0.0, %v970
    %v972 = vpop.f32.mrb[0].mxu0
    %973 = vmatprep.mubr.f32.mxu0 0.0
    %974 = vmatmul.mubr.f32.gmra.mrb[0].mxu0 %v850
    %v975 = vpop.f32.mrb[0].mxu0
    %v976 = vadd.f32 0.0, %v975
    %v977 = vpop.f32.mrb[0].mxu0
    %978 = vmatprep.mubr.f32.mxu0 0.0
    %979 = vmatmul.mubr.f32.gmra.mrb[0].mxu0 %v853
    %v980 = vpop.f32.mrb[0].mxu0
    %v981 = vadd.f32 0.0, %v980
    %v982 = vpop.f32.mrb[0].mxu0
    %983 = vmatprep.mubr.f32.mxu0 0.0
    %984 = vmatmul.mubr.f32.gmra.mrb[0].mxu0 %v856
    %v985 = vpop.f32.mrb[0].mxu0
    %v986 = vadd.f32 0.0, %v985
    %v987 = vpop.f32.mrb[0].mxu0
    %988 = vmatprep.mubr.f32.mxu0 0.0
    %989 = vmatmul.mubr.f32.gmra.mrb[0].mxu0 %v859
    %v990 = vpop.f32.mrb[0].mxu0
    %v991 = vadd.f32 0.0, %v990
    %v992 = vpop.f32.mrb[0].mxu0
    %993 = vmatprep.mubr.f32.mxu0 0.0
    %994 = vmatmul.mubr.f32.gmra.mrb[0].mxu0 %v862
    %v995 = vpop.f32.mrb[0].mxu0
    %v996 = vadd.f32 0.0, %v995
    %v997 = vpop.f32.mrb[0].mxu0
    %998 = vmatprep.mubr.f32.mxu0 0.0
    %999 = vmatmul.mubr.f32.gmra.mrb[0].mxu0 %v865
    %v1000 = vpop.f32.mrb[0].mxu0
    %v1001 = vadd.f32 0.0, %v1000
    %v1002 = vpop.f32.mrb[0].mxu0
    %1003 = vmatprep.mubr.f32.mxu0 0.0
    %1004 = vmatmul.mubr.f32.gmra.mrb[0].mxu0 %v868
    %v1005 = vpop.f32.mrb[0].mxu0
    %v1006 = vadd.f32 0.0, %v1005
    %v1007 = vpop.f32.mrb[0].mxu0
    %1008 = vmatprep.mubr.f32.mxu0 0.0
    %1009 = vmatmul.mubr.f32.gmra.mrb[0].mxu0 %v871
    %v1010 = vpop.f32.mrb[0].mxu0
    %v1011 = vadd.f32 0.0, %v1010
    %v1012 = vpop.f32.mrb[0].mxu0
    %1013 = vmatprep.mubr.f32.mxu0 0.0
    %1014 = vmatmul.mubr.f32.gmra.mrb[0].mxu0 %v874
    %v1015 = vpop.f32.mrb[0].mxu0
    %v1016 = vadd.f32 0.0, %v1015
    %v1017 = vpop.f32.mrb[0].mxu0
    %1018 = vmatprep.mubr.f32.mxu0 0.0
    %1019 = vmatmul.mubr.f32.gmra.mrb[0].mxu0 %v877
    %v1020 = vpop.f32.mrb[0].mxu0
    %v1021 = vadd.f32 0.0, %v1020
    %v1022 = vpop.f32.mrb[0].mxu0
    %1023 = vdwg.mxu0
    %v1024 = vadd.f32 %v728, %v946
    %v1025 = vadd.f32 %v733, %v951
    %v1026 = vadd.f32 %v738, %v956
    %v1027 = vadd.f32 %v743, %v961
    %v1028 = vadd.f32 %v748, %v966
    %v1029 = vadd.f32 %v753, %v971
    %v1030 = vadd.f32 %v758, %v976
    %v1031 = vadd.f32 %v763, %v981
    %v1032 = vadd.f32 %v768, %v986
    %v1033 = vadd.f32 %v773, %v991
    %v1034 = vadd.f32 %v778, %v996
    %v1035 = vadd.f32 %v783, %v1001
    %v1036 = vadd.f32 %v788, %v1006
    %v1037 = vadd.f32 %v793, %v1011
    %v1038 = vadd.f32 %v798, %v1016
    %v1039 = vadd.f32 %v803, %v1021
    %v1040 = vld [vmem:[%s354 + $0x7] sm:$0xff]
    %v1041 = vld [vmem:[%s354 + $0x1f] sm:$0xff]
    %v1042 = vld [vmem:[%s354 + $0x37] sm:$0xff]
    %v1043 = vld [vmem:[%s354 + $0x4f] sm:$0xff]
    %v1044 = vld [vmem:[%s354 + $0x67] sm:$0xff]
    %v1045 = vld [vmem:[%s354 + $0x7f] sm:$0xff]
    %v1046 = vld [vmem:[%s354 + $0x97] sm:$0xff]
    %v1047 = vld [vmem:[%s354 + $0xaf] sm:$0xff]
    %v1048 = vld [vmem:[%s354 + $0xf7] sm:$0xff]
    %v1049 = vld [vmem:[%s354 + $0x10f] sm:$0xff]
    %v1050 = vld [vmem:[%s354 + $0x127] sm:$0xff]
    %v1051 = vld [vmem:[%s354 + $0x13f] sm:$0xff]
    %v1052 = vld [vmem:[%s354 + $0x157] sm:$0xff]
    %v1053 = vld [vmem:[%s354 + $0x16f] sm:$0xff]
    %v1054 = vld [vmem:[%s354 + $0x187] sm:$0xff]
    %v1055 = vld [vmem:[%s354 + $0x19f] sm:$0xff]
    %s1056 = scalar_lea.vmem [#allocation5], 192
    %v1057 = vld [vmem:[%s1056] sm:$0xff]
    %v1058 = vld [vmem:[%s1056 + $0x8] sm:$0xff]
    %v1059 = vld [vmem:[%s1056 + $0x10] sm:$0xff]
    %v1060 = vld [vmem:[%s1056 + $0x18] sm:$0xff]
    %v1061 = vld [vmem:[%s1056 + $0x20] sm:$0xff]
    %v1062 = vld [vmem:[%s1056 + $0x28] sm:$0xff]
    %v1063 = vld [vmem:[%s1056 + $0x30] sm:$0xff]
    %v1064 = vld [vmem:[%s1056 + $0x38] sm:$0xff]
    %v1066 = vsel %vm84, %v1040, 0
    %v1069 = vsel %vm84, %v1041, 0
    %v1072 = vsel %vm84, %v1042, 0
    %v1075 = vsel %vm84, %v1043, 0
    %v1078 = vsel %vm84, %v1044, 0
    %v1081 = vsel %vm84, %v1045, 0
    %v1084 = vsel %vm84, %v1046, 0
    %v1087 = vsel %vm84, %v1047, 0
    %v1090 = vsel %vm84, %v1048, 0
    %v1093 = vsel %vm84, %v1049, 0
    %v1096 = vsel %vm84, %v1050, 0
    %v1099 = vsel %vm84, %v1051, 0
    %v1102 = vsel %vm84, %v1052, 0
    %v1105 = vsel %vm84, %v1053, 0
    %v1108 = vsel %vm84, %v1054, 0
    %v1111 = vsel %vm84, %v1055, 0
    %1113 = vmatprep.subr.mxu0 0.0
    %1114 = vmatpush1.msra.mxu0 %v1057
    %1115 = vmatprep.subr.mxu0 0.0
    %1116 = vmatpush1.msra.mxu0 %v1058
    %1117 = vmatprep.subr.mxu0 0.0
    %1118 = vmatpush1.msra.mxu0 %v1059
    %1119 = vmatprep.subr.mxu0 0.0
    %1120 = vmatpush1.msra.mxu0 %v1060
    %1121 = vmatprep.subr.mxu0 0.0
    %1122 = vmatpush1.msra.mxu0 %v1061
    %1123 = vmatprep.subr.mxu0 0.0
    %1124 = vmatpush1.msra.mxu0 %v1062
    %1125 = vmatprep.subr.mxu0 0.0
    %1126 = vmatpush1.msra.mxu0 %v1063
    %1127 = vmatprep.subr.mxu0 0.0
    %1128 = vmatpush1.msra.mxu0 %v1064
    %1129 = vmatprep.subr.mxu0 0.0
    %1130 = vmatpush1.msra.mxu0 0.0
    %1131 = vmatprep.subr.mxu0 0.0
    %1132 = vmatpush1.msra.mxu0 0.0
    %1133 = vmatprep.subr.mxu0 0.0
    %1134 = vmatpush1.msra.mxu0 0.0
    %1135 = vmatprep.subr.mxu0 0.0
    %1136 = vmatpush1.msra.mxu0 0.0
    %1137 = vmatprep.subr.mxu0 0.0
    %1138 = vmatpush1.msra.mxu0 0.0
    %1139 = vmatprep.subr.mxu0 0.0
    %1140 = vmatpush1.msra.mxu0 0.0
    %1141 = vmatprep.subr.mxu0 0.0
    %1142 = vmatpush1.msra.mxu0 0.0
    %1143 = vmatprep.subr.mxu0 0.0
    %1144 = vmatpush1.msra.mxu0 0.0
    %1145 = vmatprep.subr.mxu0 0.0
    %1146 = vmatpush1.msra.mxu0 0.0
    %1147 = vmatprep.subr.mxu0 0.0
    %1148 = vmatpush1.msra.mxu0 0.0
    %1149 = vmatprep.subr.mxu0 0.0
    %1150 = vmatpush1.msra.mxu0 0.0
    %1151 = vmatprep.subr.mxu0 0.0
    %1152 = vmatpush1.msra.mxu0 0.0
    %1153 = vmatprep.subr.mxu0 0.0
    %1154 = vmatpush1.msra.mxu0 0.0
    %1155 = vmatprep.subr.mxu0 0.0
    %1156 = vmatpush1.msra.mxu0 0.0
    %1157 = vmatprep.subr.mxu0 0.0
    %1158 = vmatpush1.msra.mxu0 0.0
    %1159 = vmatprep.subr.mxu0 0.0
    %1160 = vmatpush1.msra.mxu0 0.0
    %1161 = vmatprep.subr.mxu0 0.0
    %1162 = vmatpush1.msra.mxu0 0.0
    %1163 = vmatprep.subr.mxu0 0.0
    %1164 = vmatpush1.msra.mxu0 0.0
    %1165 = vmatprep.subr.mxu0 0.0
    %1166 = vmatpush1.msra.mxu0 0.0
    %1167 = vmatprep.subr.mxu0 0.0
    %1168 = vmatpush1.msra.mxu0 0.0
    %1169 = vmatprep.subr.mxu0 0.0
    %1170 = vmatpush1.msra.mxu0 0.0
    %1171 = vmatprep.subr.mxu0 0.0
    %1172 = vmatpush1.msra.mxu0 0.0
    %1173 = vmatprep.subr.mxu0 0.0
    %1174 = vmatpush1.msra.mxu0 0.0
    %1175 = vmatprep.subr.mxu0 0.0
    %1176 = vmatpush1.msra.mxu0 0.0
    %1177 = vmatprep.mubr.f32.mxu0 0.0
    %1178 = vmatmul.mubr.f32.gmra.mrb[0].mxu0 %v1066
    %v1179 = vpop.f32.mrb[0].mxu0
    %v1180 = vadd.f32 0.0, %v1179
    %v1181 = vpop.f32.mrb[0].mxu0
    %1182 = vmatprep.mubr.f32.mxu0 0.0
    %1183 = vmatmul.mubr.f32.gmra.mrb[0].mxu0 %v1069
    %v1184 = vpop.f32.mrb[0].mxu0
    %v1185 = vadd.f32 0.0, %v1184
    %v1186 = vpop.f32.mrb[0].mxu0
    %1187 = vmatprep.mubr.f32.mxu0 0.0
    %1188 = vmatmul.mubr.f32.gmra.mrb[0].mxu0 %v1072
    %v1189 = vpop.f32.mrb[0].mxu0
    %v1190 = vadd.f32 0.0, %v1189
    %v1191 = vpop.f32.mrb[0].mxu0
    %1192 = vmatprep.mubr.f32.mxu0 0.0
    %1193 = vmatmul.mubr.f32.gmra.mrb[0].mxu0 %v1075
    %v1194 = vpop.f32.mrb[0].mxu0
    %v1195 = vadd.f32 0.0, %v1194
    %v1196 = vpop.f32.mrb[0].mxu0
    %1197 = vmatprep.mubr.f32.mxu0 0.0
    %1198 = vmatmul.mubr.f32.gmra.mrb[0].mxu0 %v1078
    %v1199 = vpop.f32.mrb[0].mxu0
    %v1200 = vadd.f32 0.0, %v1199
    %v1201 = vpop.f32.mrb[0].mxu0
    %1202 = vmatprep.mubr.f32.mxu0 0.0
    %1203 = vmatmul.mubr.f32.gmra.mrb[0].mxu0 %v1081
    %v1204 = vpop.f32.mrb[0].mxu0
    %v1205 = vadd.f32 0.0, %v1204
    %v1206 = vpop.f32.mrb[0].mxu0
    %1207 = vmatprep.mubr.f32.mxu0 0.0
    %1208 = vmatmul.mubr.f32.gmra.mrb[0].mxu0 %v1084
    %v1209 = vpop.f32.mrb[0].mxu0
    %v1210 = vadd.f32 0.0, %v1209
    %v1211 = vpop.f32.mrb[0].mxu0
    %1212 = vmatprep.mubr.f32.mxu0 0.0
    %1213 = vmatmul.mubr.f32.gmra.mrb[0].mxu0 %v1087
    %v1214 = vpop.f32.mrb[0].mxu0
    %v1215 = vadd.f32 0.0, %v1214
    %v1216 = vpop.f32.mrb[0].mxu0
    %1217 = vmatprep.mubr.f32.mxu0 0.0
    %1218 = vmatmul.mubr.f32.gmra.mrb[0].mxu0 %v1090
    %v1219 = vpop.f32.mrb[0].mxu0
    %v1220 = vadd.f32 0.0, %v1219
    %v1221 = vpop.f32.mrb[0].mxu0
    %1222 = vmatprep.mubr.f32.mxu0 0.0
    %1223 = vmatmul.mubr.f32.gmra.mrb[0].mxu0 %v1093
    %v1224 = vpop.f32.mrb[0].mxu0
    %v1225 = vadd.f32 0.0, %v1224
    %v1226 = vpop.f32.mrb[0].mxu0
    %1227 = vmatprep.mubr.f32.mxu0 0.0
    %1228 = vmatmul.mubr.f32.gmra.mrb[0].mxu0 %v1096
    %v1229 = vpop.f32.mrb[0].mxu0
    %v1230 = vadd.f32 0.0, %v1229
    %v1231 = vpop.f32.mrb[0].mxu0
    %1232 = vmatprep.mubr.f32.mxu0 0.0
    %1233 = vmatmul.mubr.f32.gmra.mrb[0].mxu0 %v1099
    %v1234 = vpop.f32.mrb[0].mxu0
    %v1235 = vadd.f32 0.0, %v1234
    %v1236 = vpop.f32.mrb[0].mxu0
    %1237 = vmatprep.mubr.f32.mxu0 0.0
    %1238 = vmatmul.mubr.f32.gmra.mrb[0].mxu0 %v1102
    %v1239 = vpop.f32.mrb[0].mxu0
    %v1240 = vadd.f32 0.0, %v1239
    %v1241 = vpop.f32.mrb[0].mxu0
    %1242 = vmatprep.mubr.f32.mxu0 0.0
    %1243 = vmatmul.mubr.f32.gmra.mrb[0].mxu0 %v1105
    %v1244 = vpop.f32.mrb[0].mxu0
    %v1245 = vadd.f32 0.0, %v1244
    %v1246 = vpop.f32.mrb[0].mxu0
    %1247 = vmatprep.mubr.f32.mxu0 0.0
    %1248 = vmatmul.mubr.f32.gmra.mrb[0].mxu0 %v1108
    %v1249 = vpop.f32.mrb[0].mxu0
    %v1250 = vadd.f32 0.0, %v1249
    %v1251 = vpop.f32.mrb[0].mxu0
    %1252 = vmatprep.mubr.f32.mxu0 0.0
    %1253 = vmatmul.mubr.f32.gmra.mrb[0].mxu0 %v1111
    %v1254 = vpop.f32.mrb[0].mxu0
    %v1255 = vadd.f32 0.0, %v1254
    %v1256 = vpop.f32.mrb[0].mxu0
    %1257 = vdwg.mxu0
    %v1258 = vadd.f32 %v1024, %v1180
    %v1259 = vadd.f32 %v1025, %v1185
    %v1260 = vadd.f32 %v1026, %v1190
    %v1261 = vadd.f32 %v1027, %v1195
    %v1262 = vadd.f32 %v1028, %v1200
    %v1263 = vadd.f32 %v1029, %v1205
    %v1264 = vadd.f32 %v1030, %v1210
    %v1265 = vadd.f32 %v1031, %v1215
    %v1266 = vadd.f32 %v1032, %v1220
    %v1267 = vadd.f32 %v1033, %v1225
    %v1268 = vadd.f32 %v1034, %v1230
    %v1269 = vadd.f32 %v1035, %v1235
    %v1270 = vadd.f32 %v1036, %v1240
    %v1271 = vadd.f32 %v1037, %v1245
    %v1272 = vadd.f32 %v1038, %v1250
    %v1273 = vadd.f32 %v1039, %v1255
    %v1274 = vld [vmem:[%s354 + $0x8] sm:$0xff]
    %v1275 = vld [vmem:[%s354 + $0x20] sm:$0xff]
    %v1276 = vld [vmem:[%s354 + $0x38] sm:$0xff]
    %v1277 = vld [vmem:[%s354 + $0x50] sm:$0xff]
    %v1278 = vld [vmem:[%s354 + $0x68] sm:$0xff]
    %v1279 = vld [vmem:[%s354 + $0x80] sm:$0xff]
    %v1280 = vld [vmem:[%s354 + $0x98] sm:$0xff]
    %v1281 = vld [vmem:[%s354 + $0xb0] sm:$0xff]
    %v1282 = vld [vmem:[%s354 + $0xf8] sm:$0xff]
    %v1283 = vld [vmem:[%s354 + $0x110] sm:$0xff]
    %v1284 = vld [vmem:[%s354 + $0x128] sm:$0xff]
    %v1285 = vld [vmem:[%s354 + $0x140] sm:$0xff]
    %v1286 = vld [vmem:[%s354 + $0x158] sm:$0xff]
    %v1287 = vld [vmem:[%s354 + $0x170] sm:$0xff]
    %v1288 = vld [vmem:[%s354 + $0x188] sm:$0xff]
    %v1289 = vld [vmem:[%s354 + $0x1a0] sm:$0xff]
    %s1290 = scalar_lea.vmem [#allocation5], 256
    %v1291 = vld [vmem:[%s1290] sm:$0xff]
    %v1292 = vld [vmem:[%s1290 + $0x8] sm:$0xff]
    %v1293 = vld [vmem:[%s1290 + $0x10] sm:$0xff]
    %v1294 = vld [vmem:[%s1290 + $0x18] sm:$0xff]
    %v1295 = vld [vmem:[%s1290 + $0x20] sm:$0xff]
    %v1296 = vld [vmem:[%s1290 + $0x28] sm:$0xff]
    %v1297 = vld [vmem:[%s1290 + $0x30] sm:$0xff]
    %v1298 = vld [vmem:[%s1290 + $0x38] sm:$0xff]
    %v1300 = vsel %vm84, %v1274, 0
    %v1303 = vsel %vm84, %v1275, 0
    %v1306 = vsel %vm84, %v1276, 0
    %v1309 = vsel %vm84, %v1277, 0
    %v1312 = vsel %vm84, %v1278, 0
    %v1315 = vsel %vm84, %v1279, 0
    %v1318 = vsel %vm84, %v1280, 0
    %v1321 = vsel %vm84, %v1281, 0
    %v1324 = vsel %vm84, %v1282, 0
    %v1327 = vsel %vm84, %v1283, 0
    %v1330 = vsel %vm84, %v1284, 0
    %v1333 = vsel %vm84, %v1285, 0
    %v1336 = vsel %vm84, %v1286, 0
    %v1339 = vsel %vm84, %v1287, 0
    %v1342 = vsel %vm84, %v1288, 0
    %v1345 = vsel %vm84, %v1289, 0
    %1347 = vmatprep.subr.mxu0 0.0
    %1348 = vmatpush1.msra.mxu0 %v1291
    %1349 = vmatprep.subr.mxu0 0.0
    %1350 = vmatpush1.msra.mxu0 %v1292
    %1351 = vmatprep.subr.mxu0 0.0
    %1352 = vmatpush1.msra.mxu0 %v1293
    %1353 = vmatprep.subr.mxu0 0.0
    %1354 = vmatpush1.msra.mxu0 %v1294
    %1355 = vmatprep.subr.mxu0 0.0
    %1356 = vmatpush1.msra.mxu0 %v1295
    %1357 = vmatprep.subr.mxu0 0.0
    %1358 = vmatpush1.msra.mxu0 %v1296
    %1359 = vmatprep.subr.mxu0 0.0
    %1360 = vmatpush1.msra.mxu0 %v1297
    %1361 = vmatprep.subr.mxu0 0.0
    %1362 = vmatpush1.msra.mxu0 %v1298
    %1363 = vmatprep.subr.mxu0 0.0
    %1364 = vmatpush1.msra.mxu0 0.0
    %1365 = vmatprep.subr.mxu0 0.0
    %1366 = vmatpush1.msra.mxu0 0.0
    %1367 = vmatprep.subr.mxu0 0.0
    %1368 = vmatpush1.msra.mxu0 0.0
    %1369 = vmatprep.subr.mxu0 0.0
    %1370 = vmatpush1.msra.mxu0 0.0
    %1371 = vmatprep.subr.mxu0 0.0
    %1372 = vmatpush1.msra.mxu0 0.0
    %1373 = vmatprep.subr.mxu0 0.0
    %1374 = vmatpush1.msra.mxu0 0.0
    %1375 = vmatprep.subr.mxu0 0.0
    %1376 = vmatpush1.msra.mxu0 0.0
    %1377 = vmatprep.subr.mxu0 0.0
    %1378 = vmatpush1.msra.mxu0 0.0
    %1379 = vmatprep.subr.mxu0 0.0
    %1380 = vmatpush1.msra.mxu0 0.0
    %1381 = vmatprep.subr.mxu0 0.0
    %1382 = vmatpush1.msra.mxu0 0.0
    %1383 = vmatprep.subr.mxu0 0.0
    %1384 = vmatpush1.msra.mxu0 0.0
    %1385 = vmatprep.subr.mxu0 0.0
    %1386 = vmatpush1.msra.mxu0 0.0
    %1387 = vmatprep.subr.mxu0 0.0
    %1388 = vmatpush1.msra.mxu0 0.0
    %1389 = vmatprep.subr.mxu0 0.0
    %1390 = vmatpush1.msra.mxu0 0.0
    %1391 = vmatprep.subr.mxu0 0.0
    %1392 = vmatpush1.msra.mxu0 0.0
    %1393 = vmatprep.subr.mxu0 0.0
    %1394 = vmatpush1.msra.mxu0 0.0
    %1395 = vmatprep.subr.mxu0 0.0
    %1396 = vmatpush1.msra.mxu0 0.0
    %1397 = vmatprep.subr.mxu0 0.0
    %1398 = vmatpush1.msra.mxu0 0.0
    %1399 = vmatprep.subr.mxu0 0.0
    %1400 = vmatpush1.msra.mxu0 0.0
    %1401 = vmatprep.subr.mxu0 0.0
    %1402 = vmatpush1.msra.mxu0 0.0
    %1403 = vmatprep.subr.mxu0 0.0
    %1404 = vmatpush1.msra.mxu0 0.0
    %1405 = vmatprep.subr.mxu0 0.0
    %1406 = vmatpush1.msra.mxu0 0.0
    %1407 = vmatprep.subr.mxu0 0.0
    %1408 = vmatpush1.msra.mxu0 0.0
    %1409 = vmatprep.subr.mxu0 0.0
    %1410 = vmatpush1.msra.mxu0 0.0
    %1411 = vmatprep.mubr.f32.mxu0 0.0
    %1412 = vmatmul.mubr.f32.gmra.mrb[0].mxu0 %v1300
    %v1413 = vpop.f32.mrb[0].mxu0
    %v1414 = vadd.f32 0.0, %v1413
    %v1415 = vpop.f32.mrb[0].mxu0
    %1416 = vmatprep.mubr.f32.mxu0 0.0
    %1417 = vmatmul.mubr.f32.gmra.mrb[0].mxu0 %v1303
    %v1418 = vpop.f32.mrb[0].mxu0
    %v1419 = vadd.f32 0.0, %v1418
    %v1420 = vpop.f32.mrb[0].mxu0
    %1421 = vmatprep.mubr.f32.mxu0 0.0
    %1422 = vmatmul.mubr.f32.gmra.mrb[0].mxu0 %v1306
    %v1423 = vpop.f32.mrb[0].mxu0
    %v1424 = vadd.f32 0.0, %v1423
    %v1425 = vpop.f32.mrb[0].mxu0
    %1426 = vmatprep.mubr.f32.mxu0 0.0
    %1427 = vmatmul.mubr.f32.gmra.mrb[0].mxu0 %v1309
    %v1428 = vpop.f32.mrb[0].mxu0
    %v1429 = vadd.f32 0.0, %v1428
    %v1430 = vpop.f32.mrb[0].mxu0
    %1431 = vmatprep.mubr.f32.mxu0 0.0
    %1432 = vmatmul.mubr.f32.gmra.mrb[0].mxu0 %v1312
    %v1433 = vpop.f32.mrb[0].mxu0
    %v1434 = vadd.f32 0.0, %v1433
    %v1435 = vpop.f32.mrb[0].mxu0
    %1436 = vmatprep.mubr.f32.mxu0 0.0
    %1437 = vmatmul.mubr.f32.gmra.mrb[0].mxu0 %v1315
    %v1438 = vpop.f32.mrb[0].mxu0
    %v1439 = vadd.f32 0.0, %v1438
    %v1440 = vpop.f32.mrb[0].mxu0
    %1441 = vmatprep.mubr.f32.mxu0 0.0
    %1442 = vmatmul.mubr.f32.gmra.mrb[0].mxu0 %v1318
    %v1443 = vpop.f32.mrb[0].mxu0
    %v1444 = vadd.f32 0.0, %v1443
    %v1445 = vpop.f32.mrb[0].mxu0
    %1446 = vmatprep.mubr.f32.mxu0 0.0
    %1447 = vmatmul.mubr.f32.gmra.mrb[0].mxu0 %v1321
    %v1448 = vpop.f32.mrb[0].mxu0
    %v1449 = vadd.f32 0.0, %v1448
    %v1450 = vpop.f32.mrb[0].mxu0
    %1451 = vmatprep.mubr.f32.mxu0 0.0
    %1452 = vmatmul.mubr.f32.gmra.mrb[0].mxu0 %v1324
    %v1453 = vpop.f32.mrb[0].mxu0
    %v1454 = vadd.f32 0.0, %v1453
    %v1455 = vpop.f32.mrb[0].mxu0
    %1456 = vmatprep.mubr.f32.mxu0 0.0
    %1457 = vmatmul.mubr.f32.gmra.mrb[0].mxu0 %v1327
    %v1458 = vpop.f32.mrb[0].mxu0
    %v1459 = vadd.f32 0.0, %v1458
    %v1460 = vpop.f32.mrb[0].mxu0
    %1461 = vmatprep.mubr.f32.mxu0 0.0
    %1462 = vmatmul.mubr.f32.gmra.mrb[0].mxu0 %v1330
    %v1463 = vpop.f32.mrb[0].mxu0
    %v1464 = vadd.f32 0.0, %v1463
    %v1465 = vpop.f32.mrb[0].mxu0
    %1466 = vmatprep.mubr.f32.mxu0 0.0
    %1467 = vmatmul.mubr.f32.gmra.mrb[0].mxu0 %v1333
    %v1468 = vpop.f32.mrb[0].mxu0
    %v1469 = vadd.f32 0.0, %v1468
    %v1470 = vpop.f32.mrb[0].mxu0
    %1471 = vmatprep.mubr.f32.mxu0 0.0
    %1472 = vmatmul.mubr.f32.gmra.mrb[0].mxu0 %v1336
    %v1473 = vpop.f32.mrb[0].mxu0
    %v1474 = vadd.f32 0.0, %v1473
    %v1475 = vpop.f32.mrb[0].mxu0
    %1476 = vmatprep.mubr.f32.mxu0 0.0
    %1477 = vmatmul.mubr.f32.gmra.mrb[0].mxu0 %v1339
    %v1478 = vpop.f32.mrb[0].mxu0
    %v1479 = vadd.f32 0.0, %v1478
    %v1480 = vpop.f32.mrb[0].mxu0
    %1481 = vmatprep.mubr.f32.mxu0 0.0
    %1482 = vmatmul.mubr.f32.gmra.mrb[0].mxu0 %v1342
    %v1483 = vpop.f32.mrb[0].mxu0
    %v1484 = vadd.f32 0.0, %v1483
    %v1485 = vpop.f32.mrb[0].mxu0
    %1486 = vmatprep.mubr.f32.mxu0 0.0
    %1487 = vmatmul.mubr.f32.gmra.mrb[0].mxu0 %v1345
    %v1488 = vpop.f32.mrb[0].mxu0
    %v1489 = vadd.f32 0.0, %v1488
    %v1490 = vpop.f32.mrb[0].mxu0
    %1491 = vdwg.mxu0
    %v1492 = vadd.f32 %v1258, %v1414
    %v1493 = vadd.f32 %v1259, %v1419
    %v1494 = vadd.f32 %v1260, %v1424
    %v1495 = vadd.f32 %v1261, %v1429
    %v1496 = vadd.f32 %v1262, %v1434
    %v1497 = vadd.f32 %v1263, %v1439
    %v1498 = vadd.f32 %v1264, %v1444
    %v1499 = vadd.f32 %v1265, %v1449
    %v1500 = vadd.f32 %v1266, %v1454
    %v1501 = vadd.f32 %v1267, %v1459
    %v1502 = vadd.f32 %v1268, %v1464
    %v1503 = vadd.f32 %v1269, %v1469
    %v1504 = vadd.f32 %v1270, %v1474
    %v1505 = vadd.f32 %v1271, %v1479
    %v1506 = vadd.f32 %v1272, %v1484
    %v1507 = vadd.f32 %v1273, %v1489
    %v1508 = vld [vmem:[%s354 + $0x9] sm:$0xff]
    %v1509 = vld [vmem:[%s354 + $0x21] sm:$0xff]
    %v1510 = vld [vmem:[%s354 + $0x39] sm:$0xff]
    %v1511 = vld [vmem:[%s354 + $0x51] sm:$0xff]
    %v1512 = vld [vmem:[%s354 + $0x69] sm:$0xff]
    %v1513 = vld [vmem:[%s354 + $0x81] sm:$0xff]
    %v1514 = vld [vmem:[%s354 + $0x99] sm:$0xff]
    %v1515 = vld [vmem:[%s354 + $0xb1] sm:$0xff]
    %v1516 = vld [vmem:[%s354 + $0xf9] sm:$0xff]
    %v1517 = vld [vmem:[%s354 + $0x111] sm:$0xff]
    %v1518 = vld [vmem:[%s354 + $0x129] sm:$0xff]
    %v1519 = vld [vmem:[%s354 + $0x141] sm:$0xff]
    %v1520 = vld [vmem:[%s354 + $0x159] sm:$0xff]
    %v1521 = vld [vmem:[%s354 + $0x171] sm:$0xff]
    %v1522 = vld [vmem:[%s354 + $0x189] sm:$0xff]
    %v1523 = vld [vmem:[%s354 + $0x1a1] sm:$0xff]
    %s1524 = scalar_lea.vmem [#allocation5], 320
    %v1525 = vld [vmem:[%s1524] sm:$0xff]
    %v1526 = vld [vmem:[%s1524 + $0x8] sm:$0xff]
    %v1527 = vld [vmem:[%s1524 + $0x10] sm:$0xff]
    %v1528 = vld [vmem:[%s1524 + $0x18] sm:$0xff]
    %v1529 = vld [vmem:[%s1524 + $0x20] sm:$0xff]
    %v1530 = vld [vmem:[%s1524 + $0x28] sm:$0xff]
    %v1531 = vld [vmem:[%s1524 + $0x30] sm:$0xff]
    %v1532 = vld [vmem:[%s1524 + $0x38] sm:$0xff]
    %v1534 = vsel %vm84, %v1508, 0
    %v1537 = vsel %vm84, %v1509, 0
    %v1540 = vsel %vm84, %v1510, 0
    %v1543 = vsel %vm84, %v1511, 0
    %v1546 = vsel %vm84, %v1512, 0
    %v1549 = vsel %vm84, %v1513, 0
    %v1552 = vsel %vm84, %v1514, 0
    %v1555 = vsel %vm84, %v1515, 0
    %v1558 = vsel %vm84, %v1516, 0
    %v1561 = vsel %vm84, %v1517, 0
    %v1564 = vsel %vm84, %v1518, 0
    %v1567 = vsel %vm84, %v1519, 0
    %v1570 = vsel %vm84, %v1520, 0
    %v1573 = vsel %vm84, %v1521, 0
    %v1576 = vsel %vm84, %v1522, 0
    %v1579 = vsel %vm84, %v1523, 0
    %1581 = vmatprep.subr.mxu0 0.0
    %1582 = vmatpush1.msra.mxu0 %v1525
    %1583 = vmatprep.subr.mxu0 0.0
    %1584 = vmatpush1.msra.mxu0 %v1526
    %1585 = vmatprep.subr.mxu0 0.0
    %1586 = vmatpush1.msra.mxu0 %v1527
    %1587 = vmatprep.subr.mxu0 0.0
    %1588 = vmatpush1.msra.mxu0 %v1528
    %1589 = vmatprep.subr.mxu0 0.0
    %1590 = vmatpush1.msra.mxu0 %v1529
    %1591 = vmatprep.subr.mxu0 0.0
    %1592 = vmatpush1.msra.mxu0 %v1530
    %1593 = vmatprep.subr.mxu0 0.0
    %1594 = vmatpush1.msra.mxu0 %v1531
    %1595 = vmatprep.subr.mxu0 0.0
    %1596 = vmatpush1.msra.mxu0 %v1532
    %1597 = vmatprep.subr.mxu0 0.0
    %1598 = vmatpush1.msra.mxu0 0.0
    %1599 = vmatprep.subr.mxu0 0.0
    %1600 = vmatpush1.msra.mxu0 0.0
    %1601 = vmatprep.subr.mxu0 0.0
    %1602 = vmatpush1.msra.mxu0 0.0
    %1603 = vmatprep.subr.mxu0 0.0
    %1604 = vmatpush1.msra.mxu0 0.0
    %1605 = vmatprep.subr.mxu0 0.0
    %1606 = vmatpush1.msra.mxu0 0.0
    %1607 = vmatprep.subr.mxu0 0.0
    %1608 = vmatpush1.msra.mxu0 0.0
    %1609 = vmatprep.subr.mxu0 0.0
    %1610 = vmatpush1.msra.mxu0 0.0
    %1611 = vmatprep.subr.mxu0 0.0
    %1612 = vmatpush1.msra.mxu0 0.0
    %1613 = vmatprep.subr.mxu0 0.0
    %1614 = vmatpush1.msra.mxu0 0.0
    %1615 = vmatprep.subr.mxu0 0.0
    %1616 = vmatpush1.msra.mxu0 0.0
    %1617 = vmatprep.subr.mxu0 0.0
    %1618 = vmatpush1.msra.mxu0 0.0
    %1619 = vmatprep.subr.mxu0 0.0
    %1620 = vmatpush1.msra.mxu0 0.0
    %1621 = vmatprep.subr.mxu0 0.0
    %1622 = vmatpush1.msra.mxu0 0.0
    %1623 = vmatprep.subr.mxu0 0.0
    %1624 = vmatpush1.msra.mxu0 0.0
    %1625 = vmatprep.subr.mxu0 0.0
    %1626 = vmatpush1.msra.mxu0 0.0
    %1627 = vmatprep.subr.mxu0 0.0
    %1628 = vmatpush1.msra.mxu0 0.0
    %1629 = vmatprep.subr.mxu0 0.0
    %1630 = vmatpush1.msra.mxu0 0.0
    %1631 = vmatprep.subr.mxu0 0.0
    %1632 = vmatpush1.msra.mxu0 0.0
    %1633 = vmatprep.subr.mxu0 0.0
    %1634 = vmatpush1.msra.mxu0 0.0
    %1635 = vmatprep.subr.mxu0 0.0
    %1636 = vmatpush1.msra.mxu0 0.0
    %1637 = vmatprep.subr.mxu0 0.0
    %1638 = vmatpush1.msra.mxu0 0.0
    %1639 = vmatprep.subr.mxu0 0.0
    %1640 = vmatpush1.msra.mxu0 0.0
    %1641 = vmatprep.subr.mxu0 0.0
    %1642 = vmatpush1.msra.mxu0 0.0
    %1643 = vmatprep.subr.mxu0 0.0
    %1644 = vmatpush1.msra.mxu0 0.0
    %1645 = vmatprep.mubr.f32.mxu0 0.0
    %1646 = vmatmul.mubr.f32.gmra.mrb[0].mxu0 %v1534
    %v1647 = vpop.f32.mrb[0].mxu0
    %v1648 = vadd.f32 0.0, %v1647
    %v1649 = vpop.f32.mrb[0].mxu0
    %1650 = vmatprep.mubr.f32.mxu0 0.0
    %1651 = vmatmul.mubr.f32.gmra.mrb[0].mxu0 %v1537
    %v1652 = vpop.f32.mrb[0].mxu0
    %v1653 = vadd.f32 0.0, %v1652
    %v1654 = vpop.f32.mrb[0].mxu0
    %1655 = vmatprep.mubr.f32.mxu0 0.0
    %1656 = vmatmul.mubr.f32.gmra.mrb[0].mxu0 %v1540
    %v1657 = vpop.f32.mrb[0].mxu0
    %v1658 = vadd.f32 0.0, %v1657
    %v1659 = vpop.f32.mrb[0].mxu0
    %1660 = vmatprep.mubr.f32.mxu0 0.0
    %1661 = vmatmul.mubr.f32.gmra.mrb[0].mxu0 %v1543
    %v1662 = vpop.f32.mrb[0].mxu0
    %v1663 = vadd.f32 0.0, %v1662
    %v1664 = vpop.f32.mrb[0].mxu0
    %1665 = vmatprep.mubr.f32.mxu0 0.0
    %1666 = vmatmul.mubr.f32.gmra.mrb[0].mxu0 %v1546
    %v1667 = vpop.f32.mrb[0].mxu0
    %v1668 = vadd.f32 0.0, %v1667
    %v1669 = vpop.f32.mrb[0].mxu0
    %1670 = vmatprep.mubr.f32.mxu0 0.0
    %1671 = vmatmul.mubr.f32.gmra.mrb[0].mxu0 %v1549
    %v1672 = vpop.f32.mrb[0].mxu0
    %v1673 = vadd.f32 0.0, %v1672
    %v1674 = vpop.f32.mrb[0].mxu0
    %1675 = vmatprep.mubr.f32.mxu0 0.0
    %1676 = vmatmul.mubr.f32.gmra.mrb[0].mxu0 %v1552
    %v1677 = vpop.f32.mrb[0].mxu0
    %v1678 = vadd.f32 0.0, %v1677
    %v1679 = vpop.f32.mrb[0].mxu0
    %1680 = vmatprep.mubr.f32.mxu0 0.0
    %1681 = vmatmul.mubr.f32.gmra.mrb[0].mxu0 %v1555
    %v1682 = vpop.f32.mrb[0].mxu0
    %v1683 = vadd.f32 0.0, %v1682
    %v1684 = vpop.f32.mrb[0].mxu0
    %1685 = vmatprep.mubr.f32.mxu0 0.0
    %1686 = vmatmul.mubr.f32.gmra.mrb[0].mxu0 %v1558
    %v1687 = vpop.f32.mrb[0].mxu0
    %v1688 = vadd.f32 0.0, %v1687
    %v1689 = vpop.f32.mrb[0].mxu0
    %1690 = vmatprep.mubr.f32.mxu0 0.0
    %1691 = vmatmul.mubr.f32.gmra.mrb[0].mxu0 %v1561
    %v1692 = vpop.f32.mrb[0].mxu0
    %v1693 = vadd.f32 0.0, %v1692
    %v1694 = vpop.f32.mrb[0].mxu0
    %1695 = vmatprep.mubr.f32.mxu0 0.0
    %1696 = vmatmul.mubr.f32.gmra.mrb[0].mxu0 %v1564
    %v1697 = vpop.f32.mrb[0].mxu0
    %v1698 = vadd.f32 0.0, %v1697
    %v1699 = vpop.f32.mrb[0].mxu0
    %1700 = vmatprep.mubr.f32.mxu0 0.0
    %1701 = vmatmul.mubr.f32.gmra.mrb[0].mxu0 %v1567
    %v1702 = vpop.f32.mrb[0].mxu0
    %v1703 = vadd.f32 0.0, %v1702
    %v1704 = vpop.f32.mrb[0].mxu0
    %1705 = vmatprep.mubr.f32.mxu0 0.0
    %1706 = vmatmul.mubr.f32.gmra.mrb[0].mxu0 %v1570
    %v1707 = vpop.f32.mrb[0].mxu0
    %v1708 = vadd.f32 0.0, %v1707
    %v1709 = vpop.f32.mrb[0].mxu0
    %1710 = vmatprep.mubr.f32.mxu0 0.0
    %1711 = vmatmul.mubr.f32.gmra.mrb[0].mxu0 %v1573
    %v1712 = vpop.f32.mrb[0].mxu0
    %v1713 = vadd.f32 0.0, %v1712
    %v1714 = vpop.f32.mrb[0].mxu0
    %1715 = vmatprep.mubr.f32.mxu0 0.0
    %1716 = vmatmul.mubr.f32.gmra.mrb[0].mxu0 %v1576
    %v1717 = vpop.f32.mrb[0].mxu0
    %v1718 = vadd.f32 0.0, %v1717
    %v1719 = vpop.f32.mrb[0].mxu0
    %1720 = vmatprep.mubr.f32.mxu0 0.0
    %1721 = vmatmul.mubr.f32.gmra.mrb[0].mxu0 %v1579
    %v1722 = vpop.f32.mrb[0].mxu0
    %v1723 = vadd.f32 0.0, %v1722
    %v1724 = vpop.f32.mrb[0].mxu0
    %1725 = vdwg.mxu0
    %v1726 = vadd.f32 %v1492, %v1648
    %v1727 = vadd.f32 %v1493, %v1653
    %v1728 = vadd.f32 %v1494, %v1658
    %v1729 = vadd.f32 %v1495, %v1663
    %v1730 = vadd.f32 %v1496, %v1668
    %v1731 = vadd.f32 %v1497, %v1673
    %v1732 = vadd.f32 %v1498, %v1678
    %v1733 = vadd.f32 %v1499, %v1683
    %v1734 = vadd.f32 %v1500, %v1688
    %v1735 = vadd.f32 %v1501, %v1693
    %v1736 = vadd.f32 %v1502, %v1698
    %v1737 = vadd.f32 %v1503, %v1703
    %v1738 = vadd.f32 %v1504, %v1708
    %v1739 = vadd.f32 %v1505, %v1713
    %v1740 = vadd.f32 %v1506, %v1718
    %v1741 = vadd.f32 %v1507, %v1723
    %s1742 = scalar_lea.vmem [#allocation2], 48
    %v1743 = vld [vmem:[%s1742 + $0x7] sm:$0xff]
    %v1744 = vld [vmem:[%s1742 + $0x1f] sm:$0xff]
    %v1745 = vld [vmem:[%s1742 + $0x37] sm:$0xff]
    %v1746 = vld [vmem:[%s1742 + $0x4f] sm:$0xff]
    %v1747 = vld [vmem:[%s1742 + $0x67] sm:$0xff]
    %v1748 = vld [vmem:[%s1742 + $0x7f] sm:$0xff]
    %v1749 = vld [vmem:[%s1742 + $0x97] sm:$0xff]
    %v1750 = vld [vmem:[%s1742 + $0xaf] sm:$0xff]
    %v1751 = vld [vmem:[%s1742 + $0xf7] sm:$0xff]
    %v1752 = vld [vmem:[%s1742 + $0x10f] sm:$0xff]
    %v1753 = vld [vmem:[%s1742 + $0x127] sm:$0xff]
    %v1754 = vld [vmem:[%s1742 + $0x13f] sm:$0xff]
    %v1755 = vld [vmem:[%s1742 + $0x157] sm:$0xff]
    %v1756 = vld [vmem:[%s1742 + $0x16f] sm:$0xff]
    %v1757 = vld [vmem:[%s1742 + $0x187] sm:$0xff]
    %v1758 = vld [vmem:[%s1742 + $0x19f] sm:$0xff]
    %s1759 = scalar_lea.vmem [#allocation5], 384
    %v1760 = vld [vmem:[%s1759] sm:$0xff]
    %v1761 = vld [vmem:[%s1759 + $0x8] sm:$0xff]
    %v1762 = vld [vmem:[%s1759 + $0x10] sm:$0xff]
    %v1763 = vld [vmem:[%s1759 + $0x18] sm:$0xff]
    %v1764 = vld [vmem:[%s1759 + $0x20] sm:$0xff]
    %v1765 = vld [vmem:[%s1759 + $0x28] sm:$0xff]
    %v1766 = vld [vmem:[%s1759 + $0x30] sm:$0xff]
    %v1767 = vld [vmem:[%s1759 + $0x38] sm:$0xff]
    %v1769 = vsel %vm84, %v1743, 0
    %v1772 = vsel %vm84, %v1744, 0
    %v1775 = vsel %vm84, %v1745, 0
    %v1778 = vsel %vm84, %v1746, 0
    %v1781 = vsel %vm84, %v1747, 0
    %v1784 = vsel %vm84, %v1748, 0
    %v1787 = vsel %vm84, %v1749, 0
    %v1790 = vsel %vm84, %v1750, 0
    %v1793 = vsel %vm84, %v1751, 0
    %v1796 = vsel %vm84, %v1752, 0
    %v1799 = vsel %vm84, %v1753, 0
    %v1802 = vsel %vm84, %v1754, 0
    %v1805 = vsel %vm84, %v1755, 0
    %v1808 = vsel %vm84, %v1756, 0
    %v1811 = vsel %vm84, %v1757, 0
    %v1814 = vsel %vm84, %v1758, 0
    %1816 = vmatprep.subr.mxu0 0.0
    %1817 = vmatpush1.msra.mxu0 %v1760
    %1818 = vmatprep.subr.mxu0 0.0
    %1819 = vmatpush1.msra.mxu0 %v1761
    %1820 = vmatprep.subr.mxu0 0.0
    %1821 = vmatpush1.msra.mxu0 %v1762
    %1822 = vmatprep.subr.mxu0 0.0
    %1823 = vmatpush1.msra.mxu0 %v1763
    %1824 = vmatprep.subr.mxu0 0.0
    %1825 = vmatpush1.msra.mxu0 %v1764
    %1826 = vmatprep.subr.mxu0 0.0
    %1827 = vmatpush1.msra.mxu0 %v1765
    %1828 = vmatprep.subr.mxu0 0.0
    %1829 = vmatpush1.msra.mxu0 %v1766
    %1830 = vmatprep.subr.mxu0 0.0
    %1831 = vmatpush1.msra.mxu0 %v1767
    %1832 = vmatprep.subr.mxu0 0.0
    %1833 = vmatpush1.msra.mxu0 0.0
    %1834 = vmatprep.subr.mxu0 0.0
    %1835 = vmatpush1.msra.mxu0 0.0
    %1836 = vmatprep.subr.mxu0 0.0
    %1837 = vmatpush1.msra.mxu0 0.0
    %1838 = vmatprep.subr.mxu0 0.0
    %1839 = vmatpush1.msra.mxu0 0.0
    %1840 = vmatprep.subr.mxu0 0.0
    %1841 = vmatpush1.msra.mxu0 0.0
    %1842 = vmatprep.subr.mxu0 0.0
    %1843 = vmatpush1.msra.mxu0 0.0
    %1844 = vmatprep.subr.mxu0 0.0
    %1845 = vmatpush1.msra.mxu0 0.0
    %1846 = vmatprep.subr.mxu0 0.0
    %1847 = vmatpush1.msra.mxu0 0.0
    %1848 = vmatprep.subr.mxu0 0.0
    %1849 = vmatpush1.msra.mxu0 0.0
    %1850 = vmatprep.subr.mxu0 0.0
    %1851 = vmatpush1.msra.mxu0 0.0
    %1852 = vmatprep.subr.mxu0 0.0
    %1853 = vmatpush1.msra.mxu0 0.0
    %1854 = vmatprep.subr.mxu0 0.0
    %1855 = vmatpush1.msra.mxu0 0.0
    %1856 = vmatprep.subr.mxu0 0.0
    %1857 = vmatpush1.msra.mxu0 0.0
    %1858 = vmatprep.subr.mxu0 0.0
    %1859 = vmatpush1.msra.mxu0 0.0
    %1860 = vmatprep.subr.mxu0 0.0
    %1861 = vmatpush1.msra.mxu0 0.0
    %1862 = vmatprep.subr.mxu0 0.0
    %1863 = vmatpush1.msra.mxu0 0.0
    %1864 = vmatprep.subr.mxu0 0.0
    %1865 = vmatpush1.msra.mxu0 0.0
    %1866 = vmatprep.subr.mxu0 0.0
    %1867 = vmatpush1.msra.mxu0 0.0
    %1868 = vmatprep.subr.mxu0 0.0
    %1869 = vmatpush1.msra.mxu0 0.0
    %1870 = vmatprep.subr.mxu0 0.0
    %1871 = vmatpush1.msra.mxu0 0.0
    %1872 = vmatprep.subr.mxu0 0.0
    %1873 = vmatpush1.msra.mxu0 0.0
    %1874 = vmatprep.subr.mxu0 0.0
    %1875 = vmatpush1.msra.mxu0 0.0
    %1876 = vmatprep.subr.mxu0 0.0
    %1877 = vmatpush1.msra.mxu0 0.0
    %1878 = vmatprep.subr.mxu0 0.0
    %1879 = vmatpush1.msra.mxu0 0.0
    %1880 = vmatprep.mubr.f32.mxu0 0.0
    %1881 = vmatmul.mubr.f32.gmra.mrb[0].mxu0 %v1769
    %v1882 = vpop.f32.mrb[0].mxu0
    %v1883 = vadd.f32 0.0, %v1882
    %v1884 = vpop.f32.mrb[0].mxu0
    %1885 = vmatprep.mubr.f32.mxu0 0.0
    %1886 = vmatmul.mubr.f32.gmra.mrb[0].mxu0 %v1772
    %v1887 = vpop.f32.mrb[0].mxu0
    %v1888 = vadd.f32 0.0, %v1887
    %v1889 = vpop.f32.mrb[0].mxu0
    %1890 = vmatprep.mubr.f32.mxu0 0.0
    %1891 = vmatmul.mubr.f32.gmra.mrb[0].mxu0 %v1775
    %v1892 = vpop.f32.mrb[0].mxu0
    %v1893 = vadd.f32 0.0, %v1892
    %v1894 = vpop.f32.mrb[0].mxu0
    %1895 = vmatprep.mubr.f32.mxu0 0.0
    %1896 = vmatmul.mubr.f32.gmra.mrb[0].mxu0 %v1778
    %v1897 = vpop.f32.mrb[0].mxu0
    %v1898 = vadd.f32 0.0, %v1897
    %v1899 = vpop.f32.mrb[0].mxu0
    %1900 = vmatprep.mubr.f32.mxu0 0.0
    %1901 = vmatmul.mubr.f32.gmra.mrb[0].mxu0 %v1781
    %v1902 = vpop.f32.mrb[0].mxu0
    %v1903 = vadd.f32 0.0, %v1902
    %v1904 = vpop.f32.mrb[0].mxu0
    %1905 = vmatprep.mubr.f32.mxu0 0.0
    %1906 = vmatmul.mubr.f32.gmra.mrb[0].mxu0 %v1784
    %v1907 = vpop.f32.mrb[0].mxu0
    %v1908 = vadd.f32 0.0, %v1907
    %v1909 = vpop.f32.mrb[0].mxu0
    %1910 = vmatprep.mubr.f32.mxu0 0.0
    %1911 = vmatmul.mubr.f32.gmra.mrb[0].mxu0 %v1787
    %v1912 = vpop.f32.mrb[0].mxu0
    %v1913 = vadd.f32 0.0, %v1912
    %v1914 = vpop.f32.mrb[0].mxu0
    %1915 = vmatprep.mubr.f32.mxu0 0.0
    %1916 = vmatmul.mubr.f32.gmra.mrb[0].mxu0 %v1790
    %v1917 = vpop.f32.mrb[0].mxu0
    %v1918 = vadd.f32 0.0, %v1917
    %v1919 = vpop.f32.mrb[0].mxu0
    %1920 = vmatprep.mubr.f32.mxu0 0.0
    %1921 = vmatmul.mubr.f32.gmra.mrb[0].mxu0 %v1793
    %v1922 = vpop.f32.mrb[0].mxu0
    %v1923 = vadd.f32 0.0, %v1922
    %v1924 = vpop.f32.mrb[0].mxu0
    %1925 = vmatprep.mubr.f32.mxu0 0.0
    %1926 = vmatmul.mubr.f32.gmra.mrb[0].mxu0 %v1796
    %v1927 = vpop.f32.mrb[0].mxu0
    %v1928 = vadd.f32 0.0, %v1927
    %v1929 = vpop.f32.mrb[0].mxu0
    %1930 = vmatprep.mubr.f32.mxu0 0.0
    %1931 = vmatmul.mubr.f32.gmra.mrb[0].mxu0 %v1799
    %v1932 = vpop.f32.mrb[0].mxu0
    %v1933 = vadd.f32 0.0, %v1932
    %v1934 = vpop.f32.mrb[0].mxu0
    %1935 = vmatprep.mubr.f32.mxu0 0.0
    %1936 = vmatmul.mubr.f32.gmra.mrb[0].mxu0 %v1802
    %v1937 = vpop.f32.mrb[0].mxu0
    %v1938 = vadd.f32 0.0, %v1937
    %v1939 = vpop.f32.mrb[0].mxu0
    %1940 = vmatprep.mubr.f32.mxu0 0.0
    %1941 = vmatmul.mubr.f32.gmra.mrb[0].mxu0 %v1805
    %v1942 = vpop.f32.mrb[0].mxu0
    %v1943 = vadd.f32 0.0, %v1942
    %v1944 = vpop.f32.mrb[0].mxu0
    %1945 = vmatprep.mubr.f32.mxu0 0.0
    %1946 = vmatmul.mubr.f32.gmra.mrb[0].mxu0 %v1808
    %v1947 = vpop.f32.mrb[0].mxu0
    %v1948 = vadd.f32 0.0, %v1947
    %v1949 = vpop.f32.mrb[0].mxu0
    %1950 = vmatprep.mubr.f32.mxu0 0.0
    %1951 = vmatmul.mubr.f32.gmra.mrb[0].mxu0 %v1811
    %v1952 = vpop.f32.mrb[0].mxu0
    %v1953 = vadd.f32 0.0, %v1952
    %v1954 = vpop.f32.mrb[0].mxu0
    %1955 = vmatprep.mubr.f32.mxu0 0.0
    %1956 = vmatmul.mubr.f32.gmra.mrb[0].mxu0 %v1814
    %v1957 = vpop.f32.mrb[0].mxu0
    %v1958 = vadd.f32 0.0, %v1957
    %v1959 = vpop.f32.mrb[0].mxu0
    %1960 = vdwg.mxu0
    %v1961 = vadd.f32 %v1726, %v1883
    %v1962 = vadd.f32 %v1727, %v1888
    %v1963 = vadd.f32 %v1728, %v1893
    %v1964 = vadd.f32 %v1729, %v1898
    %v1965 = vadd.f32 %v1730, %v1903
    %v1966 = vadd.f32 %v1731, %v1908
    %v1967 = vadd.f32 %v1732, %v1913
    %v1968 = vadd.f32 %v1733, %v1918
    %v1969 = vadd.f32 %v1734, %v1923
    %v1970 = vadd.f32 %v1735, %v1928
    %v1971 = vadd.f32 %v1736, %v1933
    %v1972 = vadd.f32 %v1737, %v1938
    %v1973 = vadd.f32 %v1738, %v1943
    %v1974 = vadd.f32 %v1739, %v1948
    %v1975 = vadd.f32 %v1740, %v1953
    %v1976 = vadd.f32 %v1741, %v1958
    %v1977 = vld [vmem:[%s1742 + $0x8] sm:$0xff]
    %v1978 = vld [vmem:[%s1742 + $0x20] sm:$0xff]
    %v1979 = vld [vmem:[%s1742 + $0x38] sm:$0xff]
    %v1980 = vld [vmem:[%s1742 + $0x50] sm:$0xff]
    %v1981 = vld [vmem:[%s1742 + $0x68] sm:$0xff]
    %v1982 = vld [vmem:[%s1742 + $0x80] sm:$0xff]
    %v1983 = vld [vmem:[%s1742 + $0x98] sm:$0xff]
    %v1984 = vld [vmem:[%s1742 + $0xb0] sm:$0xff]
    %v1985 = vld [vmem:[%s1742 + $0xf8] sm:$0xff]
    %v1986 = vld [vmem:[%s1742 + $0x110] sm:$0xff]
    %v1987 = vld [vmem:[%s1742 + $0x128] sm:$0xff]
    %v1988 = vld [vmem:[%s1742 + $0x140] sm:$0xff]
    %v1989 = vld [vmem:[%s1742 + $0x158] sm:$0xff]
    %v1990 = vld [vmem:[%s1742 + $0x170] sm:$0xff]
    %v1991 = vld [vmem:[%s1742 + $0x188] sm:$0xff]
    %v1992 = vld [vmem:[%s1742 + $0x1a0] sm:$0xff]
    %s1993 = scalar_lea.vmem [#allocation5], 448
    %v1994 = vld [vmem:[%s1993] sm:$0xff]
    %v1995 = vld [vmem:[%s1993 + $0x8] sm:$0xff]
    %v1996 = vld [vmem:[%s1993 + $0x10] sm:$0xff]
    %v1997 = vld [vmem:[%s1993 + $0x18] sm:$0xff]
    %v1998 = vld [vmem:[%s1993 + $0x20] sm:$0xff]
    %v1999 = vld [vmem:[%s1993 + $0x28] sm:$0xff]
    %v2000 = vld [vmem:[%s1993 + $0x30] sm:$0xff]
    %v2001 = vld [vmem:[%s1993 + $0x38] sm:$0xff]
    %v2003 = vsel %vm84, %v1977, 0
    %v2006 = vsel %vm84, %v1978, 0
    %v2009 = vsel %vm84, %v1979, 0
    %v2012 = vsel %vm84, %v1980, 0
    %v2015 = vsel %vm84, %v1981, 0
    %v2018 = vsel %vm84, %v1982, 0
    %v2021 = vsel %vm84, %v1983, 0
    %v2024 = vsel %vm84, %v1984, 0
    %v2027 = vsel %vm84, %v1985, 0
    %v2030 = vsel %vm84, %v1986, 0
    %v2033 = vsel %vm84, %v1987, 0
    %v2036 = vsel %vm84, %v1988, 0
    %v2039 = vsel %vm84, %v1989, 0
    %v2042 = vsel %vm84, %v1990, 0
    %v2045 = vsel %vm84, %v1991, 0
    %v2048 = vsel %vm84, %v1992, 0
    %2050 = vmatprep.subr.mxu0 0.0
    %2051 = vmatpush1.msra.mxu0 %v1994
    %2052 = vmatprep.subr.mxu0 0.0
    %2053 = vmatpush1.msra.mxu0 %v1995
    %2054 = vmatprep.subr.mxu0 0.0
    %2055 = vmatpush1.msra.mxu0 %v1996
    %2056 = vmatprep.subr.mxu0 0.0
    %2057 = vmatpush1.msra.mxu0 %v1997
    %2058 = vmatprep.subr.mxu0 0.0
    %2059 = vmatpush1.msra.mxu0 %v1998
    %2060 = vmatprep.subr.mxu0 0.0
    %2061 = vmatpush1.msra.mxu0 %v1999
    %2062 = vmatprep.subr.mxu0 0.0
    %2063 = vmatpush1.msra.mxu0 %v2000
    %2064 = vmatprep.subr.mxu0 0.0
    %2065 = vmatpush1.msra.mxu0 %v2001
    %2066 = vmatprep.subr.mxu0 0.0
    %2067 = vmatpush1.msra.mxu0 0.0
    %2068 = vmatprep.subr.mxu0 0.0
    %2069 = vmatpush1.msra.mxu0 0.0
    %2070 = vmatprep.subr.mxu0 0.0
    %2071 = vmatpush1.msra.mxu0 0.0
    %2072 = vmatprep.subr.mxu0 0.0
    %2073 = vmatpush1.msra.mxu0 0.0
    %2074 = vmatprep.subr.mxu0 0.0
    %2075 = vmatpush1.msra.mxu0 0.0
    %2076 = vmatprep.subr.mxu0 0.0
    %2077 = vmatpush1.msra.mxu0 0.0
    %2078 = vmatprep.subr.mxu0 0.0
    %2079 = vmatpush1.msra.mxu0 0.0
    %2080 = vmatprep.subr.mxu0 0.0
    %2081 = vmatpush1.msra.mxu0 0.0
    %2082 = vmatprep.subr.mxu0 0.0
    %2083 = vmatpush1.msra.mxu0 0.0
    %2084 = vmatprep.subr.mxu0 0.0
    %2085 = vmatpush1.msra.mxu0 0.0
    %2086 = vmatprep.subr.mxu0 0.0
    %2087 = vmatpush1.msra.mxu0 0.0
    %2088 = vmatprep.subr.mxu0 0.0
    %2089 = vmatpush1.msra.mxu0 0.0
    %2090 = vmatprep.subr.mxu0 0.0
    %2091 = vmatpush1.msra.mxu0 0.0
    %2092 = vmatprep.subr.mxu0 0.0
    %2093 = vmatpush1.msra.mxu0 0.0
    %2094 = vmatprep.subr.mxu0 0.0
    %2095 = vmatpush1.msra.mxu0 0.0
    %2096 = vmatprep.subr.mxu0 0.0
    %2097 = vmatpush1.msra.mxu0 0.0
    %2098 = vmatprep.subr.mxu0 0.0
    %2099 = vmatpush1.msra.mxu0 0.0
    %2100 = vmatprep.subr.mxu0 0.0
    %2101 = vmatpush1.msra.mxu0 0.0
    %2102 = vmatprep.subr.mxu0 0.0
    %2103 = vmatpush1.msra.mxu0 0.0
    %2104 = vmatprep.subr.mxu0 0.0
    %2105 = vmatpush1.msra.mxu0 0.0
    %2106 = vmatprep.subr.mxu0 0.0
    %2107 = vmatpush1.msra.mxu0 0.0
    %2108 = vmatprep.subr.mxu0 0.0
    %2109 = vmatpush1.msra.mxu0 0.0
    %2110 = vmatprep.subr.mxu0 0.0
    %2111 = vmatpush1.msra.mxu0 0.0
    %2112 = vmatprep.subr.mxu0 0.0
    %2113 = vmatpush1.msra.mxu0 0.0
    %2114 = vmatprep.mubr.f32.mxu0 0.0
    %2115 = vmatmul.mubr.f32.gmra.mrb[0].mxu0 %v2003
    %v2116 = vpop.f32.mrb[0].mxu0
    %v2117 = vadd.f32 0.0, %v2116
    %v2118 = vpop.f32.mrb[0].mxu0
    %2119 = vmatprep.mubr.f32.mxu0 0.0
    %2120 = vmatmul.mubr.f32.gmra.mrb[0].mxu0 %v2006
    %v2121 = vpop.f32.mrb[0].mxu0
    %v2122 = vadd.f32 0.0, %v2121
    %v2123 = vpop.f32.mrb[0].mxu0
    %2124 = vmatprep.mubr.f32.mxu0 0.0
    %2125 = vmatmul.mubr.f32.gmra.mrb[0].mxu0 %v2009
    %v2126 = vpop.f32.mrb[0].mxu0
    %v2127 = vadd.f32 0.0, %v2126
    %v2128 = vpop.f32.mrb[0].mxu0
    %2129 = vmatprep.mubr.f32.mxu0 0.0
    %2130 = vmatmul.mubr.f32.gmra.mrb[0].mxu0 %v2012
    %v2131 = vpop.f32.mrb[0].mxu0
    %v2132 = vadd.f32 0.0, %v2131
    %v2133 = vpop.f32.mrb[0].mxu0
    %2134 = vmatprep.mubr.f32.mxu0 0.0
    %2135 = vmatmul.mubr.f32.gmra.mrb[0].mxu0 %v2015
    %v2136 = vpop.f32.mrb[0].mxu0
    %v2137 = vadd.f32 0.0, %v2136
    %v2138 = vpop.f32.mrb[0].mxu0
    %2139 = vmatprep.mubr.f32.mxu0 0.0
    %2140 = vmatmul.mubr.f32.gmra.mrb[0].mxu0 %v2018
    %v2141 = vpop.f32.mrb[0].mxu0
    %v2142 = vadd.f32 0.0, %v2141
    %v2143 = vpop.f32.mrb[0].mxu0
    %2144 = vmatprep.mubr.f32.mxu0 0.0
    %2145 = vmatmul.mubr.f32.gmra.mrb[0].mxu0 %v2021
    %v2146 = vpop.f32.mrb[0].mxu0
    %v2147 = vadd.f32 0.0, %v2146
    %v2148 = vpop.f32.mrb[0].mxu0
    %2149 = vmatprep.mubr.f32.mxu0 0.0
    %2150 = vmatmul.mubr.f32.gmra.mrb[0].mxu0 %v2024
    %v2151 = vpop.f32.mrb[0].mxu0
    %v2152 = vadd.f32 0.0, %v2151
    %v2153 = vpop.f32.mrb[0].mxu0
    %2154 = vmatprep.mubr.f32.mxu0 0.0
    %2155 = vmatmul.mubr.f32.gmra.mrb[0].mxu0 %v2027
    %v2156 = vpop.f32.mrb[0].mxu0
    %v2157 = vadd.f32 0.0, %v2156
    %v2158 = vpop.f32.mrb[0].mxu0
    %2159 = vmatprep.mubr.f32.mxu0 0.0
    %2160 = vmatmul.mubr.f32.gmra.mrb[0].mxu0 %v2030
    %v2161 = vpop.f32.mrb[0].mxu0
    %v2162 = vadd.f32 0.0, %v2161
    %v2163 = vpop.f32.mrb[0].mxu0
    %2164 = vmatprep.mubr.f32.mxu0 0.0
    %2165 = vmatmul.mubr.f32.gmra.mrb[0].mxu0 %v2033
    %v2166 = vpop.f32.mrb[0].mxu0
    %v2167 = vadd.f32 0.0, %v2166
    %v2168 = vpop.f32.mrb[0].mxu0
    %2169 = vmatprep.mubr.f32.mxu0 0.0
    %2170 = vmatmul.mubr.f32.gmra.mrb[0].mxu0 %v2036
    %v2171 = vpop.f32.mrb[0].mxu0
    %v2172 = vadd.f32 0.0, %v2171
    %v2173 = vpop.f32.mrb[0].mxu0
    %2174 = vmatprep.mubr.f32.mxu0 0.0
    %2175 = vmatmul.mubr.f32.gmra.mrb[0].mxu0 %v2039
    %v2176 = vpop.f32.mrb[0].mxu0
    %v2177 = vadd.f32 0.0, %v2176
    %v2178 = vpop.f32.mrb[0].mxu0
    %2179 = vmatprep.mubr.f32.mxu0 0.0
    %2180 = vmatmul.mubr.f32.gmra.mrb[0].mxu0 %v2042
    %v2181 = vpop.f32.mrb[0].mxu0
    %v2182 = vadd.f32 0.0, %v2181
    %v2183 = vpop.f32.mrb[0].mxu0
    %2184 = vmatprep.mubr.f32.mxu0 0.0
    %2185 = vmatmul.mubr.f32.gmra.mrb[0].mxu0 %v2045
    %v2186 = vpop.f32.mrb[0].mxu0
    %v2187 = vadd.f32 0.0, %v2186
    %v2188 = vpop.f32.mrb[0].mxu0
    %2189 = vmatprep.mubr.f32.mxu0 0.0
    %2190 = vmatmul.mubr.f32.gmra.mrb[0].mxu0 %v2048
    %v2191 = vpop.f32.mrb[0].mxu0
    %v2192 = vadd.f32 0.0, %v2191
    %v2193 = vpop.f32.mrb[0].mxu0
    %2194 = vdwg.mxu0
    %v2195 = vadd.f32 %v1961, %v2117
    %v2196 = vadd.f32 %v1962, %v2122
    %v2197 = vadd.f32 %v1963, %v2127
    %v2198 = vadd.f32 %v1964, %v2132
    %v2199 = vadd.f32 %v1965, %v2137
    %v2200 = vadd.f32 %v1966, %v2142
    %v2201 = vadd.f32 %v1967, %v2147
    %v2202 = vadd.f32 %v1968, %v2152
    %v2203 = vadd.f32 %v1969, %v2157
    %v2204 = vadd.f32 %v1970, %v2162
    %v2205 = vadd.f32 %v1971, %v2167
    %v2206 = vadd.f32 %v1972, %v2172
    %v2207 = vadd.f32 %v1973, %v2177
    %v2208 = vadd.f32 %v1974, %v2182
    %v2209 = vadd.f32 %v1975, %v2187
    %v2210 = vadd.f32 %v1976, %v2192
    %v2211 = vld [vmem:[%s1742 + $0x9] sm:$0xff]
    %v2212 = vld [vmem:[%s1742 + $0x21] sm:$0xff]
    %v2213 = vld [vmem:[%s1742 + $0x39] sm:$0xff]
    %v2214 = vld [vmem:[%s1742 + $0x51] sm:$0xff]
    %v2215 = vld [vmem:[%s1742 + $0x69] sm:$0xff]
    %v2216 = vld [vmem:[%s1742 + $0x81] sm:$0xff]
    %v2217 = vld [vmem:[%s1742 + $0x99] sm:$0xff]
    %v2218 = vld [vmem:[%s1742 + $0xb1] sm:$0xff]
    %v2219 = vld [vmem:[%s1742 + $0xf9] sm:$0xff]
    %v2220 = vld [vmem:[%s1742 + $0x111] sm:$0xff]
    %v2221 = vld [vmem:[%s1742 + $0x129] sm:$0xff]
    %v2222 = vld [vmem:[%s1742 + $0x141] sm:$0xff]
    %v2223 = vld [vmem:[%s1742 + $0x159] sm:$0xff]
    %v2224 = vld [vmem:[%s1742 + $0x171] sm:$0xff]
    %v2225 = vld [vmem:[%s1742 + $0x189] sm:$0xff]
    %v2226 = vld [vmem:[%s1742 + $0x1a1] sm:$0xff]
    %s2227 = scalar_lea.vmem [#allocation5], 512
    %v2228 = vld [vmem:[%s2227] sm:$0xff]
    %v2229 = vld [vmem:[%s2227 + $0x8] sm:$0xff]
    %v2230 = vld [vmem:[%s2227 + $0x10] sm:$0xff]
    %v2231 = vld [vmem:[%s2227 + $0x18] sm:$0xff]
    %v2232 = vld [vmem:[%s2227 + $0x20] sm:$0xff]
    %v2233 = vld [vmem:[%s2227 + $0x28] sm:$0xff]
    %v2234 = vld [vmem:[%s2227 + $0x30] sm:$0xff]
    %v2235 = vld [vmem:[%s2227 + $0x38] sm:$0xff]
    %v2237 = vsel %vm84, %v2211, 0
    %v2240 = vsel %vm84, %v2212, 0
    %v2243 = vsel %vm84, %v2213, 0
    %v2246 = vsel %vm84, %v2214, 0
    %v2249 = vsel %vm84, %v2215, 0
    %v2252 = vsel %vm84, %v2216, 0
    %v2255 = vsel %vm84, %v2217, 0
    %v2258 = vsel %vm84, %v2218, 0
    %v2261 = vsel %vm84, %v2219, 0
    %v2264 = vsel %vm84, %v2220, 0
    %v2267 = vsel %vm84, %v2221, 0
    %v2270 = vsel %vm84, %v2222, 0
    %v2273 = vsel %vm84, %v2223, 0
    %v2276 = vsel %vm84, %v2224, 0
    %v2279 = vsel %vm84, %v2225, 0
    %v2282 = vsel %vm84, %v2226, 0
    %2284 = vmatprep.subr.mxu0 0.0
    %2285 = vmatpush1.msra.mxu0 %v2228
    %2286 = vmatprep.subr.mxu0 0.0
    %2287 = vmatpush1.msra.mxu0 %v2229
    %2288 = vmatprep.subr.mxu0 0.0
    %2289 = vmatpush1.msra.mxu0 %v2230
    %2290 = vmatprep.subr.mxu0 0.0
    %2291 = vmatpush1.msra.mxu0 %v2231
    %2292 = vmatprep.subr.mxu0 0.0
    %2293 = vmatpush1.msra.mxu0 %v2232
    %2294 = vmatprep.subr.mxu0 0.0
    %2295 = vmatpush1.msra.mxu0 %v2233
    %2296 = vmatprep.subr.mxu0 0.0
    %2297 = vmatpush1.msra.mxu0 %v2234
    %2298 = vmatprep.subr.mxu0 0.0
    %2299 = vmatpush1.msra.mxu0 %v2235
    %2300 = vmatprep.subr.mxu0 0.0
    %2301 = vmatpush1.msra.mxu0 0.0
    %2302 = vmatprep.subr.mxu0 0.0
    %2303 = vmatpush1.msra.mxu0 0.0
    %2304 = vmatprep.subr.mxu0 0.0
    %2305 = vmatpush1.msra.mxu0 0.0
    %2306 = vmatprep.subr.mxu0 0.0
    %2307 = vmatpush1.msra.mxu0 0.0
    %2308 = vmatprep.subr.mxu0 0.0
    %2309 = vmatpush1.msra.mxu0 0.0
    %2310 = vmatprep.subr.mxu0 0.0
    %2311 = vmatpush1.msra.mxu0 0.0
    %2312 = vmatprep.subr.mxu0 0.0
    %2313 = vmatpush1.msra.mxu0 0.0
    %2314 = vmatprep.subr.mxu0 0.0
    %2315 = vmatpush1.msra.mxu0 0.0
    %2316 = vmatprep.subr.mxu0 0.0
    %2317 = vmatpush1.msra.mxu0 0.0
    %2318 = vmatprep.subr.mxu0 0.0
    %2319 = vmatpush1.msra.mxu0 0.0
    %2320 = vmatprep.subr.mxu0 0.0
    %2321 = vmatpush1.msra.mxu0 0.0
    %2322 = vmatprep.subr.mxu0 0.0
    %2323 = vmatpush1.msra.mxu0 0.0
    %2324 = vmatprep.subr.mxu0 0.0
    %2325 = vmatpush1.msra.mxu0 0.0
    %2326 = vmatprep.subr.mxu0 0.0
    %2327 = vmatpush1.msra.mxu0 0.0
    %2328 = vmatprep.subr.mxu0 0.0
    %2329 = vmatpush1.msra.mxu0 0.0
    %2330 = vmatprep.subr.mxu0 0.0
    %2331 = vmatpush1.msra.mxu0 0.0
    %2332 = vmatprep.subr.mxu0 0.0
    %2333 = vmatpush1.msra.mxu0 0.0
    %2334 = vmatprep.subr.mxu0 0.0
    %2335 = vmatpush1.msra.mxu0 0.0
    %2336 = vmatprep.subr.mxu0 0.0
    %2337 = vmatpush1.msra.mxu0 0.0
    %2338 = vmatprep.subr.mxu0 0.0
    %2339 = vmatpush1.msra.mxu0 0.0
    %2340 = vmatprep.subr.mxu0 0.0
    %2341 = vmatpush1.msra.mxu0 0.0
    %2342 = vmatprep.subr.mxu0 0.0
    %2343 = vmatpush1.msra.mxu0 0.0
    %2344 = vmatprep.subr.mxu0 0.0
    %2345 = vmatpush1.msra.mxu0 0.0
    %2346 = vmatprep.subr.mxu0 0.0
    %2347 = vmatpush1.msra.mxu0 0.0
    %2348 = vmatprep.mubr.f32.mxu0 0.0
    %2349 = vmatmul.mubr.f32.gmra.mrb[0].mxu0 %v2237
    %v2350 = vpop.f32.mrb[0].mxu0
    %v2351 = vadd.f32 0.0, %v2350
    %v2352 = vpop.f32.mrb[0].mxu0
    %2353 = vmatprep.mubr.f32.mxu0 0.0
    %2354 = vmatmul.mubr.f32.gmra.mrb[0].mxu0 %v2240
    %v2355 = vpop.f32.mrb[0].mxu0
    %v2356 = vadd.f32 0.0, %v2355
    %v2357 = vpop.f32.mrb[0].mxu0
    %2358 = vmatprep.mubr.f32.mxu0 0.0
    %2359 = vmatmul.mubr.f32.gmra.mrb[0].mxu0 %v2243
    %v2360 = vpop.f32.mrb[0].mxu0
    %v2361 = vadd.f32 0.0, %v2360
    %v2362 = vpop.f32.mrb[0].mxu0
    %2363 = vmatprep.mubr.f32.mxu0 0.0
    %2364 = vmatmul.mubr.f32.gmra.mrb[0].mxu0 %v2246
    %v2365 = vpop.f32.mrb[0].mxu0
    %v2366 = vadd.f32 0.0, %v2365
    %v2367 = vpop.f32.mrb[0].mxu0
    %2368 = vmatprep.mubr.f32.mxu0 0.0
    %2369 = vmatmul.mubr.f32.gmra.mrb[0].mxu0 %v2249
    %v2370 = vpop.f32.mrb[0].mxu0
    %v2371 = vadd.f32 0.0, %v2370
    %v2372 = vpop.f32.mrb[0].mxu0
    %2373 = vmatprep.mubr.f32.mxu0 0.0
    %2374 = vmatmul.mubr.f32.gmra.mrb[0].mxu0 %v2252
    %v2375 = vpop.f32.mrb[0].mxu0
    %v2376 = vadd.f32 0.0, %v2375
    %v2377 = vpop.f32.mrb[0].mxu0
    %2378 = vmatprep.mubr.f32.mxu0 0.0
    %2379 = vmatmul.mubr.f32.gmra.mrb[0].mxu0 %v2255
    %v2380 = vpop.f32.mrb[0].mxu0
    %v2381 = vadd.f32 0.0, %v2380
    %v2382 = vpop.f32.mrb[0].mxu0
    %2383 = vmatprep.mubr.f32.mxu0 0.0
    %2384 = vmatmul.mubr.f32.gmra.mrb[0].mxu0 %v2258
    %v2385 = vpop.f32.mrb[0].mxu0
    %v2386 = vadd.f32 0.0, %v2385
    %v2387 = vpop.f32.mrb[0].mxu0
    %2388 = vmatprep.mubr.f32.mxu0 0.0
    %2389 = vmatmul.mubr.f32.gmra.mrb[0].mxu0 %v2261
    %v2390 = vpop.f32.mrb[0].mxu0
    %v2391 = vadd.f32 0.0, %v2390
    %v2392 = vpop.f32.mrb[0].mxu0
    %2393 = vmatprep.mubr.f32.mxu0 0.0
    %2394 = vmatmul.mubr.f32.gmra.mrb[0].mxu0 %v2264
    %v2395 = vpop.f32.mrb[0].mxu0
    %v2396 = vadd.f32 0.0, %v2395
    %v2397 = vpop.f32.mrb[0].mxu0
    %2398 = vmatprep.mubr.f32.mxu0 0.0
    %2399 = vmatmul.mubr.f32.gmra.mrb[0].mxu0 %v2267
    %v2400 = vpop.f32.mrb[0].mxu0
    %v2401 = vadd.f32 0.0, %v2400
    %v2402 = vpop.f32.mrb[0].mxu0
    %2403 = vmatprep.mubr.f32.mxu0 0.0
    %2404 = vmatmul.mubr.f32.gmra.mrb[0].mxu0 %v2270
    %v2405 = vpop.f32.mrb[0].mxu0
    %v2406 = vadd.f32 0.0, %v2405
    %v2407 = vpop.f32.mrb[0].mxu0
    %2408 = vmatprep.mubr.f32.mxu0 0.0
    %2409 = vmatmul.mubr.f32.gmra.mrb[0].mxu0 %v2273
    %v2410 = vpop.f32.mrb[0].mxu0
    %v2411 = vadd.f32 0.0, %v2410
    %v2412 = vpop.f32.mrb[0].mxu0
    %2413 = vmatprep.mubr.f32.mxu0 0.0
    %2414 = vmatmul.mubr.f32.gmra.mrb[0].mxu0 %v2276
    %v2415 = vpop.f32.mrb[0].mxu0
    %v2416 = vadd.f32 0.0, %v2415
    %v2417 = vpop.f32.mrb[0].mxu0
    %2418 = vmatprep.mubr.f32.mxu0 0.0
    %2419 = vmatmul.mubr.f32.gmra.mrb[0].mxu0 %v2279
    %v2420 = vpop.f32.mrb[0].mxu0
    %v2421 = vadd.f32 0.0, %v2420
    %v2422 = vpop.f32.mrb[0].mxu0
    %2423 = vmatprep.mubr.f32.mxu0 0.0
    %2424 = vmatmul.mubr.f32.gmra.mrb[0].mxu0 %v2282
    %v2425 = vpop.f32.mrb[0].mxu0
    %v2426 = vadd.f32 0.0, %v2425
    %v2427 = vpop.f32.mrb[0].mxu0
    %2428 = vdwg.mxu0
    %v2429 = vadd.f32 %v2195, %v2351
    %v2430 = vadd.f32 %v2196, %v2356
    %v2431 = vadd.f32 %v2197, %v2361
    %v2432 = vadd.f32 %v2198, %v2366
    %v2433 = vadd.f32 %v2199, %v2371
    %v2434 = vadd.f32 %v2200, %v2376
    %v2435 = vadd.f32 %v2201, %v2381
    %v2436 = vadd.f32 %v2202, %v2386
    %v2437 = vadd.f32 %v2203, %v2391
    %v2438 = vadd.f32 %v2204, %v2396
    %v2439 = vadd.f32 %v2205, %v2401
    %v2440 = vadd.f32 %v2206, %v2406
    %v2441 = vadd.f32 %v2207, %v2411
    %v2442 = vadd.f32 %v2208, %v2416
    %v2443 = vadd.f32 %v2209, %v2421
    %v2444 = vadd.f32 %v2210, %v2426
    %v2445 = vld [vmem:[%s4] sm:$0x1]
    %v2447 = vlaneseq
    %v2448 = vshrl.u32 %v2447, 7
    %v2449 = vsub.s32 0, %v2448
    %v2450 = vrot.slane %v2445, %v2449
    %v2452 = vadd.f32 %v2429, %v2450
    %v2453 = vadd.f32 %v2430, %v2450
    %v2454 = vadd.f32 %v2431, %v2450
    %v2455 = vadd.f32 %v2432, %v2450
    %v2456 = vadd.f32 %v2433, %v2450
    %v2457 = vadd.f32 %v2434, %v2450
    %v2458 = vadd.f32 %v2435, %v2450
    %v2459 = vadd.f32 %v2436, %v2450
    %v2460 = vadd.f32 %v2437, %v2450
    %v2461 = vadd.f32 %v2438, %v2450
    %v2462 = vadd.f32 %v2439, %v2450
    %v2463 = vadd.f32 %v2440, %v2450
    %v2464 = vadd.f32 %v2441, %v2450
    %v2465 = vadd.f32 %v2442, %v2450
    %v2466 = vadd.f32 %v2443, %v2450
    %v2467 = vadd.f32 %v2444, %v2450
    %v2468 = vmax.f32 %v2452, 0.0
    %v2469 = vmax.f32 %v2453, 0.0
    %v2470 = vmax.f32 %v2454, 0.0
    %v2471 = vmax.f32 %v2455, 0.0
    %v2472 = vmax.f32 %v2456, 0.0
    %v2473 = vmax.f32 %v2457, 0.0
    %v2474 = vmax.f32 %v2458, 0.0
    %v2475 = vmax.f32 %v2459, 0.0
    %v2476 = vmax.f32 %v2460, 0.0
    %v2477 = vmax.f32 %v2461, 0.0
    %v2478 = vmax.f32 %v2462, 0.0
    %v2479 = vmax.f32 %v2463, 0.0
    %v2480 = vmax.f32 %v2464, 0.0
    %v2481 = vmax.f32 %v2465, 0.0
    %v2482 = vmax.f32 %v2466, 0.0
    %v2483 = vmax.f32 %v2467, 0.0
    %s2484 = scalar_lea.vmem [#allocation3], 24
    %2485 = vst.msk [vmem:[%s2484 + $0x8] sm:$0xff] %vm84, %v2468
    %2486 = vst.msk [vmem:[%s2484 + $0x20] sm:$0xff] %vm84, %v2469
    %2487 = vst.msk [vmem:[%s2484 + $0x38] sm:$0xff] %vm84, %v2470
    %2488 = vst.msk [vmem:[%s2484 + $0x50] sm:$0xff] %vm84, %v2471
    %2489 = vst.msk [vmem:[%s2484 + $0x68] sm:$0xff] %vm84, %v2472
    %2490 = vst.msk [vmem:[%s2484 + $0x80] sm:$0xff] %vm84, %v2473
    %2491 = vst.msk [vmem:[%s2484 + $0x98] sm:$0xff] %vm84, %v2474
    %2492 = vst.msk [vmem:[%s2484 + $0xb0] sm:$0xff] %vm84, %v2475
    %2493 = vst.msk [vmem:[%s2484 + $0xf8] sm:$0xff] %vm84, %v2476
    %2494 = vst.msk [vmem:[%s2484 + $0x110] sm:$0xff] %vm84, %v2477
    %2495 = vst.msk [vmem:[%s2484 + $0x128] sm:$0xff] %vm84, %v2478
    %2496 = vst.msk [vmem:[%s2484 + $0x140] sm:$0xff] %vm84, %v2479
    %2497 = vst.msk [vmem:[%s2484 + $0x158] sm:$0xff] %vm84, %v2480
    %2498 = vst.msk [vmem:[%s2484 + $0x170] sm:$0xff] %vm84, %v2481
    %2499 = vst.msk [vmem:[%s2484 + $0x188] sm:$0xff] %vm84, %v2482
    %2500 = vst.msk [vmem:[%s2484 + $0x1a0] sm:$0xff] %vm84, %v2483
    %v2501 = vld [vmem:[#allocation4] sm:$0x1]
    %s2502 = vtos %v2501
    %v2503 = vld [vmem:[#allocation3 + $0x7] sm:$0xff]
    %v2504 = vld [vmem:[#allocation3 + $0x1f] sm:$0xff]
    %v2505 = vld [vmem:[#allocation3 + $0x37] sm:$0xff]
    %v2506 = vld [vmem:[#allocation3 + $0x4f] sm:$0xff]
    %v2507 = vld [vmem:[#allocation3 + $0x67] sm:$0xff]
    %v2508 = vld [vmem:[#allocation3 + $0x7f] sm:$0xff]
    %v2509 = vld [vmem:[#allocation3 + $0x97] sm:$0xff]
    %v2510 = vld [vmem:[#allocation3 + $0xaf] sm:$0xff]
    %v2511 = vld [vmem:[#allocation3 + $0xf7] sm:$0xff]
    %v2512 = vld [vmem:[#allocation3 + $0x10f] sm:$0xff]
    %v2513 = vld [vmem:[#allocation3 + $0x127] sm:$0xff]
    %v2514 = vld [vmem:[#allocation3 + $0x13f] sm:$0xff]
    %v2515 = vld [vmem:[#allocation3 + $0x157] sm:$0xff]
    %v2516 = vld [vmem:[#allocation3 + $0x16f] sm:$0xff]
    %v2517 = vld [vmem:[#allocation3 + $0x187] sm:$0xff]
    %v2518 = vld [vmem:[#allocation3 + $0x19f] sm:$0xff]
    %v2519 = vld [vmem:[%s5] sm:$0x1]
    %v2520 = vlaneseq
    %v2521 = vshrl.u32 %v2520, 7
    %v2522 = vsub.s32 0, %v2521
    %v2523 = vrot.slane %v2519, %v2522
    %v2524 = vmul.f32 %v2503, %v2523
    %v2525 = vmul.f32 %v2504, %v2523
    %v2526 = vmul.f32 %v2505, %v2523
    %v2527 = vmul.f32 %v2506, %v2523
    %v2528 = vmul.f32 %v2507, %v2523
    %v2529 = vmul.f32 %v2508, %v2523
    %v2530 = vmul.f32 %v2509, %v2523
    %v2531 = vmul.f32 %v2510, %v2523
    %v2532 = vmul.f32 %v2511, %v2523
    %v2533 = vmul.f32 %v2512, %v2523
    %v2534 = vmul.f32 %v2513, %v2523
    %v2535 = vmul.f32 %v2514, %v2523
    %v2536 = vmul.f32 %v2515, %v2523
    %v2537 = vmul.f32 %v2516, %v2523
    %v2538 = vmul.f32 %v2517, %v2523
    %v2539 = vmul.f32 %v2518, %v2523
    %s2540 = scalar_lea.vmem %s5, 16
    %v2541 = vld [vmem:[%s2540] sm:$0x1]
    %v2542 = vlaneseq
    %v2543 = vshrl.u32 %v2542, 7
    %v2544 = vsub.s32 0, %v2543
    %v2545 = vrot.slane %v2541, %v2544
    %v2546 = vmul.f32 %v2503, %v2545
    %v2547 = vmul.f32 %v2504, %v2545
    %v2548 = vmul.f32 %v2505, %v2545
    %v2549 = vmul.f32 %v2506, %v2545
    %v2550 = vmul.f32 %v2507, %v2545
    %v2551 = vmul.f32 %v2508, %v2545
    %v2552 = vmul.f32 %v2509, %v2545
    %v2553 = vmul.f32 %v2510, %v2545
    %v2554 = vmul.f32 %v2511, %v2545
    %v2555 = vmul.f32 %v2512, %v2545
    %v2556 = vmul.f32 %v2513, %v2545
    %v2557 = vmul.f32 %v2514, %v2545
    %v2558 = vmul.f32 %v2515, %v2545
    %v2559 = vmul.f32 %v2516, %v2545
    %v2560 = vmul.f32 %v2517, %v2545
    %v2561 = vmul.f32 %v2518, %v2545
    %s2562 = scalar_lea.vmem %s5, 32
    %v2563 = vld [vmem:[%s2562] sm:$0x1]
    %v2564 = vlaneseq
    %v2565 = vshrl.u32 %v2564, 7
    %v2566 = vsub.s32 0, %v2565
    %v2567 = vrot.slane %v2563, %v2566
    %v2568 = vmul.f32 %v2503, %v2567
    %v2569 = vmul.f32 %v2504, %v2567
    %v2570 = vmul.f32 %v2505, %v2567
    %v2571 = vmul.f32 %v2506, %v2567
    %v2572 = vmul.f32 %v2507, %v2567
    %v2573 = vmul.f32 %v2508, %v2567
    %v2574 = vmul.f32 %v2509, %v2567
    %v2575 = vmul.f32 %v2510, %v2567
    %v2576 = vmul.f32 %v2511, %v2567
    %v2577 = vmul.f32 %v2512, %v2567
    %v2578 = vmul.f32 %v2513, %v2567
    %v2579 = vmul.f32 %v2514, %v2567
    %v2580 = vmul.f32 %v2515, %v2567
    %v2581 = vmul.f32 %v2516, %v2567
    %v2582 = vmul.f32 %v2517, %v2567
    %v2583 = vmul.f32 %v2518, %v2567
    %s2584 = scalar_lea.vmem %s5, 48
    %v2585 = vld [vmem:[%s2584] sm:$0x1]
    %v2586 = vlaneseq
    %v2587 = vshrl.u32 %v2586, 7
    %v2588 = vsub.s32 0, %v2587
    %v2589 = vrot.slane %v2585, %v2588
    %v2590 = vmul.f32 %v2503, %v2589
    %v2591 = vmul.f32 %v2504, %v2589
    %v2592 = vmul.f32 %v2505, %v2589
    %v2593 = vmul.f32 %v2506, %v2589
    %v2594 = vmul.f32 %v2507, %v2589
    %v2595 = vmul.f32 %v2508, %v2589
    %v2596 = vmul.f32 %v2509, %v2589
    %v2597 = vmul.f32 %v2510, %v2589
    %v2598 = vmul.f32 %v2511, %v2589
    %v2599 = vmul.f32 %v2512, %v2589
    %v2600 = vmul.f32 %v2513, %v2589
    %v2601 = vmul.f32 %v2514, %v2589
    %v2602 = vmul.f32 %v2515, %v2589
    %v2603 = vmul.f32 %v2516, %v2589
    %v2604 = vmul.f32 %v2517, %v2589
    %v2605 = vmul.f32 %v2518, %v2589
    %v2606 = vld [vmem:[#allocation3 + $0x8] sm:$0xff]
    %v2607 = vld [vmem:[#allocation3 + $0x20] sm:$0xff]
    %v2608 = vld [vmem:[#allocation3 + $0x38] sm:$0xff]
    %v2609 = vld [vmem:[#allocation3 + $0x50] sm:$0xff]
    %v2610 = vld [vmem:[#allocation3 + $0x68] sm:$0xff]
    %v2611 = vld [vmem:[#allocation3 + $0x80] sm:$0xff]
    %v2612 = vld [vmem:[#allocation3 + $0x98] sm:$0xff]
    %v2613 = vld [vmem:[#allocation3 + $0xb0] sm:$0xff]
    %v2614 = vld [vmem:[#allocation3 + $0xf8] sm:$0xff]
    %v2615 = vld [vmem:[#allocation3 + $0x110] sm:$0xff]
    %v2616 = vld [vmem:[#allocation3 + $0x128] sm:$0xff]
    %v2617 = vld [vmem:[#allocation3 + $0x140] sm:$0xff]
    %v2618 = vld [vmem:[#allocation3 + $0x158] sm:$0xff]
    %v2619 = vld [vmem:[#allocation3 + $0x170] sm:$0xff]
    %v2620 = vld [vmem:[#allocation3 + $0x188] sm:$0xff]
    %v2621 = vld [vmem:[#allocation3 + $0x1a0] sm:$0xff]
    %v2622 = vld [vmem:[%s5 + $0x1] sm:$0x1]
    %v2623 = vlaneseq
    %v2624 = vshrl.u32 %v2623, 7
    %v2625 = vsub.s32 0, %v2624
    %v2626 = vrot.slane %v2622, %v2625
    %v2627 = vmul.f32 %v2606, %v2626
    %v2628 = vmul.f32 %v2607, %v2626
    %v2629 = vmul.f32 %v2608, %v2626
    %v2630 = vmul.f32 %v2609, %v2626
    %v2631 = vmul.f32 %v2610, %v2626
    %v2632 = vmul.f32 %v2611, %v2626
    %v2633 = vmul.f32 %v2612, %v2626
    %v2634 = vmul.f32 %v2613, %v2626
    %v2635 = vmul.f32 %v2614, %v2626
    %v2636 = vmul.f32 %v2615, %v2626
    %v2637 = vmul.f32 %v2616, %v2626
    %v2638 = vmul.f32 %v2617, %v2626
    %v2639 = vmul.f32 %v2618, %v2626
    %v2640 = vmul.f32 %v2619, %v2626
    %v2641 = vmul.f32 %v2620, %v2626
    %v2642 = vmul.f32 %v2621, %v2626
    %v2643 = vadd.f32 %v2524, %v2627
    %v2644 = vadd.f32 %v2525, %v2628
    %v2645 = vadd.f32 %v2526, %v2629
    %v2646 = vadd.f32 %v2527, %v2630
    %v2647 = vadd.f32 %v2528, %v2631
    %v2648 = vadd.f32 %v2529, %v2632
    %v2649 = vadd.f32 %v2530, %v2633
    %v2650 = vadd.f32 %v2531, %v2634
    %v2651 = vadd.f32 %v2532, %v2635
    %v2652 = vadd.f32 %v2533, %v2636
    %v2653 = vadd.f32 %v2534, %v2637
    %v2654 = vadd.f32 %v2535, %v2638
    %v2655 = vadd.f32 %v2536, %v2639
    %v2656 = vadd.f32 %v2537, %v2640
    %v2657 = vadd.f32 %v2538, %v2641
    %v2658 = vadd.f32 %v2539, %v2642
    %v2659 = vld [vmem:[%s2540 + $0x1] sm:$0x1]
    %v2660 = vlaneseq
    %v2661 = vshrl.u32 %v2660, 7
    %v2662 = vsub.s32 0, %v2661
    %v2663 = vrot.slane %v2659, %v2662
    %v2664 = vmul.f32 %v2606, %v2663
    %v2665 = vmul.f32 %v2607, %v2663
    %v2666 = vmul.f32 %v2608, %v2663
    %v2667 = vmul.f32 %v2609, %v2663
    %v2668 = vmul.f32 %v2610, %v2663
    %v2669 = vmul.f32 %v2611, %v2663
    %v2670 = vmul.f32 %v2612, %v2663
    %v2671 = vmul.f32 %v2613, %v2663
    %v2672 = vmul.f32 %v2614, %v2663
    %v2673 = vmul.f32 %v2615, %v2663
    %v2674 = vmul.f32 %v2616, %v2663
    %v2675 = vmul.f32 %v2617, %v2663
    %v2676 = vmul.f32 %v2618, %v2663
    %v2677 = vmul.f32 %v2619, %v2663
    %v2678 = vmul.f32 %v2620, %v2663
    %v2679 = vmul.f32 %v2621, %v2663
    %v2680 = vadd.f32 %v2546, %v2664
    %v2681 = vadd.f32 %v2547, %v2665
    %v2682 = vadd.f32 %v2548, %v2666
    %v2683 = vadd.f32 %v2549, %v2667
    %v2684 = vadd.f32 %v2550, %v2668
    %v2685 = vadd.f32 %v2551, %v2669
    %v2686 = vadd.f32 %v2552, %v2670
    %v2687 = vadd.f32 %v2553, %v2671
    %v2688 = vadd.f32 %v2554, %v2672
    %v2689 = vadd.f32 %v2555, %v2673
    %v2690 = vadd.f32 %v2556, %v2674
    %v2691 = vadd.f32 %v2557, %v2675
    %v2692 = vadd.f32 %v2558, %v2676
    %v2693 = vadd.f32 %v2559, %v2677
    %v2694 = vadd.f32 %v2560, %v2678
    %v2695 = vadd.f32 %v2561, %v2679
    %v2696 = vld [vmem:[%s2562 + $0x1] sm:$0x1]
    %v2697 = vlaneseq
    %v2698 = vshrl.u32 %v2697, 7
    %v2699 = vsub.s32 0, %v2698
    %v2700 = vrot.slane %v2696, %v2699
    %v2701 = vmul.f32 %v2606, %v2700
    %v2702 = vmul.f32 %v2607, %v2700
    %v2703 = vmul.f32 %v2608, %v2700
    %v2704 = vmul.f32 %v2609, %v2700
    %v2705 = vmul.f32 %v2610, %v2700
    %v2706 = vmul.f32 %v2611, %v2700
    %v2707 = vmul.f32 %v2612, %v2700
    %v2708 = vmul.f32 %v2613, %v2700
    %v2709 = vmul.f32 %v2614, %v2700
    %v2710 = vmul.f32 %v2615, %v2700
    %v2711 = vmul.f32 %v2616, %v2700
    %v2712 = vmul.f32 %v2617, %v2700
    %v2713 = vmul.f32 %v2618, %v2700
    %v2714 = vmul.f32 %v2619, %v2700
    %v2715 = vmul.f32 %v2620, %v2700
    %v2716 = vmul.f32 %v2621, %v2700
    %v2717 = vadd.f32 %v2568, %v2701
    %v2718 = vadd.f32 %v2569, %v2702
    %v2719 = vadd.f32 %v2570, %v2703
    %v2720 = vadd.f32 %v2571, %v2704
    %v2721 = vadd.f32 %v2572, %v2705
    %v2722 = vadd.f32 %v2573, %v2706
    %v2723 = vadd.f32 %v2574, %v2707
    %v2724 = vadd.f32 %v2575, %v2708
    %v2725 = vadd.f32 %v2576, %v2709
    %v2726 = vadd.f32 %v2577, %v2710
    %v2727 = vadd.f32 %v2578, %v2711
    %v2728 = vadd.f32 %v2579, %v2712
    %v2729 = vadd.f32 %v2580, %v2713
    %v2730 = vadd.f32 %v2581, %v2714
    %v2731 = vadd.f32 %v2582, %v2715
    %v2732 = vadd.f32 %v2583, %v2716
    %v2733 = vld [vmem:[%s2584 + $0x1] sm:$0x1]
    %v2734 = vlaneseq
    %v2735 = vshrl.u32 %v2734, 7
    %v2736 = vsub.s32 0, %v2735
    %v2737 = vrot.slane %v2733, %v2736
    %v2738 = vmul.f32 %v2606, %v2737
    %v2739 = vmul.f32 %v2607, %v2737
    %v2740 = vmul.f32 %v2608, %v2737
    %v2741 = vmul.f32 %v2609, %v2737
    %v2742 = vmul.f32 %v2610, %v2737
    %v2743 = vmul.f32 %v2611, %v2737
    %v2744 = vmul.f32 %v2612, %v2737
    %v2745 = vmul.f32 %v2613, %v2737
    %v2746 = vmul.f32 %v2614, %v2737
    %v2747 = vmul.f32 %v2615, %v2737
    %v2748 = vmul.f32 %v2616, %v2737
    %v2749 = vmul.f32 %v2617, %v2737
    %v2750 = vmul.f32 %v2618, %v2737
    %v2751 = vmul.f32 %v2619, %v2737
    %v2752 = vmul.f32 %v2620, %v2737
    %v2753 = vmul.f32 %v2621, %v2737
    %v2754 = vadd.f32 %v2590, %v2738
    %v2755 = vadd.f32 %v2591, %v2739
    %v2756 = vadd.f32 %v2592, %v2740
    %v2757 = vadd.f32 %v2593, %v2741
    %v2758 = vadd.f32 %v2594, %v2742
    %v2759 = vadd.f32 %v2595, %v2743
    %v2760 = vadd.f32 %v2596, %v2744
    %v2761 = vadd.f32 %v2597, %v2745
    %v2762 = vadd.f32 %v2598, %v2746
    %v2763 = vadd.f32 %v2599, %v2747
    %v2764 = vadd.f32 %v2600, %v2748
    %v2765 = vadd.f32 %v2601, %v2749
    %v2766 = vadd.f32 %v2602, %v2750
    %v2767 = vadd.f32 %v2603, %v2751
    %v2768 = vadd.f32 %v2604, %v2752
    %v2769 = vadd.f32 %v2605, %v2753
    %v2770 = vld [vmem:[#allocation3 + $0x9] sm:$0xff]
    %v2771 = vld [vmem:[#allocation3 + $0x21] sm:$0xff]
    %v2772 = vld [vmem:[#allocation3 + $0x39] sm:$0xff]
    %v2773 = vld [vmem:[#allocation3 + $0x51] sm:$0xff]
    %v2774 = vld [vmem:[#allocation3 + $0x69] sm:$0xff]
    %v2775 = vld [vmem:[#allocation3 + $0x81] sm:$0xff]
    %v2776 = vld [vmem:[#allocation3 + $0x99] sm:$0xff]
    %v2777 = vld [vmem:[#allocation3 + $0xb1] sm:$0xff]
    %v2778 = vld [vmem:[#allocation3 + $0xf9] sm:$0xff]
    %v2779 = vld [vmem:[#allocation3 + $0x111] sm:$0xff]
    %v2780 = vld [vmem:[#allocation3 + $0x129] sm:$0xff]
    %v2781 = vld [vmem:[#allocation3 + $0x141] sm:$0xff]
    %v2782 = vld [vmem:[#allocation3 + $0x159] sm:$0xff]
    %v2783 = vld [vmem:[#allocation3 + $0x171] sm:$0xff]
    %v2784 = vld [vmem:[#allocation3 + $0x189] sm:$0xff]
    %v2785 = vld [vmem:[#allocation3 + $0x1a1] sm:$0xff]
    %v2786 = vld [vmem:[%s5 + $0x2] sm:$0x1]
    %v2787 = vlaneseq
    %v2788 = vshrl.u32 %v2787, 7
    %v2789 = vsub.s32 0, %v2788
    %v2790 = vrot.slane %v2786, %v2789
    %v2791 = vmul.f32 %v2770, %v2790
    %v2792 = vmul.f32 %v2771, %v2790
    %v2793 = vmul.f32 %v2772, %v2790
    %v2794 = vmul.f32 %v2773, %v2790
    %v2795 = vmul.f32 %v2774, %v2790
    %v2796 = vmul.f32 %v2775, %v2790
    %v2797 = vmul.f32 %v2776, %v2790
    %v2798 = vmul.f32 %v2777, %v2790
    %v2799 = vmul.f32 %v2778, %v2790
    %v2800 = vmul.f32 %v2779, %v2790
    %v2801 = vmul.f32 %v2780, %v2790
    %v2802 = vmul.f32 %v2781, %v2790
    %v2803 = vmul.f32 %v2782, %v2790
    %v2804 = vmul.f32 %v2783, %v2790
    %v2805 = vmul.f32 %v2784, %v2790
    %v2806 = vmul.f32 %v2785, %v2790
    %v2807 = vadd.f32 %v2643, %v2791
    %v2808 = vadd.f32 %v2644, %v2792
    %v2809 = vadd.f32 %v2645, %v2793
    %v2810 = vadd.f32 %v2646, %v2794
    %v2811 = vadd.f32 %v2647, %v2795
    %v2812 = vadd.f32 %v2648, %v2796
    %v2813 = vadd.f32 %v2649, %v2797
    %v2814 = vadd.f32 %v2650, %v2798
    %v2815 = vadd.f32 %v2651, %v2799
    %v2816 = vadd.f32 %v2652, %v2800
    %v2817 = vadd.f32 %v2653, %v2801
    %v2818 = vadd.f32 %v2654, %v2802
    %v2819 = vadd.f32 %v2655, %v2803
    %v2820 = vadd.f32 %v2656, %v2804
    %v2821 = vadd.f32 %v2657, %v2805
    %v2822 = vadd.f32 %v2658, %v2806
    %v2823 = vld [vmem:[%s2540 + $0x2] sm:$0x1]
    %v2824 = vlaneseq
    %v2825 = vshrl.u32 %v2824, 7
    %v2826 = vsub.s32 0, %v2825
    %v2827 = vrot.slane %v2823, %v2826
    %v2828 = vmul.f32 %v2770, %v2827
    %v2829 = vmul.f32 %v2771, %v2827
    %v2830 = vmul.f32 %v2772, %v2827
    %v2831 = vmul.f32 %v2773, %v2827
    %v2832 = vmul.f32 %v2774, %v2827
    %v2833 = vmul.f32 %v2775, %v2827
    %v2834 = vmul.f32 %v2776, %v2827
    %v2835 = vmul.f32 %v2777, %v2827
    %v2836 = vmul.f32 %v2778, %v2827
    %v2837 = vmul.f32 %v2779, %v2827
    %v2838 = vmul.f32 %v2780, %v2827
    %v2839 = vmul.f32 %v2781, %v2827
    %v2840 = vmul.f32 %v2782, %v2827
    %v2841 = vmul.f32 %v2783, %v2827
    %v2842 = vmul.f32 %v2784, %v2827
    %v2843 = vmul.f32 %v2785, %v2827
    %v2844 = vadd.f32 %v2680, %v2828
    %v2845 = vadd.f32 %v2681, %v2829
    %v2846 = vadd.f32 %v2682, %v2830
    %v2847 = vadd.f32 %v2683, %v2831
    %v2848 = vadd.f32 %v2684, %v2832
    %v2849 = vadd.f32 %v2685, %v2833
    %v2850 = vadd.f32 %v2686, %v2834
    %v2851 = vadd.f32 %v2687, %v2835
    %v2852 = vadd.f32 %v2688, %v2836
    %v2853 = vadd.f32 %v2689, %v2837
    %v2854 = vadd.f32 %v2690, %v2838
    %v2855 = vadd.f32 %v2691, %v2839
    %v2856 = vadd.f32 %v2692, %v2840
    %v2857 = vadd.f32 %v2693, %v2841
    %v2858 = vadd.f32 %v2694, %v2842
    %v2859 = vadd.f32 %v2695, %v2843
    %v2860 = vld [vmem:[%s2562 + $0x2] sm:$0x1]
    %v2861 = vlaneseq
    %v2862 = vshrl.u32 %v2861, 7
    %v2863 = vsub.s32 0, %v2862
    %v2864 = vrot.slane %v2860, %v2863
    %v2865 = vmul.f32 %v2770, %v2864
    %v2866 = vmul.f32 %v2771, %v2864
    %v2867 = vmul.f32 %v2772, %v2864
    %v2868 = vmul.f32 %v2773, %v2864
    %v2869 = vmul.f32 %v2774, %v2864
    %v2870 = vmul.f32 %v2775, %v2864
    %v2871 = vmul.f32 %v2776, %v2864
    %v2872 = vmul.f32 %v2777, %v2864
    %v2873 = vmul.f32 %v2778, %v2864
    %v2874 = vmul.f32 %v2779, %v2864
    %v2875 = vmul.f32 %v2780, %v2864
    %v2876 = vmul.f32 %v2781, %v2864
    %v2877 = vmul.f32 %v2782, %v2864
    %v2878 = vmul.f32 %v2783, %v2864
    %v2879 = vmul.f32 %v2784, %v2864
    %v2880 = vmul.f32 %v2785, %v2864
    %v2881 = vadd.f32 %v2717, %v2865
    %v2882 = vadd.f32 %v2718, %v2866
    %v2883 = vadd.f32 %v2719, %v2867
    %v2884 = vadd.f32 %v2720, %v2868
    %v2885 = vadd.f32 %v2721, %v2869
    %v2886 = vadd.f32 %v2722, %v2870
    %v2887 = vadd.f32 %v2723, %v2871
    %v2888 = vadd.f32 %v2724, %v2872
    %v2889 = vadd.f32 %v2725, %v2873
    %v2890 = vadd.f32 %v2726, %v2874
    %v2891 = vadd.f32 %v2727, %v2875
    %v2892 = vadd.f32 %v2728, %v2876
    %v2893 = vadd.f32 %v2729, %v2877
    %v2894 = vadd.f32 %v2730, %v2878
    %v2895 = vadd.f32 %v2731, %v2879
    %v2896 = vadd.f32 %v2732, %v2880
    %v2897 = vld [vmem:[%s2584 + $0x2] sm:$0x1]
    %v2898 = vlaneseq
    %v2899 = vshrl.u32 %v2898, 7
    %v2900 = vsub.s32 0, %v2899
    %v2901 = vrot.slane %v2897, %v2900
    %v2902 = vmul.f32 %v2770, %v2901
    %v2903 = vmul.f32 %v2771, %v2901
    %v2904 = vmul.f32 %v2772, %v2901
    %v2905 = vmul.f32 %v2773, %v2901
    %v2906 = vmul.f32 %v2774, %v2901
    %v2907 = vmul.f32 %v2775, %v2901
    %v2908 = vmul.f32 %v2776, %v2901
    %v2909 = vmul.f32 %v2777, %v2901
    %v2910 = vmul.f32 %v2778, %v2901
    %v2911 = vmul.f32 %v2779, %v2901
    %v2912 = vmul.f32 %v2780, %v2901
    %v2913 = vmul.f32 %v2781, %v2901
    %v2914 = vmul.f32 %v2782, %v2901
    %v2915 = vmul.f32 %v2783, %v2901
    %v2916 = vmul.f32 %v2784, %v2901
    %v2917 = vmul.f32 %v2785, %v2901
    %v2918 = vadd.f32 %v2754, %v2902
    %v2919 = vadd.f32 %v2755, %v2903
    %v2920 = vadd.f32 %v2756, %v2904
    %v2921 = vadd.f32 %v2757, %v2905
    %v2922 = vadd.f32 %v2758, %v2906
    %v2923 = vadd.f32 %v2759, %v2907
    %v2924 = vadd.f32 %v2760, %v2908
    %v2925 = vadd.f32 %v2761, %v2909
    %v2926 = vadd.f32 %v2762, %v2910
    %v2927 = vadd.f32 %v2763, %v2911
    %v2928 = vadd.f32 %v2764, %v2912
    %v2929 = vadd.f32 %v2765, %v2913
    %v2930 = vadd.f32 %v2766, %v2914
    %v2931 = vadd.f32 %v2767, %v2915
    %v2932 = vadd.f32 %v2768, %v2916
    %v2933 = vadd.f32 %v2769, %v2917
    %v2934 = vld [vmem:[%s2484 + $0x7] sm:$0xff]
    %v2935 = vld [vmem:[%s2484 + $0x1f] sm:$0xff]
    %v2936 = vld [vmem:[%s2484 + $0x37] sm:$0xff]
    %v2937 = vld [vmem:[%s2484 + $0x4f] sm:$0xff]
    %v2938 = vld [vmem:[%s2484 + $0x67] sm:$0xff]
    %v2939 = vld [vmem:[%s2484 + $0x7f] sm:$0xff]
    %v2940 = vld [vmem:[%s2484 + $0x97] sm:$0xff]
    %v2941 = vld [vmem:[%s2484 + $0xaf] sm:$0xff]
    %v2942 = vld [vmem:[%s2484 + $0xf7] sm:$0xff]
    %v2943 = vld [vmem:[%s2484 + $0x10f] sm:$0xff]
    %v2944 = vld [vmem:[%s2484 + $0x127] sm:$0xff]
    %v2945 = vld [vmem:[%s2484 + $0x13f] sm:$0xff]
    %v2946 = vld [vmem:[%s2484 + $0x157] sm:$0xff]
    %v2947 = vld [vmem:[%s2484 + $0x16f] sm:$0xff]
    %v2948 = vld [vmem:[%s2484 + $0x187] sm:$0xff]
    %v2949 = vld [vmem:[%s2484 + $0x19f] sm:$0xff]
    %v2950 = vld [vmem:[%s5 + $0x3] sm:$0x1]
    %v2951 = vlaneseq
    %v2952 = vshrl.u32 %v2951, 7
    %v2953 = vsub.s32 0, %v2952
    %v2954 = vrot.slane %v2950, %v2953
    %v2955 = vmul.f32 %v2934, %v2954
    %v2956 = vmul.f32 %v2935, %v2954
    %v2957 = vmul.f32 %v2936, %v2954
    %v2958 = vmul.f32 %v2937, %v2954
    %v2959 = vmul.f32 %v2938, %v2954
    %v2960 = vmul.f32 %v2939, %v2954
    %v2961 = vmul.f32 %v2940, %v2954
    %v2962 = vmul.f32 %v2941, %v2954
    %v2963 = vmul.f32 %v2942, %v2954
    %v2964 = vmul.f32 %v2943, %v2954
    %v2965 = vmul.f32 %v2944, %v2954
    %v2966 = vmul.f32 %v2945, %v2954
    %v2967 = vmul.f32 %v2946, %v2954
    %v2968 = vmul.f32 %v2947, %v2954
    %v2969 = vmul.f32 %v2948, %v2954
    %v2970 = vmul.f32 %v2949, %v2954
    %v2971 = vadd.f32 %v2807, %v2955
    %v2972 = vadd.f32 %v2808, %v2956
    %v2973 = vadd.f32 %v2809, %v2957
    %v2974 = vadd.f32 %v2810, %v2958
    %v2975 = vadd.f32 %v2811, %v2959
    %v2976 = vadd.f32 %v2812, %v2960
    %v2977 = vadd.f32 %v2813, %v2961
    %v2978 = vadd.f32 %v2814, %v2962
    %v2979 = vadd.f32 %v2815, %v2963
    %v2980 = vadd.f32 %v2816, %v2964
    %v2981 = vadd.f32 %v2817, %v2965
    %v2982 = vadd.f32 %v2818, %v2966
    %v2983 = vadd.f32 %v2819, %v2967
    %v2984 = vadd.f32 %v2820, %v2968
    %v2985 = vadd.f32 %v2821, %v2969
    %v2986 = vadd.f32 %v2822, %v2970
    %v2987 = vld [vmem:[%s2540 + $0x3] sm:$0x1]
    %v2988 = vlaneseq
    %v2989 = vshrl.u32 %v2988, 7
    %v2990 = vsub.s32 0, %v2989
    %v2991 = vrot.slane %v2987, %v2990
    %v2992 = vmul.f32 %v2934, %v2991
    %v2993 = vmul.f32 %v2935, %v2991
    %v2994 = vmul.f32 %v2936, %v2991
    %v2995 = vmul.f32 %v2937, %v2991
    %v2996 = vmul.f32 %v2938, %v2991
    %v2997 = vmul.f32 %v2939, %v2991
    %v2998 = vmul.f32 %v2940, %v2991
    %v2999 = vmul.f32 %v2941, %v2991
    %v3000 = vmul.f32 %v2942, %v2991
    %v3001 = vmul.f32 %v2943, %v2991
    %v3002 = vmul.f32 %v2944, %v2991
    %v3003 = vmul.f32 %v2945, %v2991
    %v3004 = vmul.f32 %v2946, %v2991
    %v3005 = vmul.f32 %v2947, %v2991
    %v3006 = vmul.f32 %v2948, %v2991
    %v3007 = vmul.f32 %v2949, %v2991
    %v3008 = vadd.f32 %v2844, %v2992
    %v3009 = vadd.f32 %v2845, %v2993
    %v3010 = vadd.f32 %v2846, %v2994
    %v3011 = vadd.f32 %v2847, %v2995
    %v3012 = vadd.f32 %v2848, %v2996
    %v3013 = vadd.f32 %v2849, %v2997
    %v3014 = vadd.f32 %v2850, %v2998
    %v3015 = vadd.f32 %v2851, %v2999
    %v3016 = vadd.f32 %v2852, %v3000
    %v3017 = vadd.f32 %v2853, %v3001
    %v3018 = vadd.f32 %v2854, %v3002
    %v3019 = vadd.f32 %v2855, %v3003
    %v3020 = vadd.f32 %v2856, %v3004
    %v3021 = vadd.f32 %v2857, %v3005
    %v3022 = vadd.f32 %v2858, %v3006
    %v3023 = vadd.f32 %v2859, %v3007
    %v3024 = vld [vmem:[%s2562 + $0x3] sm:$0x1]
    %v3025 = vlaneseq
    %v3026 = vshrl.u32 %v3025, 7
    %v3027 = vsub.s32 0, %v3026
    %v3028 = vrot.slane %v3024, %v3027
    %v3029 = vmul.f32 %v2934, %v3028
    %v3030 = vmul.f32 %v2935, %v3028
    %v3031 = vmul.f32 %v2936, %v3028
    %v3032 = vmul.f32 %v2937, %v3028
    %v3033 = vmul.f32 %v2938, %v3028
    %v3034 = vmul.f32 %v2939, %v3028
    %v3035 = vmul.f32 %v2940, %v3028
    %v3036 = vmul.f32 %v2941, %v3028
    %v3037 = vmul.f32 %v2942, %v3028
    %v3038 = vmul.f32 %v2943, %v3028
    %v3039 = vmul.f32 %v2944, %v3028
    %v3040 = vmul.f32 %v2945, %v3028
    %v3041 = vmul.f32 %v2946, %v3028
    %v3042 = vmul.f32 %v2947, %v3028
    %v3043 = vmul.f32 %v2948, %v3028
    %v3044 = vmul.f32 %v2949, %v3028
    %v3045 = vadd.f32 %v2881, %v3029
    %v3046 = vadd.f32 %v2882, %v3030
    %v3047 = vadd.f32 %v2883, %v3031
    %v3048 = vadd.f32 %v2884, %v3032
    %v3049 = vadd.f32 %v2885, %v3033
    %v3050 = vadd.f32 %v2886, %v3034
    %v3051 = vadd.f32 %v2887, %v3035
    %v3052 = vadd.f32 %v2888, %v3036
    %v3053 = vadd.f32 %v2889, %v3037
    %v3054 = vadd.f32 %v2890, %v3038
    %v3055 = vadd.f32 %v2891, %v3039
    %v3056 = vadd.f32 %v2892, %v3040
    %v3057 = vadd.f32 %v2893, %v3041
    %v3058 = vadd.f32 %v2894, %v3042
    %v3059 = vadd.f32 %v2895, %v3043
    %v3060 = vadd.f32 %v2896, %v3044
    %v3061 = vld [vmem:[%s2584 + $0x3] sm:$0x1]
    %v3062 = vlaneseq
    %v3063 = vshrl.u32 %v3062, 7
    %v3064 = vsub.s32 0, %v3063
    %v3065 = vrot.slane %v3061, %v3064
    %v3066 = vmul.f32 %v2934, %v3065
    %v3067 = vmul.f32 %v2935, %v3065
    %v3068 = vmul.f32 %v2936, %v3065
    %v3069 = vmul.f32 %v2937, %v3065
    %v3070 = vmul.f32 %v2938, %v3065
    %v3071 = vmul.f32 %v2939, %v3065
    %v3072 = vmul.f32 %v2940, %v3065
    %v3073 = vmul.f32 %v2941, %v3065
    %v3074 = vmul.f32 %v2942, %v3065
    %v3075 = vmul.f32 %v2943, %v3065
    %v3076 = vmul.f32 %v2944, %v3065
    %v3077 = vmul.f32 %v2945, %v3065
    %v3078 = vmul.f32 %v2946, %v3065
    %v3079 = vmul.f32 %v2947, %v3065
    %v3080 = vmul.f32 %v2948, %v3065
    %v3081 = vmul.f32 %v2949, %v3065
    %v3082 = vadd.f32 %v2918, %v3066
    %v3083 = vadd.f32 %v2919, %v3067
    %v3084 = vadd.f32 %v2920, %v3068
    %v3085 = vadd.f32 %v2921, %v3069
    %v3086 = vadd.f32 %v2922, %v3070
    %v3087 = vadd.f32 %v2923, %v3071
    %v3088 = vadd.f32 %v2924, %v3072
    %v3089 = vadd.f32 %v2925, %v3073
    %v3090 = vadd.f32 %v2926, %v3074
    %v3091 = vadd.f32 %v2927, %v3075
    %v3092 = vadd.f32 %v2928, %v3076
    %v3093 = vadd.f32 %v2929, %v3077
    %v3094 = vadd.f32 %v2930, %v3078
    %v3095 = vadd.f32 %v2931, %v3079
    %v3096 = vadd.f32 %v2932, %v3080
    %v3097 = vadd.f32 %v2933, %v3081
    %v3098 = vld [vmem:[%s2484 + $0x8] sm:$0xff]
    %v3099 = vld [vmem:[%s2484 + $0x20] sm:$0xff]
    %v3100 = vld [vmem:[%s2484 + $0x38] sm:$0xff]
    %v3101 = vld [vmem:[%s2484 + $0x50] sm:$0xff]
    %v3102 = vld [vmem:[%s2484 + $0x68] sm:$0xff]
    %v3103 = vld [vmem:[%s2484 + $0x80] sm:$0xff]
    %v3104 = vld [vmem:[%s2484 + $0x98] sm:$0xff]
    %v3105 = vld [vmem:[%s2484 + $0xb0] sm:$0xff]
    %v3106 = vld [vmem:[%s2484 + $0xf8] sm:$0xff]
    %v3107 = vld [vmem:[%s2484 + $0x110] sm:$0xff]
    %v3108 = vld [vmem:[%s2484 + $0x128] sm:$0xff]
    %v3109 = vld [vmem:[%s2484 + $0x140] sm:$0xff]
    %v3110 = vld [vmem:[%s2484 + $0x158] sm:$0xff]
    %v3111 = vld [vmem:[%s2484 + $0x170] sm:$0xff]
    %v3112 = vld [vmem:[%s2484 + $0x188] sm:$0xff]
    %v3113 = vld [vmem:[%s2484 + $0x1a0] sm:$0xff]
    %v3114 = vld [vmem:[%s5 + $0x4] sm:$0x1]
    %v3115 = vlaneseq
    %v3116 = vshrl.u32 %v3115, 7
    %v3117 = vsub.s32 0, %v3116
    %v3118 = vrot.slane %v3114, %v3117
    %v3119 = vmul.f32 %v3098, %v3118
    %v3120 = vmul.f32 %v3099, %v3118
    %v3121 = vmul.f32 %v3100, %v3118
    %v3122 = vmul.f32 %v3101, %v3118
    %v3123 = vmul.f32 %v3102, %v3118
    %v3124 = vmul.f32 %v3103, %v3118
    %v3125 = vmul.f32 %v3104, %v3118
    %v3126 = vmul.f32 %v3105, %v3118
    %v3127 = vmul.f32 %v3106, %v3118
    %v3128 = vmul.f32 %v3107, %v3118
    %v3129 = vmul.f32 %v3108, %v3118
    %v3130 = vmul.f32 %v3109, %v3118
    %v3131 = vmul.f32 %v3110, %v3118
    %v3132 = vmul.f32 %v3111, %v3118
    %v3133 = vmul.f32 %v3112, %v3118
    %v3134 = vmul.f32 %v3113, %v3118
    %v3135 = vadd.f32 %v2971, %v3119
    %v3136 = vadd.f32 %v2972, %v3120
    %v3137 = vadd.f32 %v2973, %v3121
    %v3138 = vadd.f32 %v2974, %v3122
    %v3139 = vadd.f32 %v2975, %v3123
    %v3140 = vadd.f32 %v2976, %v3124
    %v3141 = vadd.f32 %v2977, %v3125
    %v3142 = vadd.f32 %v2978, %v3126
    %v3143 = vadd.f32 %v2979, %v3127
    %v3144 = vadd.f32 %v2980, %v3128
    %v3145 = vadd.f32 %v2981, %v3129
    %v3146 = vadd.f32 %v2982, %v3130
    %v3147 = vadd.f32 %v2983, %v3131
    %v3148 = vadd.f32 %v2984, %v3132
    %v3149 = vadd.f32 %v2985, %v3133
    %v3150 = vadd.f32 %v2986, %v3134
    %v3151 = vld [vmem:[%s2540 + $0x4] sm:$0x1]
    %v3152 = vlaneseq
    %v3153 = vshrl.u32 %v3152, 7
    %v3154 = vsub.s32 0, %v3153
    %v3155 = vrot.slane %v3151, %v3154
    %v3156 = vmul.f32 %v3098, %v3155
    %v3157 = vmul.f32 %v3099, %v3155
    %v3158 = vmul.f32 %v3100, %v3155
    %v3159 = vmul.f32 %v3101, %v3155
    %v3160 = vmul.f32 %v3102, %v3155
    %v3161 = vmul.f32 %v3103, %v3155
    %v3162 = vmul.f32 %v3104, %v3155
    %v3163 = vmul.f32 %v3105, %v3155
    %v3164 = vmul.f32 %v3106, %v3155
    %v3165 = vmul.f32 %v3107, %v3155
    %v3166 = vmul.f32 %v3108, %v3155
    %v3167 = vmul.f32 %v3109, %v3155
    %v3168 = vmul.f32 %v3110, %v3155
    %v3169 = vmul.f32 %v3111, %v3155
    %v3170 = vmul.f32 %v3112, %v3155
    %v3171 = vmul.f32 %v3113, %v3155
    %v3172 = vadd.f32 %v3008, %v3156
    %v3173 = vadd.f32 %v3009, %v3157
    %v3174 = vadd.f32 %v3010, %v3158
    %v3175 = vadd.f32 %v3011, %v3159
    %v3176 = vadd.f32 %v3012, %v3160
    %v3177 = vadd.f32 %v3013, %v3161
    %v3178 = vadd.f32 %v3014, %v3162
    %v3179 = vadd.f32 %v3015, %v3163
    %v3180 = vadd.f32 %v3016, %v3164
    %v3181 = vadd.f32 %v3017, %v3165
    %v3182 = vadd.f32 %v3018, %v3166
    %v3183 = vadd.f32 %v3019, %v3167
    %v3184 = vadd.f32 %v3020, %v3168
    %v3185 = vadd.f32 %v3021, %v3169
    %v3186 = vadd.f32 %v3022, %v3170
    %v3187 = vadd.f32 %v3023, %v3171
    %v3188 = vld [vmem:[%s2562 + $0x4] sm:$0x1]
    %v3189 = vlaneseq
    %v3190 = vshrl.u32 %v3189, 7
    %v3191 = vsub.s32 0, %v3190
    %v3192 = vrot.slane %v3188, %v3191
    %v3193 = vmul.f32 %v3098, %v3192
    %v3194 = vmul.f32 %v3099, %v3192
    %v3195 = vmul.f32 %v3100, %v3192
    %v3196 = vmul.f32 %v3101, %v3192
    %v3197 = vmul.f32 %v3102, %v3192
    %v3198 = vmul.f32 %v3103, %v3192
    %v3199 = vmul.f32 %v3104, %v3192
    %v3200 = vmul.f32 %v3105, %v3192
    %v3201 = vmul.f32 %v3106, %v3192
    %v3202 = vmul.f32 %v3107, %v3192
    %v3203 = vmul.f32 %v3108, %v3192
    %v3204 = vmul.f32 %v3109, %v3192
    %v3205 = vmul.f32 %v3110, %v3192
    %v3206 = vmul.f32 %v3111, %v3192
    %v3207 = vmul.f32 %v3112, %v3192
    %v3208 = vmul.f32 %v3113, %v3192
    %v3209 = vadd.f32 %v3045, %v3193
    %v3210 = vadd.f32 %v3046, %v3194
    %v3211 = vadd.f32 %v3047, %v3195
    %v3212 = vadd.f32 %v3048, %v3196
    %v3213 = vadd.f32 %v3049, %v3197
    %v3214 = vadd.f32 %v3050, %v3198
    %v3215 = vadd.f32 %v3051, %v3199
    %v3216 = vadd.f32 %v3052, %v3200
    %v3217 = vadd.f32 %v3053, %v3201
    %v3218 = vadd.f32 %v3054, %v3202
    %v3219 = vadd.f32 %v3055, %v3203
    %v3220 = vadd.f32 %v3056, %v3204
    %v3221 = vadd.f32 %v3057, %v3205
    %v3222 = vadd.f32 %v3058, %v3206
    %v3223 = vadd.f32 %v3059, %v3207
    %v3224 = vadd.f32 %v3060, %v3208
    %v3225 = vld [vmem:[%s2584 + $0x4] sm:$0x1]
    %v3226 = vlaneseq
    %v3227 = vshrl.u32 %v3226, 7
    %v3228 = vsub.s32 0, %v3227
    %v3229 = vrot.slane %v3225, %v3228
    %v3230 = vmul.f32 %v3098, %v3229
    %v3231 = vmul.f32 %v3099, %v3229
    %v3232 = vmul.f32 %v3100, %v3229
    %v3233 = vmul.f32 %v3101, %v3229
    %v3234 = vmul.f32 %v3102, %v3229
    %v3235 = vmul.f32 %v3103, %v3229
    %v3236 = vmul.f32 %v3104, %v3229
    %v3237 = vmul.f32 %v3105, %v3229
    %v3238 = vmul.f32 %v3106, %v3229
    %v3239 = vmul.f32 %v3107, %v3229
    %v3240 = vmul.f32 %v3108, %v3229
    %v3241 = vmul.f32 %v3109, %v3229
    %v3242 = vmul.f32 %v3110, %v3229
    %v3243 = vmul.f32 %v3111, %v3229
    %v3244 = vmul.f32 %v3112, %v3229
    %v3245 = vmul.f32 %v3113, %v3229
    %v3246 = vadd.f32 %v3082, %v3230
    %v3247 = vadd.f32 %v3083, %v3231
    %v3248 = vadd.f32 %v3084, %v3232
    %v3249 = vadd.f32 %v3085, %v3233
    %v3250 = vadd.f32 %v3086, %v3234
    %v3251 = vadd.f32 %v3087, %v3235
    %v3252 = vadd.f32 %v3088, %v3236
    %v3253 = vadd.f32 %v3089, %v3237
    %v3254 = vadd.f32 %v3090, %v3238
    %v3255 = vadd.f32 %v3091, %v3239
    %v3256 = vadd.f32 %v3092, %v3240
    %v3257 = vadd.f32 %v3093, %v3241
    %v3258 = vadd.f32 %v3094, %v3242
    %v3259 = vadd.f32 %v3095, %v3243
    %v3260 = vadd.f32 %v3096, %v3244
    %v3261 = vadd.f32 %v3097, %v3245
    %v3262 = vld [vmem:[%s2484 + $0x9] sm:$0xff]
    %v3263 = vld [vmem:[%s2484 + $0x21] sm:$0xff]
    %v3264 = vld [vmem:[%s2484 + $0x39] sm:$0xff]
    %v3265 = vld [vmem:[%s2484 + $0x51] sm:$0xff]
    %v3266 = vld [vmem:[%s2484 + $0x69] sm:$0xff]
    %v3267 = vld [vmem:[%s2484 + $0x81] sm:$0xff]
    %v3268 = vld [vmem:[%s2484 + $0x99] sm:$0xff]
    %v3269 = vld [vmem:[%s2484 + $0xb1] sm:$0xff]
    %v3270 = vld [vmem:[%s2484 + $0xf9] sm:$0xff]
    %v3271 = vld [vmem:[%s2484 + $0x111] sm:$0xff]
    %v3272 = vld [vmem:[%s2484 + $0x129] sm:$0xff]
    %v3273 = vld [vmem:[%s2484 + $0x141] sm:$0xff]
    %v3274 = vld [vmem:[%s2484 + $0x159] sm:$0xff]
    %v3275 = vld [vmem:[%s2484 + $0x171] sm:$0xff]
    %v3276 = vld [vmem:[%s2484 + $0x189] sm:$0xff]
    %v3277 = vld [vmem:[%s2484 + $0x1a1] sm:$0xff]
    %v3278 = vld [vmem:[%s5 + $0x5] sm:$0x1]
    %v3279 = vlaneseq
    %v3280 = vshrl.u32 %v3279, 7
    %v3281 = vsub.s32 0, %v3280
    %v3282 = vrot.slane %v3278, %v3281
    %v3283 = vmul.f32 %v3262, %v3282
    %v3284 = vmul.f32 %v3263, %v3282
    %v3285 = vmul.f32 %v3264, %v3282
    %v3286 = vmul.f32 %v3265, %v3282
    %v3287 = vmul.f32 %v3266, %v3282
    %v3288 = vmul.f32 %v3267, %v3282
    %v3289 = vmul.f32 %v3268, %v3282
    %v3290 = vmul.f32 %v3269, %v3282
    %v3291 = vmul.f32 %v3270, %v3282
    %v3292 = vmul.f32 %v3271, %v3282
    %v3293 = vmul.f32 %v3272, %v3282
    %v3294 = vmul.f32 %v3273, %v3282
    %v3295 = vmul.f32 %v3274, %v3282
    %v3296 = vmul.f32 %v3275, %v3282
    %v3297 = vmul.f32 %v3276, %v3282
    %v3298 = vmul.f32 %v3277, %v3282
    %v3299 = vadd.f32 %v3135, %v3283
    %v3300 = vadd.f32 %v3136, %v3284
    %v3301 = vadd.f32 %v3137, %v3285
    %v3302 = vadd.f32 %v3138, %v3286
    %v3303 = vadd.f32 %v3139, %v3287
    %v3304 = vadd.f32 %v3140, %v3288
    %v3305 = vadd.f32 %v3141, %v3289
    %v3306 = vadd.f32 %v3142, %v3290
    %v3307 = vadd.f32 %v3143, %v3291
    %v3308 = vadd.f32 %v3144, %v3292
    %v3309 = vadd.f32 %v3145, %v3293
    %v3310 = vadd.f32 %v3146, %v3294
    %v3311 = vadd.f32 %v3147, %v3295
    %v3312 = vadd.f32 %v3148, %v3296
    %v3313 = vadd.f32 %v3149, %v3297
    %v3314 = vadd.f32 %v3150, %v3298
    %v3315 = vld [vmem:[%s2540 + $0x5] sm:$0x1]
    %v3316 = vlaneseq
    %v3317 = vshrl.u32 %v3316, 7
    %v3318 = vsub.s32 0, %v3317
    %v3319 = vrot.slane %v3315, %v3318
    %v3320 = vmul.f32 %v3262, %v3319
    %v3321 = vmul.f32 %v3263, %v3319
    %v3322 = vmul.f32 %v3264, %v3319
    %v3323 = vmul.f32 %v3265, %v3319
    %v3324 = vmul.f32 %v3266, %v3319
    %v3325 = vmul.f32 %v3267, %v3319
    %v3326 = vmul.f32 %v3268, %v3319
    %v3327 = vmul.f32 %v3269, %v3319
    %v3328 = vmul.f32 %v3270, %v3319
    %v3329 = vmul.f32 %v3271, %v3319
    %v3330 = vmul.f32 %v3272, %v3319
    %v3331 = vmul.f32 %v3273, %v3319
    %v3332 = vmul.f32 %v3274, %v3319
    %v3333 = vmul.f32 %v3275, %v3319
    %v3334 = vmul.f32 %v3276, %v3319
    %v3335 = vmul.f32 %v3277, %v3319
    %v3336 = vadd.f32 %v3172, %v3320
    %v3337 = vadd.f32 %v3173, %v3321
    %v3338 = vadd.f32 %v3174, %v3322
    %v3339 = vadd.f32 %v3175, %v3323
    %v3340 = vadd.f32 %v3176, %v3324
    %v3341 = vadd.f32 %v3177, %v3325
    %v3342 = vadd.f32 %v3178, %v3326
    %v3343 = vadd.f32 %v3179, %v3327
    %v3344 = vadd.f32 %v3180, %v3328
    %v3345 = vadd.f32 %v3181, %v3329
    %v3346 = vadd.f32 %v3182, %v3330
    %v3347 = vadd.f32 %v3183, %v3331
    %v3348 = vadd.f32 %v3184, %v3332
    %v3349 = vadd.f32 %v3185, %v3333
    %v3350 = vadd.f32 %v3186, %v3334
    %v3351 = vadd.f32 %v3187, %v3335
    %v3352 = vld [vmem:[%s2562 + $0x5] sm:$0x1]
    %v3353 = vlaneseq
    %v3354 = vshrl.u32 %v3353, 7
    %v3355 = vsub.s32 0, %v3354
    %v3356 = vrot.slane %v3352, %v3355
    %v3357 = vmul.f32 %v3262, %v3356
    %v3358 = vmul.f32 %v3263, %v3356
    %v3359 = vmul.f32 %v3264, %v3356
    %v3360 = vmul.f32 %v3265, %v3356
    %v3361 = vmul.f32 %v3266, %v3356
    %v3362 = vmul.f32 %v3267, %v3356
    %v3363 = vmul.f32 %v3268, %v3356
    %v3364 = vmul.f32 %v3269, %v3356
    %v3365 = vmul.f32 %v3270, %v3356
    %v3366 = vmul.f32 %v3271, %v3356
    %v3367 = vmul.f32 %v3272, %v3356
    %v3368 = vmul.f32 %v3273, %v3356
    %v3369 = vmul.f32 %v3274, %v3356
    %v3370 = vmul.f32 %v3275, %v3356
    %v3371 = vmul.f32 %v3276, %v3356
    %v3372 = vmul.f32 %v3277, %v3356
    %v3373 = vadd.f32 %v3209, %v3357
    %v3374 = vadd.f32 %v3210, %v3358
    %v3375 = vadd.f32 %v3211, %v3359
    %v3376 = vadd.f32 %v3212, %v3360
    %v3377 = vadd.f32 %v3213, %v3361
    %v3378 = vadd.f32 %v3214, %v3362
    %v3379 = vadd.f32 %v3215, %v3363
    %v3380 = vadd.f32 %v3216, %v3364
    %v3381 = vadd.f32 %v3217, %v3365
    %v3382 = vadd.f32 %v3218, %v3366
    %v3383 = vadd.f32 %v3219, %v3367
    %v3384 = vadd.f32 %v3220, %v3368
    %v3385 = vadd.f32 %v3221, %v3369
    %v3386 = vadd.f32 %v3222, %v3370
    %v3387 = vadd.f32 %v3223, %v3371
    %v3388 = vadd.f32 %v3224, %v3372
    %v3389 = vld [vmem:[%s2584 + $0x5] sm:$0x1]
    %v3390 = vlaneseq
    %v3391 = vshrl.u32 %v3390, 7
    %v3392 = vsub.s32 0, %v3391
    %v3393 = vrot.slane %v3389, %v3392
    %v3394 = vmul.f32 %v3262, %v3393
    %v3395 = vmul.f32 %v3263, %v3393
    %v3396 = vmul.f32 %v3264, %v3393
    %v3397 = vmul.f32 %v3265, %v3393
    %v3398 = vmul.f32 %v3266, %v3393
    %v3399 = vmul.f32 %v3267, %v3393
    %v3400 = vmul.f32 %v3268, %v3393
    %v3401 = vmul.f32 %v3269, %v3393
    %v3402 = vmul.f32 %v3270, %v3393
    %v3403 = vmul.f32 %v3271, %v3393
    %v3404 = vmul.f32 %v3272, %v3393
    %v3405 = vmul.f32 %v3273, %v3393
    %v3406 = vmul.f32 %v3274, %v3393
    %v3407 = vmul.f32 %v3275, %v3393
    %v3408 = vmul.f32 %v3276, %v3393
    %v3409 = vmul.f32 %v3277, %v3393
    %v3410 = vadd.f32 %v3246, %v3394
    %v3411 = vadd.f32 %v3247, %v3395
    %v3412 = vadd.f32 %v3248, %v3396
    %v3413 = vadd.f32 %v3249, %v3397
    %v3414 = vadd.f32 %v3250, %v3398
    %v3415 = vadd.f32 %v3251, %v3399
    %v3416 = vadd.f32 %v3252, %v3400
    %v3417 = vadd.f32 %v3253, %v3401
    %v3418 = vadd.f32 %v3254, %v3402
    %v3419 = vadd.f32 %v3255, %v3403
    %v3420 = vadd.f32 %v3256, %v3404
    %v3421 = vadd.f32 %v3257, %v3405
    %v3422 = vadd.f32 %v3258, %v3406
    %v3423 = vadd.f32 %v3259, %v3407
    %v3424 = vadd.f32 %v3260, %v3408
    %v3425 = vadd.f32 %v3261, %v3409
    %s3426 = scalar_lea.vmem [#allocation3], 48
    %v3427 = vld [vmem:[%s3426 + $0x7] sm:$0xff]
    %v3428 = vld [vmem:[%s3426 + $0x1f] sm:$0xff]
    %v3429 = vld [vmem:[%s3426 + $0x37] sm:$0xff]
    %v3430 = vld [vmem:[%s3426 + $0x4f] sm:$0xff]
    %v3431 = vld [vmem:[%s3426 + $0x67] sm:$0xff]
    %v3432 = vld [vmem:[%s3426 + $0x7f] sm:$0xff]
    %v3433 = vld [vmem:[%s3426 + $0x97] sm:$0xff]
    %v3434 = vld [vmem:[%s3426 + $0xaf] sm:$0xff]
    %v3435 = vld [vmem:[%s3426 + $0xf7] sm:$0xff]
    %v3436 = vld [vmem:[%s3426 + $0x10f] sm:$0xff]
    %v3437 = vld [vmem:[%s3426 + $0x127] sm:$0xff]
    %v3438 = vld [vmem:[%s3426 + $0x13f] sm:$0xff]
    %v3439 = vld [vmem:[%s3426 + $0x157] sm:$0xff]
    %v3440 = vld [vmem:[%s3426 + $0x16f] sm:$0xff]
    %v3441 = vld [vmem:[%s3426 + $0x187] sm:$0xff]
    %v3442 = vld [vmem:[%s3426 + $0x19f] sm:$0xff]
    %v3443 = vld [vmem:[%s5 + $0x6] sm:$0x1]
    %v3444 = vlaneseq
    %v3445 = vshrl.u32 %v3444, 7
    %v3446 = vsub.s32 0, %v3445
    %v3447 = vrot.slane %v3443, %v3446
    %v3448 = vmul.f32 %v3427, %v3447
    %v3449 = vmul.f32 %v3428, %v3447
    %v3450 = vmul.f32 %v3429, %v3447
    %v3451 = vmul.f32 %v3430, %v3447
    %v3452 = vmul.f32 %v3431, %v3447
    %v3453 = vmul.f32 %v3432, %v3447
    %v3454 = vmul.f32 %v3433, %v3447
    %v3455 = vmul.f32 %v3434, %v3447
    %v3456 = vmul.f32 %v3435, %v3447
    %v3457 = vmul.f32 %v3436, %v3447
    %v3458 = vmul.f32 %v3437, %v3447
    %v3459 = vmul.f32 %v3438, %v3447
    %v3460 = vmul.f32 %v3439, %v3447
    %v3461 = vmul.f32 %v3440, %v3447
    %v3462 = vmul.f32 %v3441, %v3447
    %v3463 = vmul.f32 %v3442, %v3447
    %v3464 = vadd.f32 %v3299, %v3448
    %v3465 = vadd.f32 %v3300, %v3449
    %v3466 = vadd.f32 %v3301, %v3450
    %v3467 = vadd.f32 %v3302, %v3451
    %v3468 = vadd.f32 %v3303, %v3452
    %v3469 = vadd.f32 %v3304, %v3453
    %v3470 = vadd.f32 %v3305, %v3454
    %v3471 = vadd.f32 %v3306, %v3455
    %v3472 = vadd.f32 %v3307, %v3456
    %v3473 = vadd.f32 %v3308, %v3457
    %v3474 = vadd.f32 %v3309, %v3458
    %v3475 = vadd.f32 %v3310, %v3459
    %v3476 = vadd.f32 %v3311, %v3460
    %v3477 = vadd.f32 %v3312, %v3461
    %v3478 = vadd.f32 %v3313, %v3462
    %v3479 = vadd.f32 %v3314, %v3463
    %v3480 = vld [vmem:[%s2540 + $0x6] sm:$0x1]
    %v3481 = vlaneseq
    %v3482 = vshrl.u32 %v3481, 7
    %v3483 = vsub.s32 0, %v3482
    %v3484 = vrot.slane %v3480, %v3483
    %v3485 = vmul.f32 %v3427, %v3484
    %v3486 = vmul.f32 %v3428, %v3484
    %v3487 = vmul.f32 %v3429, %v3484
    %v3488 = vmul.f32 %v3430, %v3484
    %v3489 = vmul.f32 %v3431, %v3484
    %v3490 = vmul.f32 %v3432, %v3484
    %v3491 = vmul.f32 %v3433, %v3484
    %v3492 = vmul.f32 %v3434, %v3484
    %v3493 = vmul.f32 %v3435, %v3484
    %v3494 = vmul.f32 %v3436, %v3484
    %v3495 = vmul.f32 %v3437, %v3484
    %v3496 = vmul.f32 %v3438, %v3484
    %v3497 = vmul.f32 %v3439, %v3484
    %v3498 = vmul.f32 %v3440, %v3484
    %v3499 = vmul.f32 %v3441, %v3484
    %v3500 = vmul.f32 %v3442, %v3484
    %v3501 = vadd.f32 %v3336, %v3485
    %v3502 = vadd.f32 %v3337, %v3486
    %v3503 = vadd.f32 %v3338, %v3487
    %v3504 = vadd.f32 %v3339, %v3488
    %v3505 = vadd.f32 %v3340, %v3489
    %v3506 = vadd.f32 %v3341, %v3490
    %v3507 = vadd.f32 %v3342, %v3491
    %v3508 = vadd.f32 %v3343, %v3492
    %v3509 = vadd.f32 %v3344, %v3493
    %v3510 = vadd.f32 %v3345, %v3494
    %v3511 = vadd.f32 %v3346, %v3495
    %v3512 = vadd.f32 %v3347, %v3496
    %v3513 = vadd.f32 %v3348, %v3497
    %v3514 = vadd.f32 %v3349, %v3498
    %v3515 = vadd.f32 %v3350, %v3499
    %v3516 = vadd.f32 %v3351, %v3500
    %v3517 = vld [vmem:[%s2562 + $0x6] sm:$0x1]
    %v3518 = vlaneseq
    %v3519 = vshrl.u32 %v3518, 7
    %v3520 = vsub.s32 0, %v3519
    %v3521 = vrot.slane %v3517, %v3520
    %v3522 = vmul.f32 %v3427, %v3521
    %v3523 = vmul.f32 %v3428, %v3521
    %v3524 = vmul.f32 %v3429, %v3521
    %v3525 = vmul.f32 %v3430, %v3521
    %v3526 = vmul.f32 %v3431, %v3521
    %v3527 = vmul.f32 %v3432, %v3521
    %v3528 = vmul.f32 %v3433, %v3521
    %v3529 = vmul.f32 %v3434, %v3521
    %v3530 = vmul.f32 %v3435, %v3521
    %v3531 = vmul.f32 %v3436, %v3521
    %v3532 = vmul.f32 %v3437, %v3521
    %v3533 = vmul.f32 %v3438, %v3521
    %v3534 = vmul.f32 %v3439, %v3521
    %v3535 = vmul.f32 %v3440, %v3521
    %v3536 = vmul.f32 %v3441, %v3521
    %v3537 = vmul.f32 %v3442, %v3521
    %v3538 = vadd.f32 %v3373, %v3522
    %v3539 = vadd.f32 %v3374, %v3523
    %v3540 = vadd.f32 %v3375, %v3524
    %v3541 = vadd.f32 %v3376, %v3525
    %v3542 = vadd.f32 %v3377, %v3526
    %v3543 = vadd.f32 %v3378, %v3527
    %v3544 = vadd.f32 %v3379, %v3528
    %v3545 = vadd.f32 %v3380, %v3529
    %v3546 = vadd.f32 %v3381, %v3530
    %v3547 = vadd.f32 %v3382, %v3531
    %v3548 = vadd.f32 %v3383, %v3532
    %v3549 = vadd.f32 %v3384, %v3533
    %v3550 = vadd.f32 %v3385, %v3534
    %v3551 = vadd.f32 %v3386, %v3535
    %v3552 = vadd.f32 %v3387, %v3536
    %v3553 = vadd.f32 %v3388, %v3537
    %v3554 = vld [vmem:[%s2584 + $0x6] sm:$0x1]
    %v3555 = vlaneseq
    %v3556 = vshrl.u32 %v3555, 7
    %v3557 = vsub.s32 0, %v3556
    %v3558 = vrot.slane %v3554, %v3557
    %v3559 = vmul.f32 %v3427, %v3558
    %v3560 = vmul.f32 %v3428, %v3558
    %v3561 = vmul.f32 %v3429, %v3558
    %v3562 = vmul.f32 %v3430, %v3558
    %v3563 = vmul.f32 %v3431, %v3558
    %v3564 = vmul.f32 %v3432, %v3558
    %v3565 = vmul.f32 %v3433, %v3558
    %v3566 = vmul.f32 %v3434, %v3558
    %v3567 = vmul.f32 %v3435, %v3558
    %v3568 = vmul.f32 %v3436, %v3558
    %v3569 = vmul.f32 %v3437, %v3558
    %v3570 = vmul.f32 %v3438, %v3558
    %v3571 = vmul.f32 %v3439, %v3558
    %v3572 = vmul.f32 %v3440, %v3558
    %v3573 = vmul.f32 %v3441, %v3558
    %v3574 = vmul.f32 %v3442, %v3558
    %v3575 = vadd.f32 %v3410, %v3559
    %v3576 = vadd.f32 %v3411, %v3560
    %v3577 = vadd.f32 %v3412, %v3561
    %v3578 = vadd.f32 %v3413, %v3562
    %v3579 = vadd.f32 %v3414, %v3563
    %v3580 = vadd.f32 %v3415, %v3564
    %v3581 = vadd.f32 %v3416, %v3565
    %v3582 = vadd.f32 %v3417, %v3566
    %v3583 = vadd.f32 %v3418, %v3567
    %v3584 = vadd.f32 %v3419, %v3568
    %v3585 = vadd.f32 %v3420, %v3569
    %v3586 = vadd.f32 %v3421, %v3570
    %v3587 = vadd.f32 %v3422, %v3571
    %v3588 = vadd.f32 %v3423, %v3572
    %v3589 = vadd.f32 %v3424, %v3573
    %v3590 = vadd.f32 %v3425, %v3574
    %v3591 = vld [vmem:[%s3426 + $0x8] sm:$0xff]
    %v3592 = vld [vmem:[%s3426 + $0x20] sm:$0xff]
    %v3593 = vld [vmem:[%s3426 + $0x38] sm:$0xff]
    %v3594 = vld [vmem:[%s3426 + $0x50] sm:$0xff]
    %v3595 = vld [vmem:[%s3426 + $0x68] sm:$0xff]
    %v3596 = vld [vmem:[%s3426 + $0x80] sm:$0xff]
    %v3597 = vld [vmem:[%s3426 + $0x98] sm:$0xff]
    %v3598 = vld [vmem:[%s3426 + $0xb0] sm:$0xff]
    %v3599 = vld [vmem:[%s3426 + $0xf8] sm:$0xff]
    %v3600 = vld [vmem:[%s3426 + $0x110] sm:$0xff]
    %v3601 = vld [vmem:[%s3426 + $0x128] sm:$0xff]
    %v3602 = vld [vmem:[%s3426 + $0x140] sm:$0xff]
    %v3603 = vld [vmem:[%s3426 + $0x158] sm:$0xff]
    %v3604 = vld [vmem:[%s3426 + $0x170] sm:$0xff]
    %v3605 = vld [vmem:[%s3426 + $0x188] sm:$0xff]
    %v3606 = vld [vmem:[%s3426 + $0x1a0] sm:$0xff]
    %v3607 = vld [vmem:[%s5 + $0x7] sm:$0x1]
    %v3608 = vlaneseq
    %v3609 = vshrl.u32 %v3608, 7
    %v3610 = vsub.s32 0, %v3609
    %v3611 = vrot.slane %v3607, %v3610
    %v3612 = vmul.f32 %v3591, %v3611
    %v3613 = vmul.f32 %v3592, %v3611
    %v3614 = vmul.f32 %v3593, %v3611
    %v3615 = vmul.f32 %v3594, %v3611
    %v3616 = vmul.f32 %v3595, %v3611
    %v3617 = vmul.f32 %v3596, %v3611
    %v3618 = vmul.f32 %v3597, %v3611
    %v3619 = vmul.f32 %v3598, %v3611
    %v3620 = vmul.f32 %v3599, %v3611
    %v3621 = vmul.f32 %v3600, %v3611
    %v3622 = vmul.f32 %v3601, %v3611
    %v3623 = vmul.f32 %v3602, %v3611
    %v3624 = vmul.f32 %v3603, %v3611
    %v3625 = vmul.f32 %v3604, %v3611
    %v3626 = vmul.f32 %v3605, %v3611
    %v3627 = vmul.f32 %v3606, %v3611
    %v3628 = vadd.f32 %v3464, %v3612
    %v3629 = vadd.f32 %v3465, %v3613
    %v3630 = vadd.f32 %v3466, %v3614
    %v3631 = vadd.f32 %v3467, %v3615
    %v3632 = vadd.f32 %v3468, %v3616
    %v3633 = vadd.f32 %v3469, %v3617
    %v3634 = vadd.f32 %v3470, %v3618
    %v3635 = vadd.f32 %v3471, %v3619
    %v3636 = vadd.f32 %v3472, %v3620
    %v3637 = vadd.f32 %v3473, %v3621
    %v3638 = vadd.f32 %v3474, %v3622
    %v3639 = vadd.f32 %v3475, %v3623
    %v3640 = vadd.f32 %v3476, %v3624
    %v3641 = vadd.f32 %v3477, %v3625
    %v3642 = vadd.f32 %v3478, %v3626
    %v3643 = vadd.f32 %v3479, %v3627
    %v3644 = vld [vmem:[%s2540 + $0x7] sm:$0x1]
    %v3645 = vlaneseq
    %v3646 = vshrl.u32 %v3645, 7
    %v3647 = vsub.s32 0, %v3646
    %v3648 = vrot.slane %v3644, %v3647
    %v3649 = vmul.f32 %v3591, %v3648
    %v3650 = vmul.f32 %v3592, %v3648
    %v3651 = vmul.f32 %v3593, %v3648
    %v3652 = vmul.f32 %v3594, %v3648
    %v3653 = vmul.f32 %v3595, %v3648
    %v3654 = vmul.f32 %v3596, %v3648
    %v3655 = vmul.f32 %v3597, %v3648
    %v3656 = vmul.f32 %v3598, %v3648
    %v3657 = vmul.f32 %v3599, %v3648
    %v3658 = vmul.f32 %v3600, %v3648
    %v3659 = vmul.f32 %v3601, %v3648
    %v3660 = vmul.f32 %v3602, %v3648
    %v3661 = vmul.f32 %v3603, %v3648
    %v3662 = vmul.f32 %v3604, %v3648
    %v3663 = vmul.f32 %v3605, %v3648
    %v3664 = vmul.f32 %v3606, %v3648
    %v3665 = vadd.f32 %v3501, %v3649
    %v3666 = vadd.f32 %v3502, %v3650
    %v3667 = vadd.f32 %v3503, %v3651
    %v3668 = vadd.f32 %v3504, %v3652
    %v3669 = vadd.f32 %v3505, %v3653
    %v3670 = vadd.f32 %v3506, %v3654
    %v3671 = vadd.f32 %v3507, %v3655
    %v3672 = vadd.f32 %v3508, %v3656
    %v3673 = vadd.f32 %v3509, %v3657
    %v3674 = vadd.f32 %v3510, %v3658
    %v3675 = vadd.f32 %v3511, %v3659
    %v3676 = vadd.f32 %v3512, %v3660
    %v3677 = vadd.f32 %v3513, %v3661
    %v3678 = vadd.f32 %v3514, %v3662
    %v3679 = vadd.f32 %v3515, %v3663
    %v3680 = vadd.f32 %v3516, %v3664
    %v3681 = vld [vmem:[%s2562 + $0x7] sm:$0x1]
    %v3682 = vlaneseq
    %v3683 = vshrl.u32 %v3682, 7
    %v3684 = vsub.s32 0, %v3683
    %v3685 = vrot.slane %v3681, %v3684
    %v3686 = vmul.f32 %v3591, %v3685
    %v3687 = vmul.f32 %v3592, %v3685
    %v3688 = vmul.f32 %v3593, %v3685
    %v3689 = vmul.f32 %v3594, %v3685
    %v3690 = vmul.f32 %v3595, %v3685
    %v3691 = vmul.f32 %v3596, %v3685
    %v3692 = vmul.f32 %v3597, %v3685
    %v3693 = vmul.f32 %v3598, %v3685
    %v3694 = vmul.f32 %v3599, %v3685
    %v3695 = vmul.f32 %v3600, %v3685
    %v3696 = vmul.f32 %v3601, %v3685
    %v3697 = vmul.f32 %v3602, %v3685
    %v3698 = vmul.f32 %v3603, %v3685
    %v3699 = vmul.f32 %v3604, %v3685
    %v3700 = vmul.f32 %v3605, %v3685
    %v3701 = vmul.f32 %v3606, %v3685
    %v3702 = vadd.f32 %v3538, %v3686
    %v3703 = vadd.f32 %v3539, %v3687
    %v3704 = vadd.f32 %v3540, %v3688
    %v3705 = vadd.f32 %v3541, %v3689
    %v3706 = vadd.f32 %v3542, %v3690
    %v3707 = vadd.f32 %v3543, %v3691
    %v3708 = vadd.f32 %v3544, %v3692
    %v3709 = vadd.f32 %v3545, %v3693
    %v3710 = vadd.f32 %v3546, %v3694
    %v3711 = vadd.f32 %v3547, %v3695
    %v3712 = vadd.f32 %v3548, %v3696
    %v3713 = vadd.f32 %v3549, %v3697
    %v3714 = vadd.f32 %v3550, %v3698
    %v3715 = vadd.f32 %v3551, %v3699
    %v3716 = vadd.f32 %v3552, %v3700
    %v3717 = vadd.f32 %v3553, %v3701
    %v3718 = vld [vmem:[%s2584 + $0x7] sm:$0x1]
    %v3719 = vlaneseq
    %v3720 = vshrl.u32 %v3719, 7
    %v3721 = vsub.s32 0, %v3720
    %v3722 = vrot.slane %v3718, %v3721
    %v3723 = vmul.f32 %v3591, %v3722
    %v3724 = vmul.f32 %v3592, %v3722
    %v3725 = vmul.f32 %v3593, %v3722
    %v3726 = vmul.f32 %v3594, %v3722
    %v3727 = vmul.f32 %v3595, %v3722
    %v3728 = vmul.f32 %v3596, %v3722
    %v3729 = vmul.f32 %v3597, %v3722
    %v3730 = vmul.f32 %v3598, %v3722
    %v3731 = vmul.f32 %v3599, %v3722
    %v3732 = vmul.f32 %v3600, %v3722
    %v3733 = vmul.f32 %v3601, %v3722
    %v3734 = vmul.f32 %v3602, %v3722
    %v3735 = vmul.f32 %v3603, %v3722
    %v3736 = vmul.f32 %v3604, %v3722
    %v3737 = vmul.f32 %v3605, %v3722
    %v3738 = vmul.f32 %v3606, %v3722
    %v3739 = vadd.f32 %v3575, %v3723
    %v3740 = vadd.f32 %v3576, %v3724
    %v3741 = vadd.f32 %v3577, %v3725
    %v3742 = vadd.f32 %v3578, %v3726
    %v3743 = vadd.f32 %v3579, %v3727
    %v3744 = vadd.f32 %v3580, %v3728
    %v3745 = vadd.f32 %v3581, %v3729
    %v3746 = vadd.f32 %v3582, %v3730
    %v3747 = vadd.f32 %v3583, %v3731
    %v3748 = vadd.f32 %v3584, %v3732
    %v3749 = vadd.f32 %v3585, %v3733
    %v3750 = vadd.f32 %v3586, %v3734
    %v3751 = vadd.f32 %v3587, %v3735
    %v3752 = vadd.f32 %v3588, %v3736
    %v3753 = vadd.f32 %v3589, %v3737
    %v3754 = vadd.f32 %v3590, %v3738
    %v3755 = vld [vmem:[%s3426 + $0x9] sm:$0xff]
    %v3756 = vld [vmem:[%s3426 + $0x21] sm:$0xff]
    %v3757 = vld [vmem:[%s3426 + $0x39] sm:$0xff]
    %v3758 = vld [vmem:[%s3426 + $0x51] sm:$0xff]
    %v3759 = vld [vmem:[%s3426 + $0x69] sm:$0xff]
    %v3760 = vld [vmem:[%s3426 + $0x81] sm:$0xff]
    %v3761 = vld [vmem:[%s3426 + $0x99] sm:$0xff]
    %v3762 = vld [vmem:[%s3426 + $0xb1] sm:$0xff]
    %v3763 = vld [vmem:[%s3426 + $0xf9] sm:$0xff]
    %v3764 = vld [vmem:[%s3426 + $0x111] sm:$0xff]
    %v3765 = vld [vmem:[%s3426 + $0x129] sm:$0xff]
    %v3766 = vld [vmem:[%s3426 + $0x141] sm:$0xff]
    %v3767 = vld [vmem:[%s3426 + $0x159] sm:$0xff]
    %v3768 = vld [vmem:[%s3426 + $0x171] sm:$0xff]
    %v3769 = vld [vmem:[%s3426 + $0x189] sm:$0xff]
    %v3770 = vld [vmem:[%s3426 + $0x1a1] sm:$0xff]
    %v3771 = vld [vmem:[%s5 + $0x8] sm:$0x1]
    %v3772 = vlaneseq
    %v3773 = vshrl.u32 %v3772, 7
    %v3774 = vsub.s32 0, %v3773
    %v3775 = vrot.slane %v3771, %v3774
    %v3776 = vmul.f32 %v3755, %v3775
    %v3777 = vmul.f32 %v3756, %v3775
    %v3778 = vmul.f32 %v3757, %v3775
    %v3779 = vmul.f32 %v3758, %v3775
    %v3780 = vmul.f32 %v3759, %v3775
    %v3781 = vmul.f32 %v3760, %v3775
    %v3782 = vmul.f32 %v3761, %v3775
    %v3783 = vmul.f32 %v3762, %v3775
    %v3784 = vmul.f32 %v3763, %v3775
    %v3785 = vmul.f32 %v3764, %v3775
    %v3786 = vmul.f32 %v3765, %v3775
    %v3787 = vmul.f32 %v3766, %v3775
    %v3788 = vmul.f32 %v3767, %v3775
    %v3789 = vmul.f32 %v3768, %v3775
    %v3790 = vmul.f32 %v3769, %v3775
    %v3791 = vmul.f32 %v3770, %v3775
    %v3792 = vadd.f32 %v3628, %v3776
    %v3793 = vadd.f32 %v3629, %v3777
    %v3794 = vadd.f32 %v3630, %v3778
    %v3795 = vadd.f32 %v3631, %v3779
    %v3796 = vadd.f32 %v3632, %v3780
    %v3797 = vadd.f32 %v3633, %v3781
    %v3798 = vadd.f32 %v3634, %v3782
    %v3799 = vadd.f32 %v3635, %v3783
    %v3800 = vadd.f32 %v3636, %v3784
    %v3801 = vadd.f32 %v3637, %v3785
    %v3802 = vadd.f32 %v3638, %v3786
    %v3803 = vadd.f32 %v3639, %v3787
    %v3804 = vadd.f32 %v3640, %v3788
    %v3805 = vadd.f32 %v3641, %v3789
    %v3806 = vadd.f32 %v3642, %v3790
    %v3807 = vadd.f32 %v3643, %v3791
    %v3808 = vld [vmem:[%s2540 + $0x8] sm:$0x1]
    %v3809 = vlaneseq
    %v3810 = vshrl.u32 %v3809, 7
    %v3811 = vsub.s32 0, %v3810
    %v3812 = vrot.slane %v3808, %v3811
    %v3813 = vmul.f32 %v3755, %v3812
    %v3814 = vmul.f32 %v3756, %v3812
    %v3815 = vmul.f32 %v3757, %v3812
    %v3816 = vmul.f32 %v3758, %v3812
    %v3817 = vmul.f32 %v3759, %v3812
    %v3818 = vmul.f32 %v3760, %v3812
    %v3819 = vmul.f32 %v3761, %v3812
    %v3820 = vmul.f32 %v3762, %v3812
    %v3821 = vmul.f32 %v3763, %v3812
    %v3822 = vmul.f32 %v3764, %v3812
    %v3823 = vmul.f32 %v3765, %v3812
    %v3824 = vmul.f32 %v3766, %v3812
    %v3825 = vmul.f32 %v3767, %v3812
    %v3826 = vmul.f32 %v3768, %v3812
    %v3827 = vmul.f32 %v3769, %v3812
    %v3828 = vmul.f32 %v3770, %v3812
    %v3829 = vadd.f32 %v3665, %v3813
    %v3830 = vadd.f32 %v3666, %v3814
    %v3831 = vadd.f32 %v3667, %v3815
    %v3832 = vadd.f32 %v3668, %v3816
    %v3833 = vadd.f32 %v3669, %v3817
    %v3834 = vadd.f32 %v3670, %v3818
    %v3835 = vadd.f32 %v3671, %v3819
    %v3836 = vadd.f32 %v3672, %v3820
    %v3837 = vadd.f32 %v3673, %v3821
    %v3838 = vadd.f32 %v3674, %v3822
    %v3839 = vadd.f32 %v3675, %v3823
    %v3840 = vadd.f32 %v3676, %v3824
    %v3841 = vadd.f32 %v3677, %v3825
    %v3842 = vadd.f32 %v3678, %v3826
    %v3843 = vadd.f32 %v3679, %v3827
    %v3844 = vadd.f32 %v3680, %v3828
    %v3845 = vld [vmem:[%s2562 + $0x8] sm:$0x1]
    %v3846 = vlaneseq
    %v3847 = vshrl.u32 %v3846, 7
    %v3848 = vsub.s32 0, %v3847
    %v3849 = vrot.slane %v3845, %v3848
    %v3850 = vmul.f32 %v3755, %v3849
    %v3851 = vmul.f32 %v3756, %v3849
    %v3852 = vmul.f32 %v3757, %v3849
    %v3853 = vmul.f32 %v3758, %v3849
    %v3854 = vmul.f32 %v3759, %v3849
    %v3855 = vmul.f32 %v3760, %v3849
    %v3856 = vmul.f32 %v3761, %v3849
    %v3857 = vmul.f32 %v3762, %v3849
    %v3858 = vmul.f32 %v3763, %v3849
    %v3859 = vmul.f32 %v3764, %v3849
    %v3860 = vmul.f32 %v3765, %v3849
    %v3861 = vmul.f32 %v3766, %v3849
    %v3862 = vmul.f32 %v3767, %v3849
    %v3863 = vmul.f32 %v3768, %v3849
    %v3864 = vmul.f32 %v3769, %v3849
    %v3865 = vmul.f32 %v3770, %v3849
    %v3866 = vadd.f32 %v3702, %v3850
    %v3867 = vadd.f32 %v3703, %v3851
    %v3868 = vadd.f32 %v3704, %v3852
    %v3869 = vadd.f32 %v3705, %v3853
    %v3870 = vadd.f32 %v3706, %v3854
    %v3871 = vadd.f32 %v3707, %v3855
    %v3872 = vadd.f32 %v3708, %v3856
    %v3873 = vadd.f32 %v3709, %v3857
    %v3874 = vadd.f32 %v3710, %v3858
    %v3875 = vadd.f32 %v3711, %v3859
    %v3876 = vadd.f32 %v3712, %v3860
    %v3877 = vadd.f32 %v3713, %v3861
    %v3878 = vadd.f32 %v3714, %v3862
    %v3879 = vadd.f32 %v3715, %v3863
    %v3880 = vadd.f32 %v3716, %v3864
    %v3881 = vadd.f32 %v3717, %v3865
    %v3882 = vld [vmem:[%s2584 + $0x8] sm:$0x1]
    %v3883 = vlaneseq
    %v3884 = vshrl.u32 %v3883, 7
    %v3885 = vsub.s32 0, %v3884
    %v3886 = vrot.slane %v3882, %v3885
    %v3887 = vmul.f32 %v3755, %v3886
    %v3888 = vmul.f32 %v3756, %v3886
    %v3889 = vmul.f32 %v3757, %v3886
    %v3890 = vmul.f32 %v3758, %v3886
    %v3891 = vmul.f32 %v3759, %v3886
    %v3892 = vmul.f32 %v3760, %v3886
    %v3893 = vmul.f32 %v3761, %v3886
    %v3894 = vmul.f32 %v3762, %v3886
    %v3895 = vmul.f32 %v3763, %v3886
    %v3896 = vmul.f32 %v3764, %v3886
    %v3897 = vmul.f32 %v3765, %v3886
    %v3898 = vmul.f32 %v3766, %v3886
    %v3899 = vmul.f32 %v3767, %v3886
    %v3900 = vmul.f32 %v3768, %v3886
    %v3901 = vmul.f32 %v3769, %v3886
    %v3902 = vmul.f32 %v3770, %v3886
    %v3903 = vadd.f32 %v3739, %v3887
    %v3904 = vadd.f32 %v3740, %v3888
    %v3905 = vadd.f32 %v3741, %v3889
    %v3906 = vadd.f32 %v3742, %v3890
    %v3907 = vadd.f32 %v3743, %v3891
    %v3908 = vadd.f32 %v3744, %v3892
    %v3909 = vadd.f32 %v3745, %v3893
    %v3910 = vadd.f32 %v3746, %v3894
    %v3911 = vadd.f32 %v3747, %v3895
    %v3912 = vadd.f32 %v3748, %v3896
    %v3913 = vadd.f32 %v3749, %v3897
    %v3914 = vadd.f32 %v3750, %v3898
    %v3915 = vadd.f32 %v3751, %v3899
    %v3916 = vadd.f32 %v3752, %v3900
    %v3917 = vadd.f32 %v3753, %v3901
    %v3918 = vadd.f32 %v3754, %v3902
    %v3919 = vsel %vm84, %v3792, 0.0
    %3920 = vadd.xlane.f32.xlu0 %v3919
    %v3921 = vpop.xlane.xlu0 %3920
    %v3922 = vsel %vm84, %v3793, 0.0
    %3923 = vadd.xlane.f32.xlu0 %v3922
    %v3924 = vpop.xlane.xlu0 %3923
    %v3925 = vsel %vm84, %v3794, 0.0
    %3926 = vadd.xlane.f32.xlu0 %v3925
    %v3927 = vpop.xlane.xlu0 %3926
    %v3928 = vsel %vm84, %v3795, 0.0
    %3929 = vadd.xlane.f32.xlu0 %v3928
    %v3930 = vpop.xlane.xlu0 %3929
    %v3931 = vsel %vm84, %v3796, 0.0
    %3932 = vadd.xlane.f32.xlu0 %v3931
    %v3933 = vpop.xlane.xlu0 %3932
    %v3934 = vsel %vm84, %v3797, 0.0
    %3935 = vadd.xlane.f32.xlu0 %v3934
    %v3936 = vpop.xlane.xlu0 %3935
    %v3937 = vsel %vm84, %v3798, 0.0
    %3938 = vadd.xlane.f32.xlu0 %v3937
    %v3939 = vpop.xlane.xlu0 %3938
    %v3940 = vsel %vm84, %v3799, 0.0
    %3941 = vadd.xlane.f32.xlu0 %v3940
    %v3942 = vpop.xlane.xlu0 %3941
    %v3943 = vsel %vm84, %v3800, 0.0
    %3944 = vadd.xlane.f32.xlu0 %v3943
    %v3945 = vpop.xlane.xlu0 %3944
    %v3946 = vsel %vm84, %v3801, 0.0
    %3947 = vadd.xlane.f32.xlu0 %v3946
    %v3948 = vpop.xlane.xlu0 %3947
    %v3949 = vsel %vm84, %v3802, 0.0
    %3950 = vadd.xlane.f32.xlu0 %v3949
    %v3951 = vpop.xlane.xlu0 %3950
    %v3952 = vsel %vm84, %v3803, 0.0
    %3953 = vadd.xlane.f32.xlu0 %v3952
    %v3954 = vpop.xlane.xlu0 %3953
    %v3955 = vsel %vm84, %v3804, 0.0
    %3956 = vadd.xlane.f32.xlu0 %v3955
    %v3957 = vpop.xlane.xlu0 %3956
    %v3958 = vsel %vm84, %v3805, 0.0
    %3959 = vadd.xlane.f32.xlu0 %v3958
    %v3960 = vpop.xlane.xlu0 %3959
    %v3961 = vsel %vm84, %v3806, 0.0
    %3962 = vadd.xlane.f32.xlu0 %v3961
    %v3963 = vpop.xlane.xlu0 %3962
    %v3964 = vsel %vm84, %v3807, 0.0
    %3965 = vadd.xlane.f32.xlu0 %v3964
    %v3966 = vpop.xlane.xlu0 %3965
    %v3967 = vstv %s2502
    %v3968 = vadd.f32 %v3921, %v3967
    %v3969 = vadd.f32 %v3924, %v3967
    %v3970 = vadd.f32 %v3927, %v3967
    %v3971 = vadd.f32 %v3930, %v3967
    %v3972 = vadd.f32 %v3933, %v3967
    %v3973 = vadd.f32 %v3936, %v3967
    %v3974 = vadd.f32 %v3939, %v3967
    %v3975 = vadd.f32 %v3942, %v3967
    %v3976 = vadd.f32 %v3945, %v3967
    %v3977 = vadd.f32 %v3948, %v3967
    %v3978 = vadd.f32 %v3951, %v3967
    %v3979 = vadd.f32 %v3954, %v3967
    %v3980 = vadd.f32 %v3957, %v3967
    %v3981 = vadd.f32 %v3960, %v3967
    %v3982 = vadd.f32 %v3963, %v3967
    %v3983 = vadd.f32 %v3966, %v3967
    %v3984 = vmax.f32 %v3968, 0.0
    %v3985 = vmax.f32 %v3969, 0.0
    %v3986 = vmax.f32 %v3970, 0.0
    %v3987 = vmax.f32 %v3971, 0.0
    %v3988 = vmax.f32 %v3972, 0.0
    %v3989 = vmax.f32 %v3973, 0.0
    %v3990 = vmax.f32 %v3974, 0.0
    %v3991 = vmax.f32 %v3975, 0.0
    %v3992 = vmax.f32 %v3976, 0.0
    %v3993 = vmax.f32 %v3977, 0.0
    %v3994 = vmax.f32 %v3978, 0.0
    %v3995 = vmax.f32 %v3979, 0.0
    %v3996 = vmax.f32 %v3980, 0.0
    %v3997 = vmax.f32 %v3981, 0.0
    %v3998 = vmax.f32 %v3982, 0.0
    %v3999 = vmax.f32 %v3983, 0.0
    %v4016 = vlaneseq
    %v4017 = vand.u32 %v4016, 127
    %v4018 = vlaneseq
    %v4019 = vshrl.u32 %v4018, 7
    %v4020 = vsub.s32 %v4017, %v4019
    %v4021 = vrot.slane %v3984, %v4020
    %v4022 = vadd.s32 %v4017, 4294967288
    %v4023 = vlaneseq
    %v4024 = vshrl.u32 %v4023, 7
    %v4025 = vsub.s32 %v4022, %v4024
    %v4026 = vrot.slane %v3985, %v4025
    %vm4027 = vcmask 130112
    %v4028 = vsel %vm4027, %v4026, %v4021
    %v4029 = vadd.s32 %v4017, 4294967280
    %v4030 = vlaneseq
    %v4031 = vshrl.u32 %v4030, 7
    %v4032 = vsub.s32 %v4029, %v4031
    %v4033 = vrot.slane %v3986, %v4032
    %vm4034 = vcmask 195712
    %v4035 = vsel %vm4034, %v4033, %v4028
    %v4036 = vadd.s32 %v4017, 4294967272
    %v4037 = vlaneseq
    %v4038 = vshrl.u32 %v4037, 7
    %v4039 = vsub.s32 %v4036, %v4038
    %v4040 = vrot.slane %v3987, %v4039
    %vm4041 = vcmask 261312
    %v4042 = vsel %vm4041, %v4040, %v4035
    %v4043 = vadd.s32 %v4017, 4294967264
    %v4044 = vlaneseq
    %v4045 = vshrl.u32 %v4044, 7
    %v4046 = vsub.s32 %v4043, %v4045
    %v4047 = vrot.slane %v3988, %v4046
    %vm4048 = vcmask 326912
    %v4049 = vsel %vm4048, %v4047, %v4042
    %v4050 = vadd.s32 %v4017, 4294967256
    %v4051 = vlaneseq
    %v4052 = vshrl.u32 %v4051, 7
    %v4053 = vsub.s32 %v4050, %v4052
    %v4054 = vrot.slane %v3989, %v4053
    %vm4055 = vcmask 392512
    %v4056 = vsel %vm4055, %v4054, %v4049
    %v4057 = vadd.s32 %v4017, 4294967248
    %v4058 = vlaneseq
    %v4059 = vshrl.u32 %v4058, 7
    %v4060 = vsub.s32 %v4057, %v4059
    %v4061 = vrot.slane %v3990, %v4060
    %vm4062 = vcmask 458112
    %v4063 = vsel %vm4062, %v4061, %v4056
    %v4064 = vadd.s32 %v4017, 4294967240
    %v4065 = vlaneseq
    %v4066 = vshrl.u32 %v4065, 7
    %v4067 = vsub.s32 %v4064, %v4066
    %v4068 = vrot.slane %v3991, %v4067
    %vm4069 = vcmask 523712
    %v4070 = vsel %vm4069, %v4068, %v4063
    %v4071 = vlaneseq
    %v4072 = vshrl.u32 %v4071, 7
    %v4073 = vsub.s32 %v4017, %v4072
    %v4074 = vrot.slane %v3992, %v4073
    %v4075 = vlaneseq
    %v4076 = vshrl.u32 %v4075, 7
    %v4077 = vsub.s32 %v4022, %v4076
    %v4078 = vrot.slane %v3993, %v4077
    %v4079 = vsel %vm4027, %v4078, %v4074
    %v4080 = vlaneseq
    %v4081 = vshrl.u32 %v4080, 7
    %v4082 = vsub.s32 %v4029, %v4081
    %v4083 = vrot.slane %v3994, %v4082
    %v4084 = vsel %vm4034, %v4083, %v4079
    %v4085 = vlaneseq
    %v4086 = vshrl.u32 %v4085, 7
    %v4087 = vsub.s32 %v4036, %v4086
    %v4088 = vrot.slane %v3995, %v4087
    %v4089 = vsel %vm4041, %v4088, %v4084
    %v4090 = vlaneseq
    %v4091 = vshrl.u32 %v4090, 7
    %v4092 = vsub.s32 %v4043, %v4091
    %v4093 = vrot.slane %v3996, %v4092
    %v4094 = vsel %vm4048, %v4093, %v4089
    %v4095 = vlaneseq
    %v4096 = vshrl.u32 %v4095, 7
    %v4097 = vsub.s32 %v4050, %v4096
    %v4098 = vrot.slane %v3997, %v4097
    %v4099 = vsel %vm4055, %v4098, %v4094
    %v4100 = vlaneseq
    %v4101 = vshrl.u32 %v4100, 7
    %v4102 = vsub.s32 %v4057, %v4101
    %v4103 = vrot.slane %v3998, %v4102
    %v4104 = vsel %vm4062, %v4103, %v4099
    %v4105 = vlaneseq
    %v4106 = vshrl.u32 %v4105, 7
    %v4107 = vsub.s32 %v4064, %v4106
    %v4108 = vrot.slane %v3999, %v4107
    %v4109 = vsel %vm4069, %v4108, %v4104
    %4112 = vst.msk [vmem:[#allocation8] sm:$0x1] %vm43, %v4070
    %4113 = vst.msk [vmem:[#allocation8 + $0x4] sm:$0x1] %vm43, %v4109
    %v4114 = vsel %vm84, %v3829, 0.0
    %4115 = vadd.xlane.f32.xlu0 %v4114
    %v4116 = vpop.xlane.xlu0 %4115
    %v4117 = vsel %vm84, %v3830, 0.0
    %4118 = vadd.xlane.f32.xlu0 %v4117
    %v4119 = vpop.xlane.xlu0 %4118
    %v4120 = vsel %vm84, %v3831, 0.0
    %4121 = vadd.xlane.f32.xlu0 %v4120
    %v4122 = vpop.xlane.xlu0 %4121
    %v4123 = vsel %vm84, %v3832, 0.0
    %4124 = vadd.xlane.f32.xlu0 %v4123
    %v4125 = vpop.xlane.xlu0 %4124
    %v4126 = vsel %vm84, %v3833, 0.0
    %4127 = vadd.xlane.f32.xlu0 %v4126
    %v4128 = vpop.xlane.xlu0 %4127
    %v4129 = vsel %vm84, %v3834, 0.0
    %4130 = vadd.xlane.f32.xlu0 %v4129
    %v4131 = vpop.xlane.xlu0 %4130
    %v4132 = vsel %vm84, %v3835, 0.0
    %4133 = vadd.xlane.f32.xlu0 %v4132
    %v4134 = vpop.xlane.xlu0 %4133
    %v4135 = vsel %vm84, %v3836, 0.0
    %4136 = vadd.xlane.f32.xlu0 %v4135
    %v4137 = vpop.xlane.xlu0 %4136
    %v4138 = vsel %vm84, %v3837, 0.0
    %4139 = vadd.xlane.f32.xlu0 %v4138
    %v4140 = vpop.xlane.xlu0 %4139
    %v4141 = vsel %vm84, %v3838, 0.0
    %4142 = vadd.xlane.f32.xlu0 %v4141
    %v4143 = vpop.xlane.xlu0 %4142
    %v4144 = vsel %vm84, %v3839, 0.0
    %4145 = vadd.xlane.f32.xlu0 %v4144
    %v4146 = vpop.xlane.xlu0 %4145
    %v4147 = vsel %vm84, %v3840, 0.0
    %4148 = vadd.xlane.f32.xlu0 %v4147
    %v4149 = vpop.xlane.xlu0 %4148
    %v4150 = vsel %vm84, %v3841, 0.0
    %4151 = vadd.xlane.f32.xlu0 %v4150
    %v4152 = vpop.xlane.xlu0 %4151
    %v4153 = vsel %vm84, %v3842, 0.0
    %4154 = vadd.xlane.f32.xlu0 %v4153
    %v4155 = vpop.xlane.xlu0 %4154
    %v4156 = vsel %vm84, %v3843, 0.0
    %4157 = vadd.xlane.f32.xlu0 %v4156
    %v4158 = vpop.xlane.xlu0 %4157
    %v4159 = vsel %vm84, %v3844, 0.0
    %4160 = vadd.xlane.f32.xlu0 %v4159
    %v4161 = vpop.xlane.xlu0 %4160
    %v4162 = vadd.f32 %v4116, %v3967
    %v4163 = vadd.f32 %v4119, %v3967
    %v4164 = vadd.f32 %v4122, %v3967
    %v4165 = vadd.f32 %v4125, %v3967
    %v4166 = vadd.f32 %v4128, %v3967
    %v4167 = vadd.f32 %v4131, %v3967
    %v4168 = vadd.f32 %v4134, %v3967
    %v4169 = vadd.f32 %v4137, %v3967
    %v4170 = vadd.f32 %v4140, %v3967
    %v4171 = vadd.f32 %v4143, %v3967
    %v4172 = vadd.f32 %v4146, %v3967
    %v4173 = vadd.f32 %v4149, %v3967
    %v4174 = vadd.f32 %v4152, %v3967
    %v4175 = vadd.f32 %v4155, %v3967
    %v4176 = vadd.f32 %v4158, %v3967
    %v4177 = vadd.f32 %v4161, %v3967
    %v4178 = vmax.f32 %v4162, 0.0
    %v4179 = vmax.f32 %v4163, 0.0
    %v4180 = vmax.f32 %v4164, 0.0
    %v4181 = vmax.f32 %v4165, 0.0
    %v4182 = vmax.f32 %v4166, 0.0
    %v4183 = vmax.f32 %v4167, 0.0
    %v4184 = vmax.f32 %v4168, 0.0
    %v4185 = vmax.f32 %v4169, 0.0
    %v4186 = vmax.f32 %v4170, 0.0
    %v4187 = vmax.f32 %v4171, 0.0
    %v4188 = vmax.f32 %v4172, 0.0
    %v4189 = vmax.f32 %v4173, 0.0
    %v4190 = vmax.f32 %v4174, 0.0
    %v4191 = vmax.f32 %v4175, 0.0
    %v4192 = vmax.f32 %v4176, 0.0
    %v4193 = vmax.f32 %v4177, 0.0
    %v4210 = vlaneseq
    %v4211 = vshrl.u32 %v4210, 7
    %v4212 = vsub.s32 %v4017, %v4211
    %v4213 = vrot.slane %v4178, %v4212
    %v4214 = vlaneseq
    %v4215 = vshrl.u32 %v4214, 7
    %v4216 = vsub.s32 %v4022, %v4215
    %v4217 = vrot.slane %v4179, %v4216
    %v4218 = vsel %vm4027, %v4217, %v4213
    %v4219 = vlaneseq
    %v4220 = vshrl.u32 %v4219, 7
    %v4221 = vsub.s32 %v4029, %v4220
    %v4222 = vrot.slane %v4180, %v4221
    %v4223 = vsel %vm4034, %v4222, %v4218
    %v4224 = vlaneseq
    %v4225 = vshrl.u32 %v4224, 7
    %v4226 = vsub.s32 %v4036, %v4225
    %v4227 = vrot.slane %v4181, %v4226
    %v4228 = vsel %vm4041, %v4227, %v4223
    %v4229 = vlaneseq
    %v4230 = vshrl.u32 %v4229, 7
    %v4231 = vsub.s32 %v4043, %v4230
    %v4232 = vrot.slane %v4182, %v4231
    %v4233 = vsel %vm4048, %v4232, %v4228
    %v4234 = vlaneseq
    %v4235 = vshrl.u32 %v4234, 7
    %v4236 = vsub.s32 %v4050, %v4235
    %v4237 = vrot.slane %v4183, %v4236
    %v4238 = vsel %vm4055, %v4237, %v4233
    %v4239 = vlaneseq
    %v4240 = vshrl.u32 %v4239, 7
    %v4241 = vsub.s32 %v4057, %v4240
    %v4242 = vrot.slane %v4184, %v4241
    %v4243 = vsel %vm4062, %v4242, %v4238
    %v4244 = vlaneseq
    %v4245 = vshrl.u32 %v4244, 7
    %v4246 = vsub.s32 %v4064, %v4245
    %v4247 = vrot.slane %v4185, %v4246
    %v4248 = vsel %vm4069, %v4247, %v4243
    %v4249 = vlaneseq
    %v4250 = vshrl.u32 %v4249, 7
    %v4251 = vsub.s32 %v4017, %v4250
    %v4252 = vrot.slane %v4186, %v4251
    %v4253 = vlaneseq
    %v4254 = vshrl.u32 %v4253, 7
    %v4255 = vsub.s32 %v4022, %v4254
    %v4256 = vrot.slane %v4187, %v4255
    %v4257 = vsel %vm4027, %v4256, %v4252
    %v4258 = vlaneseq
    %v4259 = vshrl.u32 %v4258, 7
    %v4260 = vsub.s32 %v4029, %v4259
    %v4261 = vrot.slane %v4188, %v4260
    %v4262 = vsel %vm4034, %v4261, %v4257
    %v4263 = vlaneseq
    %v4264 = vshrl.u32 %v4263, 7
    %v4265 = vsub.s32 %v4036, %v4264
    %v4266 = vrot.slane %v4189, %v4265
    %v4267 = vsel %vm4041, %v4266, %v4262
    %v4268 = vlaneseq
    %v4269 = vshrl.u32 %v4268, 7
    %v4270 = vsub.s32 %v4043, %v4269
    %v4271 = vrot.slane %v4190, %v4270
    %v4272 = vsel %vm4048, %v4271, %v4267
    %v4273 = vlaneseq
    %v4274 = vshrl.u32 %v4273, 7
    %v4275 = vsub.s32 %v4050, %v4274
    %v4276 = vrot.slane %v4191, %v4275
    %v4277 = vsel %vm4055, %v4276, %v4272
    %v4278 = vlaneseq
    %v4279 = vshrl.u32 %v4278, 7
    %v4280 = vsub.s32 %v4057, %v4279
    %v4281 = vrot.slane %v4192, %v4280
    %v4282 = vsel %vm4062, %v4281, %v4277
    %v4283 = vlaneseq
    %v4284 = vshrl.u32 %v4283, 7
    %v4285 = vsub.s32 %v4064, %v4284
    %v4286 = vrot.slane %v4193, %v4285
    %v4287 = vsel %vm4069, %v4286, %v4282
    %4290 = vst.msk [vmem:[#allocation8 + $0x1] sm:$0x1] %vm43, %v4248
    %4291 = vst.msk [vmem:[#allocation8 + $0x5] sm:$0x1] %vm43, %v4287
    %v4292 = vsel %vm84, %v3866, 0.0
    %4293 = vadd.xlane.f32.xlu0 %v4292
    %v4294 = vpop.xlane.xlu0 %4293
    %v4295 = vsel %vm84, %v3867, 0.0
    %4296 = vadd.xlane.f32.xlu0 %v4295
    %v4297 = vpop.xlane.xlu0 %4296
    %v4298 = vsel %vm84, %v3868, 0.0
    %4299 = vadd.xlane.f32.xlu0 %v4298
    %v4300 = vpop.xlane.xlu0 %4299
    %v4301 = vsel %vm84, %v3869, 0.0
    %4302 = vadd.xlane.f32.xlu0 %v4301
    %v4303 = vpop.xlane.xlu0 %4302
    %v4304 = vsel %vm84, %v3870, 0.0
    %4305 = vadd.xlane.f32.xlu0 %v4304
    %v4306 = vpop.xlane.xlu0 %4305
    %v4307 = vsel %vm84, %v3871, 0.0
    %4308 = vadd.xlane.f32.xlu0 %v4307
    %v4309 = vpop.xlane.xlu0 %4308
    %v4310 = vsel %vm84, %v3872, 0.0
    %4311 = vadd.xlane.f32.xlu0 %v4310
    %v4312 = vpop.xlane.xlu0 %4311
    %v4313 = vsel %vm84, %v3873, 0.0
    %4314 = vadd.xlane.f32.xlu0 %v4313
    %v4315 = vpop.xlane.xlu0 %4314
    %v4316 = vsel %vm84, %v3874, 0.0
    %4317 = vadd.xlane.f32.xlu0 %v4316
    %v4318 = vpop.xlane.xlu0 %4317
    %v4319 = vsel %vm84, %v3875, 0.0
    %4320 = vadd.xlane.f32.xlu0 %v4319
    %v4321 = vpop.xlane.xlu0 %4320
    %v4322 = vsel %vm84, %v3876, 0.0
    %4323 = vadd.xlane.f32.xlu0 %v4322
    %v4324 = vpop.xlane.xlu0 %4323
    %v4325 = vsel %vm84, %v3877, 0.0
    %4326 = vadd.xlane.f32.xlu0 %v4325
    %v4327 = vpop.xlane.xlu0 %4326
    %v4328 = vsel %vm84, %v3878, 0.0
    %4329 = vadd.xlane.f32.xlu0 %v4328
    %v4330 = vpop.xlane.xlu0 %4329
    %v4331 = vsel %vm84, %v3879, 0.0
    %4332 = vadd.xlane.f32.xlu0 %v4331
    %v4333 = vpop.xlane.xlu0 %4332
    %v4334 = vsel %vm84, %v3880, 0.0
    %4335 = vadd.xlane.f32.xlu0 %v4334
    %v4336 = vpop.xlane.xlu0 %4335
    %v4337 = vsel %vm84, %v3881, 0.0
    %4338 = vadd.xlane.f32.xlu0 %v4337
    %v4339 = vpop.xlane.xlu0 %4338
    %v4340 = vadd.f32 %v4294, %v3967
    %v4341 = vadd.f32 %v4297, %v3967
    %v4342 = vadd.f32 %v4300, %v3967
    %v4343 = vadd.f32 %v4303, %v3967
    %v4344 = vadd.f32 %v4306, %v3967
    %v4345 = vadd.f32 %v4309, %v3967
    %v4346 = vadd.f32 %v4312, %v3967
    %v4347 = vadd.f32 %v4315, %v3967
    %v4348 = vadd.f32 %v4318, %v3967
    %v4349 = vadd.f32 %v4321, %v3967
    %v4350 = vadd.f32 %v4324, %v3967
    %v4351 = vadd.f32 %v4327, %v3967
    %v4352 = vadd.f32 %v4330, %v3967
    %v4353 = vadd.f32 %v4333, %v3967
    %v4354 = vadd.f32 %v4336, %v3967
    %v4355 = vadd.f32 %v4339, %v3967
    %v4356 = vmax.f32 %v4340, 0.0
    %v4357 = vmax.f32 %v4341, 0.0
    %v4358 = vmax.f32 %v4342, 0.0
    %v4359 = vmax.f32 %v4343, 0.0
    %v4360 = vmax.f32 %v4344, 0.0
    %v4361 = vmax.f32 %v4345, 0.0
    %v4362 = vmax.f32 %v4346, 0.0
    %v4363 = vmax.f32 %v4347, 0.0
    %v4364 = vmax.f32 %v4348, 0.0
    %v4365 = vmax.f32 %v4349, 0.0
    %v4366 = vmax.f32 %v4350, 0.0
    %v4367 = vmax.f32 %v4351, 0.0
    %v4368 = vmax.f32 %v4352, 0.0
    %v4369 = vmax.f32 %v4353, 0.0
    %v4370 = vmax.f32 %v4354, 0.0
    %v4371 = vmax.f32 %v4355, 0.0
    %v4388 = vlaneseq
    %v4389 = vshrl.u32 %v4388, 7
    %v4390 = vsub.s32 %v4017, %v4389
    %v4391 = vrot.slane %v4356, %v4390
    %v4392 = vlaneseq
    %v4393 = vshrl.u32 %v4392, 7
    %v4394 = vsub.s32 %v4022, %v4393
    %v4395 = vrot.slane %v4357, %v4394
    %v4396 = vsel %vm4027, %v4395, %v4391
    %v4397 = vlaneseq
    %v4398 = vshrl.u32 %v4397, 7
    %v4399 = vsub.s32 %v4029, %v4398
    %v4400 = vrot.slane %v4358, %v4399
    %v4401 = vsel %vm4034, %v4400, %v4396
    %v4402 = vlaneseq
    %v4403 = vshrl.u32 %v4402, 7
    %v4404 = vsub.s32 %v4036, %v4403
    %v4405 = vrot.slane %v4359, %v4404
    %v4406 = vsel %vm4041, %v4405, %v4401
    %v4407 = vlaneseq
    %v4408 = vshrl.u32 %v4407, 7
    %v4409 = vsub.s32 %v4043, %v4408
    %v4410 = vrot.slane %v4360, %v4409
    %v4411 = vsel %vm4048, %v4410, %v4406
    %v4412 = vlaneseq
    %v4413 = vshrl.u32 %v4412, 7
    %v4414 = vsub.s32 %v4050, %v4413
    %v4415 = vrot.slane %v4361, %v4414
    %v4416 = vsel %vm4055, %v4415, %v4411
    %v4417 = vlaneseq
    %v4418 = vshrl.u32 %v4417, 7
    %v4419 = vsub.s32 %v4057, %v4418
    %v4420 = vrot.slane %v4362, %v4419
    %v4421 = vsel %vm4062, %v4420, %v4416
    %v4422 = vlaneseq
    %v4423 = vshrl.u32 %v4422, 7
    %v4424 = vsub.s32 %v4064, %v4423
    %v4425 = vrot.slane %v4363, %v4424
    %v4426 = vsel %vm4069, %v4425, %v4421
    %v4427 = vlaneseq
    %v4428 = vshrl.u32 %v4427, 7
    %v4429 = vsub.s32 %v4017, %v4428
    %v4430 = vrot.slane %v4364, %v4429
    %v4431 = vlaneseq
    %v4432 = vshrl.u32 %v4431, 7
    %v4433 = vsub.s32 %v4022, %v4432
    %v4434 = vrot.slane %v4365, %v4433
    %v4435 = vsel %vm4027, %v4434, %v4430
    %v4436 = vlaneseq
    %v4437 = vshrl.u32 %v4436, 7
    %v4438 = vsub.s32 %v4029, %v4437
    %v4439 = vrot.slane %v4366, %v4438
    %v4440 = vsel %vm4034, %v4439, %v4435
    %v4441 = vlaneseq
    %v4442 = vshrl.u32 %v4441, 7
    %v4443 = vsub.s32 %v4036, %v4442
    %v4444 = vrot.slane %v4367, %v4443
    %v4445 = vsel %vm4041, %v4444, %v4440
    %v4446 = vlaneseq
    %v4447 = vshrl.u32 %v4446, 7
    %v4448 = vsub.s32 %v4043, %v4447
    %v4449 = vrot.slane %v4368, %v4448
    %v4450 = vsel %vm4048, %v4449, %v4445
    %v4451 = vlaneseq
    %v4452 = vshrl.u32 %v4451, 7
    %v4453 = vsub.s32 %v4050, %v4452
    %v4454 = vrot.slane %v4369, %v4453
    %v4455 = vsel %vm4055, %v4454, %v4450
    %v4456 = vlaneseq
    %v4457 = vshrl.u32 %v4456, 7
    %v4458 = vsub.s32 %v4057, %v4457
    %v4459 = vrot.slane %v4370, %v4458
    %v4460 = vsel %vm4062, %v4459, %v4455
    %v4461 = vlaneseq
    %v4462 = vshrl.u32 %v4461, 7
    %v4463 = vsub.s32 %v4064, %v4462
    %v4464 = vrot.slane %v4371, %v4463
    %v4465 = vsel %vm4069, %v4464, %v4460
    %4468 = vst.msk [vmem:[#allocation8 + $0x2] sm:$0x1] %vm43, %v4426
    %4469 = vst.msk [vmem:[#allocation8 + $0x6] sm:$0x1] %vm43, %v4465
    %v4470 = vsel %vm84, %v3903, 0.0
    %4471 = vadd.xlane.f32.xlu0 %v4470
    %v4472 = vpop.xlane.xlu0 %4471
    %v4473 = vsel %vm84, %v3904, 0.0
    %4474 = vadd.xlane.f32.xlu0 %v4473
    %v4475 = vpop.xlane.xlu0 %4474
    %v4476 = vsel %vm84, %v3905, 0.0
    %4477 = vadd.xlane.f32.xlu0 %v4476
    %v4478 = vpop.xlane.xlu0 %4477
    %v4479 = vsel %vm84, %v3906, 0.0
    %4480 = vadd.xlane.f32.xlu0 %v4479
    %v4481 = vpop.xlane.xlu0 %4480
    %v4482 = vsel %vm84, %v3907, 0.0
    %4483 = vadd.xlane.f32.xlu0 %v4482
    %v4484 = vpop.xlane.xlu0 %4483
    %v4485 = vsel %vm84, %v3908, 0.0
    %4486 = vadd.xlane.f32.xlu0 %v4485
    %v4487 = vpop.xlane.xlu0 %4486
    %v4488 = vsel %vm84, %v3909, 0.0
    %4489 = vadd.xlane.f32.xlu0 %v4488
    %v4490 = vpop.xlane.xlu0 %4489
    %v4491 = vsel %vm84, %v3910, 0.0
    %4492 = vadd.xlane.f32.xlu0 %v4491
    %v4493 = vpop.xlane.xlu0 %4492
    %v4494 = vsel %vm84, %v3911, 0.0
    %4495 = vadd.xlane.f32.xlu0 %v4494
    %v4496 = vpop.xlane.xlu0 %4495
    %v4497 = vsel %vm84, %v3912, 0.0
    %4498 = vadd.xlane.f32.xlu0 %v4497
    %v4499 = vpop.xlane.xlu0 %4498
    %v4500 = vsel %vm84, %v3913, 0.0
    %4501 = vadd.xlane.f32.xlu0 %v4500
    %v4502 = vpop.xlane.xlu0 %4501
    %v4503 = vsel %vm84, %v3914, 0.0
    %4504 = vadd.xlane.f32.xlu0 %v4503
    %v4505 = vpop.xlane.xlu0 %4504
    %v4506 = vsel %vm84, %v3915, 0.0
    %4507 = vadd.xlane.f32.xlu0 %v4506
    %v4508 = vpop.xlane.xlu0 %4507
    %v4509 = vsel %vm84, %v3916, 0.0
    %4510 = vadd.xlane.f32.xlu0 %v4509
    %v4511 = vpop.xlane.xlu0 %4510
    %v4512 = vsel %vm84, %v3917, 0.0
    %4513 = vadd.xlane.f32.xlu0 %v4512
    %v4514 = vpop.xlane.xlu0 %4513
    %v4515 = vsel %vm84, %v3918, 0.0
    %4516 = vadd.xlane.f32.xlu0 %v4515
    %v4517 = vpop.xlane.xlu0 %4516
    %v4518 = vadd.f32 %v4472, %v3967
    %v4519 = vadd.f32 %v4475, %v3967
    %v4520 = vadd.f32 %v4478, %v3967
    %v4521 = vadd.f32 %v4481, %v3967
    %v4522 = vadd.f32 %v4484, %v3967
    %v4523 = vadd.f32 %v4487, %v3967
    %v4524 = vadd.f32 %v4490, %v3967
    %v4525 = vadd.f32 %v4493, %v3967
    %v4526 = vadd.f32 %v4496, %v3967
    %v4527 = vadd.f32 %v4499, %v3967
    %v4528 = vadd.f32 %v4502, %v3967
    %v4529 = vadd.f32 %v4505, %v3967
    %v4530 = vadd.f32 %v4508, %v3967
    %v4531 = vadd.f32 %v4511, %v3967
    %v4532 = vadd.f32 %v4514, %v3967
    %v4533 = vadd.f32 %v4517, %v3967
    %v4534 = vmax.f32 %v4518, 0.0
    %v4535 = vmax.f32 %v4519, 0.0
    %v4536 = vmax.f32 %v4520, 0.0
    %v4537 = vmax.f32 %v4521, 0.0
    %v4538 = vmax.f32 %v4522, 0.0
    %v4539 = vmax.f32 %v4523, 0.0
    %v4540 = vmax.f32 %v4524, 0.0
    %v4541 = vmax.f32 %v4525, 0.0
    %v4542 = vmax.f32 %v4526, 0.0
    %v4543 = vmax.f32 %v4527, 0.0
    %v4544 = vmax.f32 %v4528, 0.0
    %v4545 = vmax.f32 %v4529, 0.0
    %v4546 = vmax.f32 %v4530, 0.0
    %v4547 = vmax.f32 %v4531, 0.0
    %v4548 = vmax.f32 %v4532, 0.0
    %v4549 = vmax.f32 %v4533, 0.0
    %v4566 = vlaneseq
    %v4567 = vshrl.u32 %v4566, 7
    %v4568 = vsub.s32 %v4017, %v4567
    %v4569 = vrot.slane %v4534, %v4568
    %v4570 = vlaneseq
    %v4571 = vshrl.u32 %v4570, 7
    %v4572 = vsub.s32 %v4022, %v4571
    %v4573 = vrot.slane %v4535, %v4572
    %v4574 = vsel %vm4027, %v4573, %v4569
    %v4575 = vlaneseq
    %v4576 = vshrl.u32 %v4575, 7
    %v4577 = vsub.s32 %v4029, %v4576
    %v4578 = vrot.slane %v4536, %v4577
    %v4579 = vsel %vm4034, %v4578, %v4574
    %v4580 = vlaneseq
    %v4581 = vshrl.u32 %v4580, 7
    %v4582 = vsub.s32 %v4036, %v4581
    %v4583 = vrot.slane %v4537, %v4582
    %v4584 = vsel %vm4041, %v4583, %v4579
    %v4585 = vlaneseq
    %v4586 = vshrl.u32 %v4585, 7
    %v4587 = vsub.s32 %v4043, %v4586
    %v4588 = vrot.slane %v4538, %v4587
    %v4589 = vsel %vm4048, %v4588, %v4584
    %v4590 = vlaneseq
    %v4591 = vshrl.u32 %v4590, 7
    %v4592 = vsub.s32 %v4050, %v4591
    %v4593 = vrot.slane %v4539, %v4592
    %v4594 = vsel %vm4055, %v4593, %v4589
    %v4595 = vlaneseq
    %v4596 = vshrl.u32 %v4595, 7
    %v4597 = vsub.s32 %v4057, %v4596
    %v4598 = vrot.slane %v4540, %v4597
    %v4599 = vsel %vm4062, %v4598, %v4594
    %v4600 = vlaneseq
    %v4601 = vshrl.u32 %v4600, 7
    %v4602 = vsub.s32 %v4064, %v4601
    %v4603 = vrot.slane %v4541, %v4602
    %v4604 = vsel %vm4069, %v4603, %v4599
    %v4605 = vlaneseq
    %v4606 = vshrl.u32 %v4605, 7
    %v4607 = vsub.s32 %v4017, %v4606
    %v4608 = vrot.slane %v4542, %v4607
    %v4609 = vlaneseq
    %v4610 = vshrl.u32 %v4609, 7
    %v4611 = vsub.s32 %v4022, %v4610
    %v4612 = vrot.slane %v4543, %v4611
    %v4613 = vsel %vm4027, %v4612, %v4608
    %v4614 = vlaneseq
    %v4615 = vshrl.u32 %v4614, 7
    %v4616 = vsub.s32 %v4029, %v4615
    %v4617 = vrot.slane %v4544, %v4616
    %v4618 = vsel %vm4034, %v4617, %v4613
    %v4619 = vlaneseq
    %v4620 = vshrl.u32 %v4619, 7
    %v4621 = vsub.s32 %v4036, %v4620
    %v4622 = vrot.slane %v4545, %v4621
    %v4623 = vsel %vm4041, %v4622, %v4618
    %v4624 = vlaneseq
    %v4625 = vshrl.u32 %v4624, 7
    %v4626 = vsub.s32 %v4043, %v4625
    %v4627 = vrot.slane %v4546, %v4626
    %v4628 = vsel %vm4048, %v4627, %v4623
    %v4629 = vlaneseq
    %v4630 = vshrl.u32 %v4629, 7
    %v4631 = vsub.s32 %v4050, %v4630
    %v4632 = vrot.slane %v4547, %v4631
    %v4633 = vsel %vm4055, %v4632, %v4628
    %v4634 = vlaneseq
    %v4635 = vshrl.u32 %v4634, 7
    %v4636 = vsub.s32 %v4057, %v4635
    %v4637 = vrot.slane %v4548, %v4636
    %v4638 = vsel %vm4062, %v4637, %v4633
    %v4639 = vlaneseq
    %v4640 = vshrl.u32 %v4639, 7
    %v4641 = vsub.s32 %v4064, %v4640
    %v4642 = vrot.slane %v4549, %v4641
    %v4643 = vsel %vm4069, %v4642, %v4638
    %4646 = vst.msk [vmem:[#allocation8 + $0x3] sm:$0x1] %vm43, %v4604
    %4647 = vst.msk [vmem:[#allocation8 + $0x7] sm:$0x1] %vm43, %v4643
    // Predicated region
    $region34: #{tpu_custom_call.1} parent=1 // pred_check
      _
    $region35: #{tpu_custom_call.1} parent=1 // pred_check_branch
      %4649 = sbr.rel (0) target = $region37
    $region36: #{tpu_custom_call.1} parent=1 // pred_region
      %s4651 = ssub.s32 128, 128
      %4652 = vsyncadd [#allocation7], %s4651
      %s4653 = sshll.u32 [#allocation8], 4
      %s4654 = int_to_ptr.vmem [resolvable:$true] %s4653
      %4659 = dma.vmem_to_hbm [thread:$0]  %s4654, 128, %s7, [#allocation7], 64, 64, 4
    $region37: #{tpu_custom_call.1} parent=1 // pred_fallthru
      _
    // Predicated region
    $region38: #{tpu_custom_call.1} parent=1 // pred_check
      _
    $region39: #{tpu_custom_call.1} parent=1 // pred_check_branch
      %4661 = sbr.rel (0) target = $region41
    $region40: #{tpu_custom_call.1} parent=1 // pred_region
      %4662 = dma.done [#allocation7], 128
    $region41: #{tpu_custom_call.1} parent=1 // pred_fallthru
      _
    %4663 = vsyncpa [#allocation6], 1
    %4664 = vsyncpa [#allocation7], 1

</llo_original>
